<compile_context>
chip_gen: v5e
topology: v5e:2x2
jax: 0.10.0
libtpu: 0.0.40
codegen_flags: <defaults>
</compile_context>

<pallas_src>
import functools

import jax
import jax.numpy as jnp
from jax.experimental import pallas as pl
from jax.experimental.pallas import tpu as pltpu  # noqa: F401  (TPU backend)


# ----------------------------------------------------------------------------
# Generic single-step pallas_call helper (whole arrays resident in VMEM)
# ----------------------------------------------------------------------------
def _spec(arr):
    zeros = (0,) * arr.ndim
    return pl.BlockSpec(arr.shape, lambda i, z=zeros: z)


def _call(kernel, inputs, out_shapes):
    multi = isinstance(out_shapes, (tuple, list))
    outs = tuple(out_shapes) if multi else (out_shapes,)
    out_specs = tuple(
        pl.BlockSpec(o.shape, lambda i, z=(0,) * len(o.shape): z) for o in outs)
    return pl.pallas_call(
        kernel,
        grid=(1,),
        in_specs=[_spec(a) for a in inputs],
        out_specs=out_specs if multi else out_specs[0],
        out_shape=outs if multi else outs[0],
    )(*inputs)


def _ln(x, g, b, eps):
    mu = jnp.mean(x, axis=-1, keepdims=True)
    var = jnp.mean(jnp.square(x - mu), axis=-1, keepdims=True)
    return (x - mu) * jax.lax.rsqrt(var + eps) * g + b


# ----------------------------------------------------------------------------
# Linear / conv-GEMM kernel with compile-time-specialized scale/bias/residual
# (BatchNorm folds into scale/bias; residual add + ReLU fused for resnet blocks)
# ----------------------------------------------------------------------------
def _linear_kernel(x_ref, w_ref, *rest, activation, has_scale, has_bias, has_res):
    *extra, o_ref = rest
    y = jnp.dot(x_ref[...], w_ref[...], preferred_element_type=jnp.float32)
    i = 0
    if has_scale:
        y = y * extra[i][...]
        i += 1
    if has_bias:
        y = y + extra[i][...]
        i += 1
    if has_res:
        y = y + extra[i][...]
        i += 1
    if activation == "relu":
        y = jnp.maximum(y, 0.0)
    elif activation == "tanh":
        y = jnp.tanh(y)
    elif activation == "gelu":
        y = jax.nn.gelu(y, approximate=True)
    o_ref[...] = y


def linear_pallas(x, w, *, scale=None, bias=None, res=None, activation=None):
    M, K = x.shape
    N = w.shape[1]
    inputs = [x, w]
    if scale is not None:
        inputs.append(scale.reshape(1, N))
    if bias is not None:
        inputs.append(bias.reshape(1, N))
    if res is not None:
        inputs.append(res)
    kernel = functools.partial(
        _linear_kernel, activation=activation,
        has_scale=scale is not None, has_bias=bias is not None,
        has_res=res is not None)
    return _call(kernel, inputs, jax.ShapeDtypeStruct((M, N), jnp.float32))


# ----------------------------------------------------------------------------
# Standalone LayerNorm (BERT embeddings) — no dummy residual input
# ----------------------------------------------------------------------------
def _ln_kernel(x_ref, g_ref, b_ref, o_ref, *, eps):
    o_ref[...] = _ln(x_ref[...], g_ref[...], b_ref[...], eps)


def layernorm_pallas(x, gamma, beta, eps=1e-12):
    M, H = x.shape
    return _call(functools.partial(_ln_kernel, eps=eps),
                 [x, gamma.reshape(1, H), beta.reshape(1, H)],
                 jax.ShapeDtypeStruct((M, H), jnp.float32))


# ----------------------------------------------------------------------------
# Fused BERT transformer layer: QKV -> MHA (all batches & heads in one step)
# -> out proj -> add+LN -> FFN(gelu) -> add+LN, all in a single pallas_call.
# Heads are selected with a lane mask (no lane slicing / reshapes needed);
# batches are kept independent with a block-diagonal additive attention bias.
# ----------------------------------------------------------------------------
def _bert_layer_kernel(x_ref, ab_ref,
                       wq_ref, bq_ref, wk_ref, bk_ref, wv_ref, bv_ref,
                       wo_ref, bo_ref, g1_ref, be1_ref,
                       w1_ref, b1_ref, w2_ref, b2_ref, g2_ref, be2_ref,
                       o_ref, *, n_heads, head_dim, eps):
    x = x_ref[...]                                   # (B*S, H)
    H = n_heads * head_dim
    q = jnp.dot(x, wq_ref[...], preferred_element_type=jnp.float32) + bq_ref[...]
    k = jnp.dot(x, wk_ref[...], preferred_element_type=jnp.float32) + bk_ref[...]
    v = jnp.dot(x, wv_ref[...], preferred_element_type=jnp.float32) + bv_ref[...]

    bias = ab_ref[...]                               # (B*S, B*S) 0 / -1e9
    scale = 1.0 / (head_dim ** 0.5)
    lane = jax.lax.broadcasted_iota(jnp.int32, (1, H), 1)
    ctx = jnp.zeros_like(x)
    for h in range(n_heads):                         # unrolled; all VPU/MXU work
        hm = ((lane >= h * head_dim) & (lane < (h + 1) * head_dim)).astype(jnp.float32)
        s = jax.lax.dot_general(q * hm, k, (((1,), (1,)), ((), ())),
                                preferred_element_type=jnp.float32) * scale + bias
        s = s - jnp.max(s, axis=-1, keepdims=True)
        p = jnp.exp(s)
        p = p * pl.reciprocal(jnp.sum(p, axis=-1, keepdims=True), approx=True)
        ctx = ctx + jnp.dot(p, v * hm, preferred_element_type=jnp.float32)

    attn = jnp.dot(ctx, wo_ref[...], preferred_element_type=jnp.float32) + bo_ref[...]
    x = _ln(attn + x, g1_ref[...], be1_ref[...], eps)

    hdn = jnp.dot(x, w1_ref[...], preferred_element_type=jnp.float32) + b1_ref[...]
    # TODO(synk): HF BERT uses exact erf-GELU; tanh approximation used here.
    hdn = jax.nn.gelu(hdn, approximate=True)
    out = jnp.dot(hdn, w2_ref[...], preferred_element_type=jnp.float32) + b2_ref[...]
    o_ref[...] = _ln(out + x, g2_ref[...], be2_ref[...], eps)


# ----------------------------------------------------------------------------
# Fused "heads" kernel: global-avg-pool (matmul with constant pooling matrix),
# resnet fc, BERT pooler (dense+tanh on CLS), image/text projections +
# L2-normalize, and the matching classifier (final Linear(D,1) as VPU reduce).
# ----------------------------------------------------------------------------
def _heads_kernel(feat_ref, pm_ref, cls_ref, fcw_ref, fcb_ref, pw_ref, pb_ref,
                  iw_ref, ib_ref, tw_ref, tb_ref, w1v_ref, w1t_ref, b1_ref,
                  w2_ref, b2_ref, match_ref, img_ref, txt_ref):
    # global average pool over spatial positions (block-diag averaging matrix)
    vis_pool = jnp.dot(pm_ref[...], feat_ref[...], preferred_element_type=jnp.float32)
    # resnet18.fc replacement: Linear(C2 -> H)
    vision_out = jnp.dot(vis_pool, fcw_ref[...],
                         preferred_element_type=jnp.float32) + fcb_ref[...]
    # BERT pooler: dense + tanh on [CLS]
    text_pooler = jnp.tanh(jnp.dot(cls_ref[...], pw_ref[...],
                                   preferred_element_type=jnp.float32) + pb_ref[...])

    # contrastive projection heads + F.normalize(dim=-1, eps=1e-12)
    img = jnp.dot(vision_out, iw_ref[...], preferred_element_type=jnp.float32) + ib_ref[...]
    txt = jnp.dot(text_pooler, tw_ref[...], preferred_element_type=jnp.float32) + tb_ref[...]
    img_ref[...] = img / jnp.maximum(jnp.sqrt(jnp.sum(img * img, -1, keepdims=True)), 1e-12)
    txt_ref[...] = txt / jnp.maximum(jnp.sqrt(jnp.sum(txt * txt, -1, keepdims=True)), 1e-12)

    # classifier: Linear(2H, D) split across the concat boundary, ReLU,
    # then Linear(D, 1) computed as a lane reduction (no degenerate MXU matvec).
    h1 = (jnp.dot(vision_out, w1v_ref[...], preferred_element_type=jnp.float32)
          + jnp.dot(text_pooler, w1t_ref[...], preferred_element_type=jnp.float32)
          + b1_ref[...])
    h1 = jnp.maximum(h1, 0.0)
    # TODO(synk): nn.Dropout(0.1) is identity in eval mode; training dropout not implemented.
    match_ref[...] = jnp.sum(h1 * w2_ref[...], axis=-1, keepdims=True) + b2_ref[...]


# ----------------------------------------------------------------------------
# Maxpool (2x2 stride 2) via a single reduce kernel
# ----------------------------------------------------------------------------
def _max4_kernel(x_ref, o_ref):
    o_ref[...] = jnp.max(x_ref[...], axis=1)


def maxpool2x2(x):
    # TODO(synk): real resnet18 uses 3x3/stride-2 maxpool; scaled-down 2x2/stride-2 here.
    B, H, W, C = x.shape
    Ho, Wo = H // 2, W // 2
    xr = x.reshape(B, Ho, 2, Wo, 2, C).transpose(0, 1, 3, 2, 4, 5).reshape(B * Ho * Wo, 4, C)
    y = _call(_max4_kernel, [xr], jax.ShapeDtypeStruct((B * Ho * Wo, C), jnp.float32))
    return y.reshape(B, Ho, Wo, C)


# ----------------------------------------------------------------------------
# Conv (im2col in JAX glue -> Pallas GEMM with folded BN / ReLU / residual add)
# ----------------------------------------------------------------------------
def conv2d_bn(x, w, bn_scale, bn_bias, stride=1, padding=1, relu=False, residual=None):
    # x: (B, H, W, Cin) NHWC ; w: (kh, kw, Cin, Cout); BN folded into scale/bias.
    B, H, W, Cin = x.shape
    kh, kw, _, Cout = w.shape
    if padding > 0:
        x = jnp.pad(x, ((0, 0), (padding, padding), (padding, padding), (0, 0)))
    Ho = (H + 2 * padding - kh) // stride + 1
    Wo = (W + 2 * padding - kw) // stride + 1
    patches = []
    for i in range(kh):
        for j in range(kw):
            patches.append(x[:, i:i + stride * Ho:stride, j:j + stride * Wo:stride, :])
    patches = jnp.concatenate(patches, axis=-1)               # (B, Ho, Wo, kh*kw*Cin)
    x2 = patches.reshape(B * Ho * Wo, kh * kw * Cin)
    w2 = w.reshape(kh * kw * Cin, Cout)
    y = linear_pallas(x2, w2, scale=bn_scale, bias=bn_bias, res=residual,
                      activation="relu" if relu else None)
    return y.reshape(B, Ho, Wo, Cout)


# ----------------------------------------------------------------------------
# Encoders
# ----------------------------------------------------------------------------
def bert_encoder(p, input_ids, attention_mask, cfg):
    B, S = input_ids.shape
    H, nH, dh = cfg["H"], cfg["nH"], cfg["dh"]
    emb = (p["word_emb"][input_ids]
           + p["pos_emb"][None, :S, :]
           + p["type_emb"][0][None, None, :])
    x = layernorm_pallas(emb.reshape(B * S, H), p["emb_ln_g"], p["emb_ln_b"])

    # additive attention bias: 0 where (same batch AND key not padded), else -1e9.
    key_allow = attention_mask.astype(jnp.float32)                         # (B, S)
    allow = (jnp.eye(B, dtype=jnp.float32)[:, None, :, None]
             * key_allow[None, None, :, :])                                # (B,1,B,S)
    allow = jnp.broadcast_to(allow, (B, S, B, S)).reshape(B * S, B * S)
    attn_bias = (allow - 1.0) * 1e9

    kern = functools.partial(_bert_layer_kernel, n_heads=nH, head_dim=dh, eps=1e-12)
    for layer in p["layers"]:
        x = _call(
            kern,
            [x, attn_bias,
             layer["wq"], layer["bq"].reshape(1, H),
             layer["wk"], layer["bk"].reshape(1, H),
             layer["wv"], layer["bv"].reshape(1, H),
             layer["wo"], layer["bo"].reshape(1, H),
             layer["ln1_g"].reshape(1, H), layer["ln1_b"].reshape(1, H),
             layer["w1"], layer["b1"].reshape(1, -1),
             layer["w2"], layer["b2"].reshape(1, H),
             layer["ln2_g"].reshape(1, H), layer["ln2_b"].reshape(1, H)],
            jax.ShapeDtypeStruct((B * S, H), jnp.float32))

    # return raw [CLS] hidden state; pooler (dense+tanh) is fused into the heads kernel.
    return x.reshape(B, S, H)[:, 0, :]


def resnet_encoder(p, image_nhwc):
    # stem conv + BN + relu, then maxpool
    x = conv2d_bn(image_nhwc, p["stem_w"], p["stem_s"], p["stem_b"],
                  stride=2, padding=1, relu=True)             # (B, 8, 8, c0)
    x = maxpool2x2(x)                                          # (B, 4, 4, c0)

    # basic block 1 (identity skip) — residual add + relu fused into second conv GEMM
    B, H, W, C = x.shape
    y = conv2d_bn(x, p["b1_w1"], p["b1_s1"], p["b1_b1"], 1, 1, relu=True)
    x = conv2d_bn(y, p["b1_w2"], p["b1_s2"], p["b1_b2"], 1, 1, relu=True,
                  residual=x.reshape(B * H * W, C))

    # basic block 2 (stride-2 downsample skip, channel expansion)
    idn = conv2d_bn(x, p["b2_wd"], p["b2_sd"], p["b2_bd"], 2, 0, relu=False)
    y = conv2d_bn(x, p["b2_w1"], p["b2_s1"], p["b2_b1"], 2, 1, relu=True)
    Bo, Ho, Wo, C2 = idn.shape
    x = conv2d_bn(y, p["b2_w2"], p["b2_s2"], p["b2_b2"], 1, 1, relu=True,
                  residual=idn.reshape(Bo * Ho * Wo, C2))

    Bo, Ho, Wo, C2 = x.shape
    # global-avg-pool and resnet fc are fused into the heads kernel downstream
    return x.reshape(Bo * Ho * Wo, C2), Ho * Wo


# ----------------------------------------------------------------------------
# ViLTBaseline forward
# ----------------------------------------------------------------------------
def vilt_forward(params, image, input_ids, attention_mask, cfg):
    B = image.shape[0]
    H, D = cfg["H"], cfg["D"]
    image_nhwc = jnp.transpose(image, (0, 2, 3, 1)).astype(jnp.float32)

    cls_tok = bert_encoder(params["bert"], input_ids, attention_mask, cfg)   # (B, H)
    feat2d, hw = resnet_encoder(params["resnet"], image_nhwc)                # (B*hw, C2)

    # block-diagonal averaging matrix so the global-avg-pool is a tiny matmul in-kernel
    pool_mat = jnp.kron(jnp.eye(B, dtype=jnp.float32),
                        jnp.ones((1, hw), jnp.float32) / hw)                 # (B, B*hw)

    pr, pb = params["resnet"], params["bert"]
    match, image_emb, text_emb = _call(
        _heads_kernel,
        [feat2d, pool_mat, cls_tok,
         pr["fc_w"], pr["fc_b"].reshape(1, H),
         pb["pool_w"], pb["pool_b"].reshape(1, H),
         params["img_proj_w"], params["img_proj_b"].reshape(1, D),
         params["txt_proj_w"], params["txt_proj_b"].reshape(1, D),
         params["cls_w1"][:H, :], params["cls_w1"][H:, :],
         params["cls_b1"].reshape(1, D),
         params["cls_w2"].reshape(1, D), params["cls_b2"].reshape(1, 1)],
        (jax.ShapeDtypeStruct((B, 1), jnp.float32),
         jax.ShapeDtypeStruct((B, D), jnp.float32),
         jax.ShapeDtypeStruct((B, D), jnp.float32)))

    return {"match_logits": match.reshape(B),
            "image_emb": image_emb, "text_emb": text_emb}


# ----------------------------------------------------------------------------
# Deterministic synthetic parameters (no checkpoint loading)
# ----------------------------------------------------------------------------
def make_params(key, cfg):
    ks = iter(jax.random.split(key, 128))

    def w(shape, s=0.02):
        return jax.random.normal(next(ks), shape, jnp.float32) * s

    H, FF, V, S, D = cfg["H"], cfg["FF"], cfg["V"], cfg["S"], cfg["D"]

    bert = {
        "word_emb": w((V, H)), "pos_emb": w((S, H)), "type_emb": w((2, H)),
        "emb_ln_g": jnp.ones((H,), jnp.float32), "emb_ln_b": jnp.zeros((H,), jnp.float32),
        "layers": [],
        "pool_w": w((H, H)), "pool_b": jnp.zeros((H,), jnp.float32),
    }
    for _ in range(cfg["n_layers"]):
        bert["layers"].append({
            "wq": w((H, H)), "bq": jnp.zeros((H,), jnp.float32),
            "wk": w((H, H)), "bk": jnp.zeros((H,), jnp.float32),
            "wv": w((H, H)), "bv": jnp.zeros((H,), jnp.float32),
            "wo": w((H, H)), "bo": jnp.zeros((H,), jnp.float32),
            "ln1_g": jnp.ones((H,), jnp.float32), "ln1_b": jnp.zeros((H,), jnp.float32),
            "w1": w((H, FF)), "b1": jnp.zeros((FF,), jnp.float32),
            "w2": w((FF, H)), "b2": jnp.zeros((H,), jnp.float32),
            "ln2_g": jnp.ones((H,), jnp.float32), "ln2_b": jnp.zeros((H,), jnp.float32),
        })

    def bn_fold(c):  # eval-mode BatchNorm folded to scale/bias
        gamma = 1.0 + w((c,), 0.05)
        beta = w((c,), 0.05)
        mean = w((c,), 0.1)
        var = jnp.abs(w((c,), 0.1)) + 1.0
        scale = gamma * jax.lax.rsqrt(var + 1e-5)
        return scale, beta - mean * scale

    c0, c1, c2 = 8, 8, 16
    s_s, s_b = bn_fold(c0)
    b1s1, b1b1 = bn_fold(c1)
    b1s2, b1b2 = bn_fold(c1)
    b2s1, b2b1 = bn_fold(c2)
    b2s2, b2b2 = bn_fold(c2)
    b2sd, b2bd = bn_fold(c2)
    resnet = {
        "stem_w": w((3, 3, 3, c0), 0.1), "stem_s": s_s, "stem_b": s_b,
        "b1_w1": w((3, 3, c1, c1), 0.1), "b1_s1": b1s1, "b1_b1": b1b1,
        "b1_w2": w((3, 3, c1, c1), 0.1), "b1_s2": b1s2, "b1_b2": b1b2,
        "b2_w1": w((3, 3, c1, c2), 0.1), "b2_s1": b2s1, "b2_b1": b2b1,
        "b2_w2": w((3, 3, c2, c2), 0.1), "b2_s2": b2s2, "b2_b2": b2b2,
        "b2_wd": w((1, 1, c1, c2), 0.1), "b2_sd": b2sd, "b2_bd": b2bd,
        "fc_w": w((c2, H)), "fc_b": jnp.zeros((H,), jnp.float32),
    }

    return {
        "bert": bert, "resnet": resnet,
        "img_proj_w": w((H, D)), "img_proj_b": jnp.zeros((D,), jnp.float32),
        "txt_proj_w": w((H, D)), "txt_proj_b": jnp.zeros((D,), jnp.float32),
        "cls_w1": w((2 * H, D)), "cls_b1": jnp.zeros((D,), jnp.float32),
        "cls_w2": w((D, 1)), "cls_b2": jnp.zeros((1,), jnp.float32),
        "temperature": jnp.array(0.07, jnp.float32),  # used only in compute_loss
    }


if __name__ == "__main__":
    cfg = dict(H=32, nH=4, dh=8, FF=64, V=64, S=8, D=16, n_layers=2)
    params = make_params(jax.random.PRNGKey(42), cfg)

    key = jax.random.PRNGKey(0)
    k_img, k_ids = jax.random.split(key)
    image = jax.random.normal(k_img, (2, 3, 16, 16), jnp.float32)        # NCHW
    input_ids = jax.random.randint(k_ids, (2, cfg["S"]), 0, cfg["V"])
    attention_mask = jnp.ones((2, cfg["S"]), jnp.float32).at[1, 6:].set(0.0)

    fwd = jax.jit(functools.partial(vilt_forward, cfg=cfg))
    out = fwd(params, image, input_ids, attention_mask)
    jax.block_until_ready(out)

    assert out["match_logits"].shape == (2,)
    assert out["image_emb"].shape == (2, cfg["D"])
    assert out["text_emb"].shape == (2, cfg["D"])
    print("KERNEL_OK")
</pallas_src>

<mosaic_0001>
module attributes {stable_mosaic.version = 11 : i64} {
  func.func @_linear_kernel(%arg0: i32, %arg1: memref<128x27xf32, #tpu.memory_space<vmem>>, %arg2: memref<27x8xf32, #tpu.memory_space<vmem>>, %arg3: memref<1x8xf32, #tpu.memory_space<vmem>>, %arg4: memref<1x8xf32, #tpu.memory_space<vmem>>, %arg5: memref<128x8xf32, #tpu.memory_space<vmem>>) attributes {dimension_semantics = [#tpu.dimension_semantics<arbitrary>], iteration_bounds = array<i64: 1>, scalar_prefetch = 0 : i64, scratch_operands = 0 : i64, tpu.core_type = #tpu.core_type<tc>, window_params = [{pipeline_mode = #tpu.pipeline_mode<synchronous>, transform_indices = @transform_0, window_bounds = array<i64: 128, 27>}, {pipeline_mode = #tpu.pipeline_mode<synchronous>, transform_indices = @transform_1, window_bounds = array<i64: 27, 8>}, {pipeline_mode = #tpu.pipeline_mode<synchronous>, transform_indices = @transform_2, window_bounds = array<i64: 1, 8>}, {pipeline_mode = #tpu.pipeline_mode<synchronous>, transform_indices = @transform_3, window_bounds = array<i64: 1, 8>}, {pipeline_mode = #tpu.pipeline_mode<synchronous>, transform_indices = @transform_4, window_bounds = array<i64: 128, 8>}]} {
    %c0 = arith.constant 0 : index
    %c0_0 = arith.constant 0 : index
    %0 = vector.load %arg1[%c0, %c0_0] : memref<128x27xf32, #tpu.memory_space<vmem>>, vector<128x27xf32>
    %c0_1 = arith.constant 0 : index
    %c0_2 = arith.constant 0 : index
    %1 = vector.load %arg2[%c0_1, %c0_2] : memref<27x8xf32, #tpu.memory_space<vmem>>, vector<27x8xf32>
    %cst = arith.constant dense<0.000000e+00> : vector<128x8xf32>
    %2 = tpu.matmul %0, %1, %cst {dimension_numbers = #tpu.dot_dimension_numbers<[1], [0], [0], [1], [0, 0, 1, 1], [], []>} : vector<128x27xf32>, vector<27x8xf32>, vector<128x8xf32> -> vector<128x8xf32>
    %c0_3 = arith.constant 0 : index
    %c0_4 = arith.constant 0 : index
    %3 = vector.load %arg3[%c0_3, %c0_4] : memref<1x8xf32, #tpu.memory_space<vmem>>, vector<1x8xf32>
    %4 = vector.broadcast %3 : vector<1x8xf32> to vector<128x8xf32>
    %5 = arith.mulf %2, %4 : vector<128x8xf32>
    %c0_5 = arith.constant 0 : index
    %c0_6 = arith.constant 0 : index
    %6 = vector.load %arg4[%c0_5, %c0_6] : memref<1x8xf32, #tpu.memory_space<vmem>>, vector<1x8xf32>
    %7 = vector.broadcast %6 : vector<1x8xf32> to vector<128x8xf32>
    %8 = arith.addf %5, %7 : vector<128x8xf32>
    %cst_7 = arith.constant 0.000000e+00 : f32
    %9 = vector.broadcast %cst_7 : f32 to vector<128x8xf32>
    %10 = arith.maximumf %8, %9 : vector<128x8xf32>
    %c0_8 = arith.constant 0 : index
    %c0_9 = arith.constant 0 : index
    %11 = vector.load %arg5[%c0_8, %c0_9] : memref<128x8xf32, #tpu.memory_space<vmem>>, vector<128x8xf32>
    tpu.vector_store %arg5[%c0_8, %c0_9], %10 {strides = array<i32>} : memref<128x8xf32, #tpu.memory_space<vmem>>, vector<128x8xf32>,
    return
  }
  func.func @transform_0(%arg0: i32) -> (i32, i32) {
    %c0_i32 = arith.constant 0 : i32
    %c0_i32_0 = arith.constant 0 : i32
    %c0_i32_1 = arith.constant 0 : i32
    return %c0_i32, %c0_i32_0 : i32, i32
  }
  func.func @transform_1(%arg0: i32) -> (i32, i32) {
    %c0_i32 = arith.constant 0 : i32
    %c0_i32_0 = arith.constant 0 : i32
    %c0_i32_1 = arith.constant 0 : i32
    return %c0_i32, %c0_i32_0 : i32, i32
  }
  func.func @transform_2(%arg0: i32) -> (i32, i32) {
    %c0_i32 = arith.constant 0 : i32
    %c0_i32_0 = arith.constant 0 : i32
    %c0_i32_1 = arith.constant 0 : i32
    return %c0_i32, %c0_i32_0 : i32, i32
  }
  func.func @transform_3(%arg0: i32) -> (i32, i32) {
    %c0_i32 = arith.constant 0 : i32
    %c0_i32_0 = arith.constant 0 : i32
    %c0_i32_1 = arith.constant 0 : i32
    return %c0_i32, %c0_i32_0 : i32, i32
  }
  func.func @transform_4(%arg0: i32) -> (i32, i32) {
    %c0_i32 = arith.constant 0 : i32
    %c0_i32_0 = arith.constant 0 : i32
    %c0_i32_1 = arith.constant 0 : i32
    return %c0_i32, %c0_i32_0 : i32, i32
  }
}

module attributes {stable_mosaic.version = 11 : i64} {
  func.func @_max4_kernel(%arg0: i32, %arg1: memref<32x4x8xf32, #tpu.memory_space<vmem>>, %arg2: memref<32x8xf32, #tpu.memory_space<vmem>>) attributes {dimension_semantics = [#tpu.dimension_semantics<arbitrary>], iteration_bounds = array<i64: 1>, scalar_prefetch = 0 : i64, scratch_operands = 0 : i64, tpu.core_type = #tpu.core_type<tc>, window_params = [{pipeline_mode = #tpu.pipeline_mode<synchronous>, transform_indices = @transform_0, window_bounds = array<i64: 32, 4, 8>}, {pipeline_mode = #tpu.pipeline_mode<synchronous>, transform_indices = @transform_1, window_bounds = array<i64: 32, 8>}]} {
    %c0 = arith.constant 0 : index
    %c0_0 = arith.constant 0 : index
    %c0_1 = arith.constant 0 : index
    %0 = vector.load %arg1[%c0, %c0_0, %c0_1] : memref<32x4x8xf32, #tpu.memory_space<vmem>>, vector<32x4x8xf32>
    %cst = arith.constant dense<0xFF800000> : vector<32x8xf32>
    %1 = vector.multi_reduction <maximumf>, %0, %cst [1] : vector<32x4x8xf32> to vector<32x8xf32>
    %c0_2 = arith.constant 0 : index
    %c0_3 = arith.constant 0 : index
    %2 = vector.load %arg2[%c0_2, %c0_3] : memref<32x8xf32, #tpu.memory_space<vmem>>, vector<32x8xf32>
    tpu.vector_store %arg2[%c0_2, %c0_3], %1 {strides = array<i32>} : memref<32x8xf32, #tpu.memory_space<vmem>>, vector<32x8xf32>,
    return
  }
  func.func @transform_0(%arg0: i32) -> (i32, i32, i32) {
    %c0_i32 = arith.constant 0 : i32
    %c0_i32_0 = arith.constant 0 : i32
    %c0_i32_1 = arith.constant 0 : i32
    %c0_i32_2 = arith.constant 0 : i32
    return %c0_i32, %c0_i32_0, %c0_i32_1 : i32, i32, i32
  }
  func.func @transform_1(%arg0: i32) -> (i32, i32) {
    %c0_i32 = arith.constant 0 : i32
    %c0_i32_0 = arith.constant 0 : i32
    %c0_i32_1 = arith.constant 0 : i32
    return %c0_i32, %c0_i32_0 : i32, i32
  }
}

module attributes {stable_mosaic.version = 11 : i64} {
  func.func @_linear_kernel(%arg0: i32, %arg1: memref<32x72xf32, #tpu.memory_space<vmem>>, %arg2: memref<72x8xf32, #tpu.memory_space<vmem>>, %arg3: memref<1x8xf32, #tpu.memory_space<vmem>>, %arg4: memref<1x8xf32, #tpu.memory_space<vmem>>, %arg5: memref<32x8xf32, #tpu.memory_space<vmem>>) attributes {dimension_semantics = [#tpu.dimension_semantics<arbitrary>], iteration_bounds = array<i64: 1>, scalar_prefetch = 0 : i64, scratch_operands = 0 : i64, tpu.core_type = #tpu.core_type<tc>, window_params = [{pipeline_mode = #tpu.pipeline_mode<synchronous>, transform_indices = @transform_0, window_bounds = array<i64: 32, 72>}, {pipeline_mode = #tpu.pipeline_mode<synchronous>, transform_indices = @transform_1, window_bounds = array<i64: 72, 8>}, {pipeline_mode = #tpu.pipeline_mode<synchronous>, transform_indices = @transform_2, window_bounds = array<i64: 1, 8>}, {pipeline_mode = #tpu.pipeline_mode<synchronous>, transform_indices = @transform_3, window_bounds = array<i64: 1, 8>}, {pipeline_mode = #tpu.pipeline_mode<synchronous>, transform_indices = @transform_4, window_bounds = array<i64: 32, 8>}]} {
    %c0 = arith.constant 0 : index
    %c0_0 = arith.constant 0 : index
    %0 = vector.load %arg1[%c0, %c0_0] : memref<32x72xf32, #tpu.memory_space<vmem>>, vector<32x72xf32>
    %c0_1 = arith.constant 0 : index
    %c0_2 = arith.constant 0 : index
    %1 = vector.load %arg2[%c0_1, %c0_2] : memref<72x8xf32, #tpu.memory_space<vmem>>, vector<72x8xf32>
    %cst = arith.constant dense<0.000000e+00> : vector<32x8xf32>
    %2 = tpu.matmul %0, %1, %cst {dimension_numbers = #tpu.dot_dimension_numbers<[1], [0], [0], [1], [0, 0, 1, 1], [], []>} : vector<32x72xf32>, vector<72x8xf32>, vector<32x8xf32> -> vector<32x8xf32>
    %c0_3 = arith.constant 0 : index
    %c0_4 = arith.constant 0 : index
    %3 = vector.load %arg3[%c0_3, %c0_4] : memref<1x8xf32, #tpu.memory_space<vmem>>, vector<1x8xf32>
    %4 = vector.broadcast %3 : vector<1x8xf32> to vector<32x8xf32>
    %5 = arith.mulf %2, %4 : vector<32x8xf32>
    %c0_5 = arith.constant 0 : index
    %c0_6 = arith.constant 0 : index
    %6 = vector.load %arg4[%c0_5, %c0_6] : memref<1x8xf32, #tpu.memory_space<vmem>>, vector<1x8xf32>
    %7 = vector.broadcast %6 : vector<1x8xf32> to vector<32x8xf32>
    %8 = arith.addf %5, %7 : vector<32x8xf32>
    %cst_7 = arith.constant 0.000000e+00 : f32
    %9 = vector.broadcast %cst_7 : f32 to vector<32x8xf32>
    %10 = arith.maximumf %8, %9 : vector<32x8xf32>
    %c0_8 = arith.constant 0 : index
    %c0_9 = arith.constant 0 : index
    %11 = vector.load %arg5[%c0_8, %c0_9] : memref<32x8xf32, #tpu.memory_space<vmem>>, vector<32x8xf32>
    tpu.vector_store %arg5[%c0_8, %c0_9], %10 {strides = array<i32>} : memref<32x8xf32, #tpu.memory_space<vmem>>, vector<32x8xf32>,
    return
  }
  func.func @transform_0(%arg0: i32) -> (i32, i32) {
    %c0_i32 = arith.constant 0 : i32
    %c0_i32_0 = arith.constant 0 : i32
    %c0_i32_1 = arith.constant 0 : i32
    return %c0_i32, %c0_i32_0 : i32, i32
  }
  func.func @transform_1(%arg0: i32) -> (i32, i32) {
    %c0_i32 = arith.constant 0 : i32
    %c0_i32_0 = arith.constant 0 : i32
    %c0_i32_1 = arith.constant 0 : i32
    return %c0_i32, %c0_i32_0 : i32, i32
  }
  func.func @transform_2(%arg0: i32) -> (i32, i32) {
    %c0_i32 = arith.constant 0 : i32
    %c0_i32_0 = arith.constant 0 : i32
    %c0_i32_1 = arith.constant 0 : i32
    return %c0_i32, %c0_i32_0 : i32, i32
  }
  func.func @transform_3(%arg0: i32) -> (i32, i32) {
    %c0_i32 = arith.constant 0 : i32
    %c0_i32_0 = arith.constant 0 : i32
    %c0_i32_1 = arith.constant 0 : i32
    return %c0_i32, %c0_i32_0 : i32, i32
  }
  func.func @transform_4(%arg0: i32) -> (i32, i32) {
    %c0_i32 = arith.constant 0 : i32
    %c0_i32_0 = arith.constant 0 : i32
    %c0_i32_1 = arith.constant 0 : i32
    return %c0_i32, %c0_i32_0 : i32, i32
  }
}

module attributes {stable_mosaic.version = 11 : i64} {
  func.func @_linear_kernel(%arg0: i32, %arg1: memref<32x72xf32, #tpu.memory_space<vmem>>, %arg2: memref<72x8xf32, #tpu.memory_space<vmem>>, %arg3: memref<1x8xf32, #tpu.memory_space<vmem>>, %arg4: memref<1x8xf32, #tpu.memory_space<vmem>>, %arg5: memref<32x8xf32, #tpu.memory_space<vmem>>, %arg6: memref<32x8xf32, #tpu.memory_space<vmem>>) attributes {dimension_semantics = [#tpu.dimension_semantics<arbitrary>], iteration_bounds = array<i64: 1>, scalar_prefetch = 0 : i64, scratch_operands = 0 : i64, tpu.core_type = #tpu.core_type<tc>, window_params = [{pipeline_mode = #tpu.pipeline_mode<synchronous>, transform_indices = @transform_0, window_bounds = array<i64: 32, 72>}, {pipeline_mode = #tpu.pipeline_mode<synchronous>, transform_indices = @transform_1, window_bounds = array<i64: 72, 8>}, {pipeline_mode = #tpu.pipeline_mode<synchronous>, transform_indices = @transform_2, window_bounds = array<i64: 1, 8>}, {pipeline_mode = #tpu.pipeline_mode<synchronous>, transform_indices = @transform_3, window_bounds = array<i64: 1, 8>}, {pipeline_mode = #tpu.pipeline_mode<synchronous>, transform_indices = @transform_4, window_bounds = array<i64: 32, 8>}, {pipeline_mode = #tpu.pipeline_mode<synchronous>, transform_indices = @transform_5, window_bounds = array<i64: 32, 8>}]} {
    %c0 = arith.constant 0 : index
    %c0_0 = arith.constant 0 : index
    %0 = vector.load %arg1[%c0, %c0_0] : memref<32x72xf32, #tpu.memory_space<vmem>>, vector<32x72xf32>
    %c0_1 = arith.constant 0 : index
    %c0_2 = arith.constant 0 : index
    %1 = vector.load %arg2[%c0_1, %c0_2] : memref<72x8xf32, #tpu.memory_space<vmem>>, vector<72x8xf32>
    %cst = arith.constant dense<0.000000e+00> : vector<32x8xf32>
    %2 = tpu.matmul %0, %1, %cst {dimension_numbers = #tpu.dot_dimension_numbers<[1], [0], [0], [1], [0, 0, 1, 1], [], []>} : vector<32x72xf32>, vector<72x8xf32>, vector<32x8xf32> -> vector<32x8xf32>
    %c0_3 = arith.constant 0 : index
    %c0_4 = arith.constant 0 : index
    %3 = vector.load %arg3[%c0_3, %c0_4] : memref<1x8xf32, #tpu.memory_space<vmem>>, vector<1x8xf32>
    %4 = vector.broadcast %3 : vector<1x8xf32> to vector<32x8xf32>
    %5 = arith.mulf %2, %4 : vector<32x8xf32>
    %c0_5 = arith.constant 0 : index
    %c0_6 = arith.constant 0 : index
    %6 = vector.load %arg4[%c0_5, %c0_6] : memref<1x8xf32, #tpu.memory_space<vmem>>, vector<1x8xf32>
    %7 = vector.broadcast %6 : vector<1x8xf32> to vector<32x8xf32>
    %8 = arith.addf %5, %7 : vector<32x8xf32>
    %c0_7 = arith.constant 0 : index
    %c0_8 = arith.constant 0 : index
    %9 = vector.load %arg5[%c0_7, %c0_8] : memref<32x8xf32, #tpu.memory_space<vmem>>, vector<32x8xf32>
    %10 = arith.addf %8, %9 : vector<32x8xf32>
    %cst_9 = arith.constant 0.000000e+00 : f32
    %11 = vector.broadcast %cst_9 : f32 to vector<32x8xf32>
    %12 = arith.maximumf %10, %11 : vector<32x8xf32>
    %c0_10 = arith.constant 0 : index
    %c0_11 = arith.constant 0 : index
    %13 = vector.load %arg6[%c0_10, %c0_11] : memref<32x8xf32, #tpu.memory_space<vmem>>, vector<32x8xf32>
    tpu.vector_store %arg6[%c0_10, %c0_11], %12 {strides = array<i32>} : memref<32x8xf32, #tpu.memory_space<vmem>>, vector<32x8xf32>,
    return
  }
  func.func @transform_0(%arg0: i32) -> (i32, i32) {
    %c0_i32 = arith.constant 0 : i32
    %c0_i32_0 = arith.constant 0 : i32
    %c0_i32_1 = arith.constant 0 : i32
    return %c0_i32, %c0_i32_0 : i32, i32
  }
  func.func @transform_1(%arg0: i32) -> (i32, i32) {
    %c0_i32 = arith.constant 0 : i32
    %c0_i32_0 = arith.constant 0 : i32
    %c0_i32_1 = arith.constant 0 : i32
    return %c0_i32, %c0_i32_0 : i32, i32
  }
  func.func @transform_2(%arg0: i32) -> (i32, i32) {
    %c0_i32 = arith.constant 0 : i32
    %c0_i32_0 = arith.constant 0 : i32
    %c0_i32_1 = arith.constant 0 : i32
    return %c0_i32, %c0_i32_0 : i32, i32
  }
  func.func @transform_3(%arg0: i32) -> (i32, i32) {
    %c0_i32 = arith.constant 0 : i32
    %c0_i32_0 = arith.constant 0 : i32
    %c0_i32_1 = arith.constant 0 : i32
    return %c0_i32, %c0_i32_0 : i32, i32
  }
  func.func @transform_4(%arg0: i32) -> (i32, i32) {
    %c0_i32 = arith.constant 0 : i32
    %c0_i32_0 = arith.constant 0 : i32
    %c0_i32_1 = arith.constant 0 : i32
    return %c0_i32, %c0_i32_0 : i32, i32
  }
  func.func @transform_5(%arg0: i32) -> (i32, i32) {
    %c0_i32 = arith.constant 0 : i32
    %c0_i32_0 = arith.constant 0 : i32
    %c0_i32_1 = arith.constant 0 : i32
    return %c0_i32, %c0_i32_0 : i32, i32
  }
}

module attributes {stable_mosaic.version = 11 : i64} {
  func.func @_linear_kernel(%arg0: i32, %arg1: memref<8x72xf32, #tpu.memory_space<vmem>>, %arg2: memref<72x16xf32, #tpu.memory_space<vmem>>, %arg3: memref<1x16xf32, #tpu.memory_space<vmem>>, %arg4: memref<1x16xf32, #tpu.memory_space<vmem>>, %arg5: memref<8x16xf32, #tpu.memory_space<vmem>>) attributes {dimension_semantics = [#tpu.dimension_semantics<arbitrary>], iteration_bounds = array<i64: 1>, scalar_prefetch = 0 : i64, scratch_operands = 0 : i64, tpu.core_type = #tpu.core_type<tc>, window_params = [{pipeline_mode = #tpu.pipeline_mode<synchronous>, transform_indices = @transform_0, window_bounds = array<i64: 8, 72>}, {pipeline_mode = #tpu.pipeline_mode<synchronous>, transform_indices = @transform_1, window_bounds = array<i64: 72, 16>}, {pipeline_mode = #tpu.pipeline_mode<synchronous>, transform_indices = @transform_2, window_bounds = array<i64: 1, 16>}, {pipeline_mode = #tpu.pipeline_mode<synchronous>, transform_indices = @transform_3, window_bounds = array<i64: 1, 16>}, {pipeline_mode = #tpu.pipeline_mode<synchronous>, transform_indices = @transform_4, window_bounds = array<i64: 8, 16>}]} {
    %c0 = arith.constant 0 : index
    %c0_0 = arith.constant 0 : index
    %0 = vector.load %arg1[%c0, %c0_0] : memref<8x72xf32, #tpu.memory_space<vmem>>, vector<8x72xf32>
    %c0_1 = arith.constant 0 : index
    %c0_2 = arith.constant 0 : index
    %1 = vector.load %arg2[%c0_1, %c0_2] : memref<72x16xf32, #tpu.memory_space<vmem>>, vector<72x16xf32>
    %cst = arith.constant dense<0.000000e+00> : vector<8x16xf32>
    %2 = tpu.matmul %0, %1, %cst {dimension_numbers = #tpu.dot_dimension_numbers<[1], [0], [0], [1], [0, 0, 1, 1], [], []>} : vector<8x72xf32>, vector<72x16xf32>, vector<8x16xf32> -> vector<8x16xf32>
    %c0_3 = arith.constant 0 : index
    %c0_4 = arith.constant 0 : index
    %3 = vector.load %arg3[%c0_3, %c0_4] : memref<1x16xf32, #tpu.memory_space<vmem>>, vector<1x16xf32>
    %4 = vector.broadcast %3 : vector<1x16xf32> to vector<8x16xf32>
    %5 = arith.mulf %2, %4 : vector<8x16xf32>
    %c0_5 = arith.constant 0 : index
    %c0_6 = arith.constant 0 : index
    %6 = vector.load %arg4[%c0_5, %c0_6] : memref<1x16xf32, #tpu.memory_space<vmem>>, vector<1x16xf32>
    %7 = vector.broadcast %6 : vector<1x16xf32> to vector<8x16xf32>
    %8 = arith.addf %5, %7 : vector<8x16xf32>
    %cst_7 = arith.constant 0.000000e+00 : f32
    %9 = vector.broadcast %cst_7 : f32 to vector<8x16xf32>
    %10 = arith.maximumf %8, %9 : vector<8x16xf32>
    %c0_8 = arith.constant 0 : index
    %c0_9 = arith.constant 0 : index
    %11 = vector.load %arg5[%c0_8, %c0_9] : memref<8x16xf32, #tpu.memory_space<vmem>>, vector<8x16xf32>
    tpu.vector_store %arg5[%c0_8, %c0_9], %10 {strides = array<i32>} : memref<8x16xf32, #tpu.memory_space<vmem>>, vector<8x16xf32>,
    return
  }
  func.func @transform_0(%arg0: i32) -> (i32, i32) {
    %c0_i32 = arith.constant 0 : i32
    %c0_i32_0 = arith.constant 0 : i32
    %c0_i32_1 = arith.constant 0 : i32
    return %c0_i32, %c0_i32_0 : i32, i32
  }
  func.func @transform_1(%arg0: i32) -> (i32, i32) {
    %c0_i32 = arith.constant 0 : i32
    %c0_i32_0 = arith.constant 0 : i32
    %c0_i32_1 = arith.constant 0 : i32
    return %c0_i32, %c0_i32_0 : i32, i32
  }
  func.func @transform_2(%arg0: i32) -> (i32, i32) {
    %c0_i32 = arith.constant 0 : i32
    %c0_i32_0 = arith.constant 0 : i32
    %c0_i32_1 = arith.constant 0 : i32
    return %c0_i32, %c0_i32_0 : i32, i32
  }
  func.func @transform_3(%arg0: i32) -> (i32, i32) {
    %c0_i32 = arith.constant 0 : i32
    %c0_i32_0 = arith.constant 0 : i32
    %c0_i32_1 = arith.constant 0 : i32
    return %c0_i32, %c0_i32_0 : i32, i32
  }
  func.func @transform_4(%arg0: i32) -> (i32, i32) {
    %c0_i32 = arith.constant 0 : i32
    %c0_i32_0 = arith.constant 0 : i32
    %c0_i32_1 = arith.constant 0 : i32
    return %c0_i32, %c0_i32_0 : i32, i32
  }
}

module attributes {stable_mosaic.version = 11 : i64} {
  func.func @_linear_kernel(%arg0: i32, %arg1: memref<8x8xf32, #tpu.memory_space<vmem>>, %arg2: memref<8x16xf32, #tpu.memory_space<vmem>>, %arg3: memref<1x16xf32, #tpu.memory_space<vmem>>, %arg4: memref<1x16xf32, #tpu.memory_space<vmem>>, %arg5: memref<8x16xf32, #tpu.memory_space<vmem>>) attributes {dimension_semantics = [#tpu.dimension_semantics<arbitrary>], iteration_bounds = array<i64: 1>, scalar_prefetch = 0 : i64, scratch_operands = 0 : i64, tpu.core_type = #tpu.core_type<tc>, window_params = [{pipeline_mode = #tpu.pipeline_mode<synchronous>, transform_indices = @transform_0, window_bounds = array<i64: 8, 8>}, {pipeline_mode = #tpu.pipeline_mode<synchronous>, transform_indices = @transform_1, window_bounds = array<i64: 8, 16>}, {pipeline_mode = #tpu.pipeline_mode<synchronous>, transform_indices = @transform_2, window_bounds = array<i64: 1, 16>}, {pipeline_mode = #tpu.pipeline_mode<synchronous>, transform_indices = @transform_3, window_bounds = array<i64: 1, 16>}, {pipeline_mode = #tpu.pipeline_mode<synchronous>, transform_indices = @transform_4, window_bounds = array<i64: 8, 16>}]} {
    %c0 = arith.constant 0 : index
    %c0_0 = arith.constant 0 : index
    %0 = vector.load %arg1[%c0, %c0_0] : memref<8x8xf32, #tpu.memory_space<vmem>>, vector<8x8xf32>
    %c0_1 = arith.constant 0 : index
    %c0_2 = arith.constant 0 : index
    %1 = vector.load %arg2[%c0_1, %c0_2] : memref<8x16xf32, #tpu.memory_space<vmem>>, vector<8x16xf32>
    %cst = arith.constant dense<0.000000e+00> : vector<8x16xf32>
    %2 = tpu.matmul %0, %1, %cst {dimension_numbers = #tpu.dot_dimension_numbers<[1], [0], [0], [1], [0, 0, 1, 1], [], []>} : vector<8x8xf32>, vector<8x16xf32>, vector<8x16xf32> -> vector<8x16xf32>
    %c0_3 = arith.constant 0 : index
    %c0_4 = arith.constant 0 : index
    %3 = vector.load %arg3[%c0_3, %c0_4] : memref<1x16xf32, #tpu.memory_space<vmem>>, vector<1x16xf32>
    %4 = vector.broadcast %3 : vector<1x16xf32> to vector<8x16xf32>
    %5 = arith.mulf %2, %4 : vector<8x16xf32>
    %c0_5 = arith.constant 0 : index
    %c0_6 = arith.constant 0 : index
    %6 = vector.load %arg4[%c0_5, %c0_6] : memref<1x16xf32, #tpu.memory_space<vmem>>, vector<1x16xf32>
    %7 = vector.broadcast %6 : vector<1x16xf32> to vector<8x16xf32>
    %8 = arith.addf %5, %7 : vector<8x16xf32>
    %c0_7 = arith.constant 0 : index
    %c0_8 = arith.constant 0 : index
    %9 = vector.load %arg5[%c0_7, %c0_8] : memref<8x16xf32, #tpu.memory_space<vmem>>, vector<8x16xf32>
    tpu.vector_store %arg5[%c0_7, %c0_8], %8 {strides = array<i32>} : memref<8x16xf32, #tpu.memory_space<vmem>>, vector<8x16xf32>,
    return
  }
  func.func @transform_0(%arg0: i32) -> (i32, i32) {
    %c0_i32 = arith.constant 0 : i32
    %c0_i32_0 = arith.constant 0 : i32
    %c0_i32_1 = arith.constant 0 : i32
    return %c0_i32, %c0_i32_0 : i32, i32
  }
  func.func @transform_1(%arg0: i32) -> (i32, i32) {
    %c0_i32 = arith.constant 0 : i32
    %c0_i32_0 = arith.constant 0 : i32
    %c0_i32_1 = arith.constant 0 : i32
    return %c0_i32, %c0_i32_0 : i32, i32
  }
  func.func @transform_2(%arg0: i32) -> (i32, i32) {
    %c0_i32 = arith.constant 0 : i32
    %c0_i32_0 = arith.constant 0 : i32
    %c0_i32_1 = arith.constant 0 : i32
    return %c0_i32, %c0_i32_0 : i32, i32
  }
  func.func @transform_3(%arg0: i32) -> (i32, i32) {
    %c0_i32 = arith.constant 0 : i32
    %c0_i32_0 = arith.constant 0 : i32
    %c0_i32_1 = arith.constant 0 : i32
    return %c0_i32, %c0_i32_0 : i32, i32
  }
  func.func @transform_4(%arg0: i32) -> (i32, i32) {
    %c0_i32 = arith.constant 0 : i32
    %c0_i32_0 = arith.constant 0 : i32
    %c0_i32_1 = arith.constant 0 : i32
    return %c0_i32, %c0_i32_0 : i32, i32
  }
}

module attributes {stable_mosaic.version = 11 : i64} {
  func.func @_linear_kernel(%arg0: i32, %arg1: memref<8x144xf32, #tpu.memory_space<vmem>>, %arg2: memref<144x16xf32, #tpu.memory_space<vmem>>, %arg3: memref<1x16xf32, #tpu.memory_space<vmem>>, %arg4: memref<1x16xf32, #tpu.memory_space<vmem>>, %arg5: memref<8x16xf32, #tpu.memory_space<vmem>>, %arg6: memref<8x16xf32, #tpu.memory_space<vmem>>) attributes {dimension_semantics = [#tpu.dimension_semantics<arbitrary>], iteration_bounds = array<i64: 1>, scalar_prefetch = 0 : i64, scratch_operands = 0 : i64, tpu.core_type = #tpu.core_type<tc>, window_params = [{pipeline_mode = #tpu.pipeline_mode<synchronous>, transform_indices = @transform_0, window_bounds = array<i64: 8, 144>}, {pipeline_mode = #tpu.pipeline_mode<synchronous>, transform_indices = @transform_1, window_bounds = array<i64: 144, 16>}, {pipeline_mode = #tpu.pipeline_mode<synchronous>, transform_indices = @transform_2, window_bounds = array<i64: 1, 16>}, {pipeline_mode = #tpu.pipeline_mode<synchronous>, transform_indices = @transform_3, window_bounds = array<i64: 1, 16>}, {pipeline_mode = #tpu.pipeline_mode<synchronous>, transform_indices = @transform_4, window_bounds = array<i64: 8, 16>}, {pipeline_mode = #tpu.pipeline_mode<synchronous>, transform_indices = @transform_5, window_bounds = array<i64: 8, 16>}]} {
    %c0 = arith.constant 0 : index
    %c0_0 = arith.constant 0 : index
    %0 = vector.load %arg1[%c0, %c0_0] : memref<8x144xf32, #tpu.memory_space<vmem>>, vector<8x144xf32>
    %c0_1 = arith.constant 0 : index
    %c0_2 = arith.constant 0 : index
    %1 = vector.load %arg2[%c0_1, %c0_2] : memref<144x16xf32, #tpu.memory_space<vmem>>, vector<144x16xf32>
    %cst = arith.constant dense<0.000000e+00> : vector<8x16xf32>
    %2 = tpu.matmul %0, %1, %cst {dimension_numbers = #tpu.dot_dimension_numbers<[1], [0], [0], [1], [0, 0, 1, 1], [], []>} : vector<8x144xf32>, vector<144x16xf32>, vector<8x16xf32> -> vector<8x16xf32>
    %c0_3 = arith.constant 0 : index
    %c0_4 = arith.constant 0 : index
    %3 = vector.load %arg3[%c0_3, %c0_4] : memref<1x16xf32, #tpu.memory_space<vmem>>, vector<1x16xf32>
    %4 = vector.broadcast %3 : vector<1x16xf32> to vector<8x16xf32>
    %5 = arith.mulf %2, %4 : vector<8x16xf32>
    %c0_5 = arith.constant 0 : index
    %c0_6 = arith.constant 0 : index
    %6 = vector.load %arg4[%c0_5, %c0_6] : memref<1x16xf32, #tpu.memory_space<vmem>>, vector<1x16xf32>
    %7 = vector.broadcast %6 : vector<1x16xf32> to vector<8x16xf32>
    %8 = arith.addf %5, %7 : vector<8x16xf32>
    %c0_7 = arith.constant 0 : index
    %c0_8 = arith.constant 0 : index
    %9 = vector.load %arg5[%c0_7, %c0_8] : memref<8x16xf32, #tpu.memory_space<vmem>>, vector<8x16xf32>
    %10 = arith.addf %8, %9 : vector<8x16xf32>
    %cst_9 = arith.constant 0.000000e+00 : f32
    %11 = vector.broadcast %cst_9 : f32 to vector<8x16xf32>
    %12 = arith.maximumf %10, %11 : vector<8x16xf32>
    %c0_10 = arith.constant 0 : index
    %c0_11 = arith.constant 0 : index
    %13 = vector.load %arg6[%c0_10, %c0_11] : memref<8x16xf32, #tpu.memory_space<vmem>>, vector<8x16xf32>
    tpu.vector_store %arg6[%c0_10, %c0_11], %12 {strides = array<i32>} : memref<8x16xf32, #tpu.memory_space<vmem>>, vector<8x16xf32>,
    return
  }
  func.func @transform_0(%arg0: i32) -> (i32, i32) {
    %c0_i32 = arith.constant 0 : i32
    %c0_i32_0 = arith.constant 0 : i32
    %c0_i32_1 = arith.constant 0 : i32
    return %c0_i32, %c0_i32_0 : i32, i32
  }
  func.func @transform_1(%arg0: i32) -> (i32, i32) {
    %c0_i32 = arith.constant 0 : i32
    %c0_i32_0 = arith.constant 0 : i32
    %c0_i32_1 = arith.constant 0 : i32
    return %c0_i32, %c0_i32_0 : i32, i32
  }
  func.func @transform_2(%arg0: i32) -> (i32, i32) {
    %c0_i32 = arith.constant 0 : i32
    %c0_i32_0 = arith.constant 0 : i32
    %c0_i32_1 = arith.constant 0 : i32
    return %c0_i32, %c0_i32_0 : i32, i32
  }
  func.func @transform_3(%arg0: i32) -> (i32, i32) {
    %c0_i32 = arith.constant 0 : i32
    %c0_i32_0 = arith.constant 0 : i32
    %c0_i32_1 = arith.constant 0 : i32
    return %c0_i32, %c0_i32_0 : i32, i32
  }
  func.func @transform_4(%arg0: i32) -> (i32, i32) {
    %c0_i32 = arith.constant 0 : i32
    %c0_i32_0 = arith.constant 0 : i32
    %c0_i32_1 = arith.constant 0 : i32
    return %c0_i32, %c0_i32_0 : i32, i32
  }
  func.func @transform_5(%arg0: i32) -> (i32, i32) {
    %c0_i32 = arith.constant 0 : i32
    %c0_i32_0 = arith.constant 0 : i32
    %c0_i32_1 = arith.constant 0 : i32
    return %c0_i32, %c0_i32_0 : i32, i32
  }
}

module attributes {stable_mosaic.version = 11 : i64} {
  func.func @_ln_kernel(%arg0: i32, %arg1: memref<16x32xf32, #tpu.memory_space<vmem>>, %arg2: memref<1x32xf32, #tpu.memory_space<vmem>>, %arg3: memref<1x32xf32, #tpu.memory_space<vmem>>, %arg4: memref<16x32xf32, #tpu.memory_space<vmem>>) attributes {dimension_semantics = [#tpu.dimension_semantics<arbitrary>], iteration_bounds = array<i64: 1>, scalar_prefetch = 0 : i64, scratch_operands = 0 : i64, tpu.core_type = #tpu.core_type<tc>, window_params = [{pipeline_mode = #tpu.pipeline_mode<synchronous>, transform_indices = @transform_0, window_bounds = array<i64: 16, 32>}, {pipeline_mode = #tpu.pipeline_mode<synchronous>, transform_indices = @transform_1, window_bounds = array<i64: 1, 32>}, {pipeline_mode = #tpu.pipeline_mode<synchronous>, transform_indices = @transform_2, window_bounds = array<i64: 1, 32>}, {pipeline_mode = #tpu.pipeline_mode<synchronous>, transform_indices = @transform_3, window_bounds = array<i64: 16, 32>}]} {
    %c0 = arith.constant 0 : index
    %c0_0 = arith.constant 0 : index
    %0 = vector.load %arg1[%c0, %c0_0] : memref<16x32xf32, #tpu.memory_space<vmem>>, vector<16x32xf32>
    %c0_1 = arith.constant 0 : index
    %c0_2 = arith.constant 0 : index
    %1 = vector.load %arg2[%c0_1, %c0_2] : memref<1x32xf32, #tpu.memory_space<vmem>>, vector<1x32xf32>
    %c0_3 = arith.constant 0 : index
    %c0_4 = arith.constant 0 : index
    %2 = vector.load %arg3[%c0_3, %c0_4] : memref<1x32xf32, #tpu.memory_space<vmem>>, vector<1x32xf32>
    %cst = arith.constant dense<0.000000e+00> : vector<16xf32>
    %3 = vector.multi_reduction <add>, %0, %cst [1] : vector<16x32xf32> to vector<16xf32>
    %4 = vector.shape_cast %3 : vector<16xf32> to vector<16x1xf32>
    %cst_5 = arith.constant 3.200000e+01 : f32
    %5 = vector.broadcast %cst_5 : f32 to vector<16x1xf32>
    %6 = arith.divf %4, %5 : vector<16x1xf32>
    %7 = vector.broadcast %6 : vector<16x1xf32> to vector<16x32xf32>
    %8 = arith.subf %0, %7 : vector<16x32xf32>
    %9 = arith.mulf %8, %8 : vector<16x32xf32>
    %cst_6 = arith.constant dense<0.000000e+00> : vector<16xf32>
    %10 = vector.multi_reduction <add>, %9, %cst_6 [1] : vector<16x32xf32> to vector<16xf32>
    %11 = vector.shape_cast %10 : vector<16xf32> to vector<16x1xf32>
    %cst_7 = arith.constant 3.200000e+01 : f32
    %12 = vector.broadcast %cst_7 : f32 to vector<16x1xf32>
    %13 = arith.divf %11, %12 : vector<16x1xf32>
    %14 = vector.broadcast %6 : vector<16x1xf32> to vector<16x32xf32>
    %15 = arith.subf %0, %14 : vector<16x32xf32>
    %cst_8 = arith.constant 9.99999996E-13 : f32
    %16 = vector.broadcast %cst_8 : f32 to vector<16x1xf32>
    %17 = arith.addf %13, %16 : vector<16x1xf32>
    %18 = math.rsqrt %17 : vector<16x1xf32>
    %19 = vector.broadcast %18 : vector<16x1xf32> to vector<16x32xf32>
    %20 = arith.mulf %15, %19 : vector<16x32xf32>
    %21 = vector.broadcast %1 : vector<1x32xf32> to vector<16x32xf32>
    %22 = arith.mulf %20, %21 : vector<16x32xf32>
    %23 = vector.broadcast %2 : vector<1x32xf32> to vector<16x32xf32>
    %24 = arith.addf %22, %23 : vector<16x32xf32>
    %c0_9 = arith.constant 0 : index
    %c0_10 = arith.constant 0 : index
    %25 = vector.load %arg4[%c0_9, %c0_10] : memref<16x32xf32, #tpu.memory_space<vmem>>, vector<16x32xf32>
    tpu.vector_store %arg4[%c0_9, %c0_10], %24 {strides = array<i32>} : memref<16x32xf32, #tpu.memory_space<vmem>>, vector<16x32xf32>,
    return
  }
  func.func @transform_0(%arg0: i32) -> (i32, i32) {
    %c0_i32 = arith.constant 0 : i32
    %c0_i32_0 = arith.constant 0 : i32
    %c0_i32_1 = arith.constant 0 : i32
    return %c0_i32, %c0_i32_0 : i32, i32
  }
  func.func @transform_1(%arg0: i32) -> (i32, i32) {
    %c0_i32 = arith.constant 0 : i32
    %c0_i32_0 = arith.constant 0 : i32
    %c0_i32_1 = arith.constant 0 : i32
    return %c0_i32, %c0_i32_0 : i32, i32
  }
  func.func @transform_2(%arg0: i32) -> (i32, i32) {
    %c0_i32 = arith.constant 0 : i32
    %c0_i32_0 = arith.constant 0 : i32
    %c0_i32_1 = arith.constant 0 : i32
    return %c0_i32, %c0_i32_0 : i32, i32
  }
  func.func @transform_3(%arg0: i32) -> (i32, i32) {
    %c0_i32 = arith.constant 0 : i32
    %c0_i32_0 = arith.constant 0 : i32
    %c0_i32_1 = arith.constant 0 : i32
    return %c0_i32, %c0_i32_0 : i32, i32
  }
}

module attributes {stable_mosaic.version = 11 : i64} {
  func.func @_bert_layer_kernel(%arg0: i32, %arg1: memref<16x32xf32, #tpu.memory_space<vmem>>, %arg2: memref<16x16xf32, #tpu.memory_space<vmem>>, %arg3: memref<32x32xf32, #tpu.memory_space<vmem>>, %arg4: memref<1x32xf32, #tpu.memory_space<vmem>>, %arg5: memref<32x32xf32, #tpu.memory_space<vmem>>, %arg6: memref<1x32xf32, #tpu.memory_space<vmem>>, %arg7: memref<32x32xf32, #tpu.memory_space<vmem>>, %arg8: memref<1x32xf32, #tpu.memory_space<vmem>>, %arg9: memref<32x32xf32, #tpu.memory_space<vmem>>, %arg10: memref<1x32xf32, #tpu.memory_space<vmem>>, %arg11: memref<1x32xf32, #tpu.memory_space<vmem>>, %arg12: memref<1x32xf32, #tpu.memory_space<vmem>>, %arg13: memref<32x64xf32, #tpu.memory_space<vmem>>, %arg14: memref<1x64xf32, #tpu.memory_space<vmem>>, %arg15: memref<64x32xf32, #tpu.memory_space<vmem>>, %arg16: memref<1x32xf32, #tpu.memory_space<vmem>>, %arg17: memref<1x32xf32, #tpu.memory_space<vmem>>, %arg18: memref<1x32xf32, #tpu.memory_space<vmem>>, %arg19: memref<16x32xf32, #tpu.memory_space<vmem>>) attributes {dimension_semantics = [#tpu.dimension_semantics<arbitrary>], iteration_bounds = array<i64: 1>, scalar_prefetch = 0 : i64, scratch_operands = 0 : i64, tpu.core_type = #tpu.core_type<tc>, window_params = [{pipeline_mode = #tpu.pipeline_mode<synchronous>, transform_indices = @transform_0, window_bounds = array<i64: 16, 32>}, {pipeline_mode = #tpu.pipeline_mode<synchronous>, transform_indices = @transform_1, window_bounds = array<i64: 16, 16>}, {pipeline_mode = #tpu.pipeline_mode<synchronous>, transform_indices = @transform_2, window_bounds = array<i64: 32, 32>}, {pipeline_mode = #tpu.pipeline_mode<synchronous>, transform_indices = @transform_3, window_bounds = array<i64: 1, 32>}, {pipeline_mode = #tpu.pipeline_mode<synchronous>, transform_indices = @transform_4, window_bounds = array<i64: 32, 32>}, {pipeline_mode = #tpu.pipeline_mode<synchronous>, transform_indices = @transform_5, window_bounds = array<i64: 1, 32>}, {pipeline_mode = #tpu.pipeline_mode<synchronous>, transform_indices = @transform_6, window_bounds = array<i64: 32, 32>}, {pipeline_mode = #tpu.pipeline_mode<synchronous>, transform_indices = @transform_7, window_bounds = array<i64: 1, 32>}, {pipeline_mode = #tpu.pipeline_mode<synchronous>, transform_indices = @transform_8, window_bounds = array<i64: 32, 32>}, {pipeline_mode = #tpu.pipeline_mode<synchronous>, transform_indices = @transform_9, window_bounds = array<i64: 1, 32>}, {pipeline_mode = #tpu.pipeline_mode<synchronous>, transform_indices = @transform_10, window_bounds = array<i64: 1, 32>}, {pipeline_mode = #tpu.pipeline_mode<synchronous>, transform_indices = @transform_11, window_bounds = array<i64: 1, 32>}, {pipeline_mode = #tpu.pipeline_mode<synchronous>, transform_indices = @transform_12, window_bounds = array<i64: 32, 64>}, {pipeline_mode = #tpu.pipeline_mode<synchronous>, transform_indices = @transform_13, window_bounds = array<i64: 1, 64>}, {pipeline_mode = #tpu.pipeline_mode<synchronous>, transform_indices = @transform_14, window_bounds = array<i64: 64, 32>}, {pipeline_mode = #tpu.pipeline_mode<synchronous>, transform_indices = @transform_15, window_bounds = array<i64: 1, 32>}, {pipeline_mode = #tpu.pipeline_mode<synchronous>, transform_indices = @transform_16, window_bounds = array<i64: 1, 32>}, {pipeline_mode = #tpu.pipeline_mode<synchronous>, transform_indices = @transform_17, window_bounds = array<i64: 1, 32>}, {pipeline_mode = #tpu.pipeline_mode<synchronous>, transform_indices = @transform_18, window_bounds = array<i64: 16, 32>}]} {
    %c0 = arith.constant 0 : index
    %c0_0 = arith.constant 0 : index
    %0 = vector.load %arg1[%c0, %c0_0] : memref<16x32xf32, #tpu.memory_space<vmem>>, vector<16x32xf32>
    %c0_1 = arith.constant 0 : index
    %c0_2 = arith.constant 0 : index
    %1 = vector.load %arg3[%c0_1, %c0_2] : memref<32x32xf32, #tpu.memory_space<vmem>>, vector<32x32xf32>
    %cst = arith.constant dense<0.000000e+00> : vector<16x32xf32>
    %2 = tpu.matmul %0, %1, %cst {dimension_numbers = #tpu.dot_dimension_numbers<[1], [0], [0], [1], [0, 0, 1, 1], [], []>} : vector<16x32xf32>, vector<32x32xf32>, vector<16x32xf32> -> vector<16x32xf32>
    %c0_3 = arith.constant 0 : index
    %c0_4 = arith.constant 0 : index
    %3 = vector.load %arg4[%c0_3, %c0_4] : memref<1x32xf32, #tpu.memory_space<vmem>>, vector<1x32xf32>
    %4 = vector.broadcast %3 : vector<1x32xf32> to vector<16x32xf32>
    %5 = arith.addf %2, %4 : vector<16x32xf32>
    %c0_5 = arith.constant 0 : index
    %c0_6 = arith.constant 0 : index
    %6 = vector.load %arg5[%c0_5, %c0_6] : memref<32x32xf32, #tpu.memory_space<vmem>>, vector<32x32xf32>
    %cst_7 = arith.constant dense<0.000000e+00> : vector<16x32xf32>
    %7 = tpu.matmul %0, %6, %cst_7 {dimension_numbers = #tpu.dot_dimension_numbers<[1], [0], [0], [1], [0, 0, 1, 1], [], []>} : vector<16x32xf32>, vector<32x32xf32>, vector<16x32xf32> -> vector<16x32xf32>
    %c0_8 = arith.constant 0 : index
    %c0_9 = arith.constant 0 : index
    %8 = vector.load %arg6[%c0_8, %c0_9] : memref<1x32xf32, #tpu.memory_space<vmem>>, vector<1x32xf32>
    %9 = vector.broadcast %8 : vector<1x32xf32> to vector<16x32xf32>
    %10 = arith.addf %7, %9 : vector<16x32xf32>
    %c0_10 = arith.constant 0 : index
    %c0_11 = arith.constant 0 : index
    %11 = vector.load %arg7[%c0_10, %c0_11] : memref<32x32xf32, #tpu.memory_space<vmem>>, vector<32x32xf32>
    %cst_12 = arith.constant dense<0.000000e+00> : vector<16x32xf32>
    %12 = tpu.matmul %0, %11, %cst_12 {dimension_numbers = #tpu.dot_dimension_numbers<[1], [0], [0], [1], [0, 0, 1, 1], [], []>} : vector<16x32xf32>, vector<32x32xf32>, vector<16x32xf32> -> vector<16x32xf32>
    %c0_13 = arith.constant 0 : index
    %c0_14 = arith.constant 0 : index
    %13 = vector.load %arg8[%c0_13, %c0_14] : memref<1x32xf32, #tpu.memory_space<vmem>>, vector<1x32xf32>
    %14 = vector.broadcast %13 : vector<1x32xf32> to vector<16x32xf32>
    %15 = arith.addf %12, %14 : vector<16x32xf32>
    %c0_15 = arith.constant 0 : index
    %c0_16 = arith.constant 0 : index
    %16 = vector.load %arg2[%c0_15, %c0_16] : memref<16x16xf32, #tpu.memory_space<vmem>>, vector<16x16xf32>
    %17 = tpu.iota {dimensions = array<i32: 1>} : vector<1x32xi32>
    %cst_17 = arith.constant 0.000000e+00 : f32
    %18 = vector.broadcast %cst_17 : f32 to vector<16x32xf32>
    %c0_i32 = arith.constant 0 : i32
    %19 = vector.broadcast %c0_i32 : i32 to vector<1x32xi32>
    %20 = arith.cmpi sge, %17, %19 : vector<1x32xi32>
    %c8_i32 = arith.constant 8 : i32
    %21 = vector.broadcast %c8_i32 : i32 to vector<1x32xi32>
    %22 = arith.cmpi slt, %17, %21 : vector<1x32xi32>
    %23 = arith.andi %20, %22 : vector<1x32xi1>
    %24 = arith.extui %23 : vector<1x32xi1> to vector<1x32xi32>
    %25 = arith.sitofp %24 : vector<1x32xi32> to vector<1x32xf32>
    %26 = vector.broadcast %25 : vector<1x32xf32> to vector<16x32xf32>
    %27 = arith.mulf %5, %26 : vector<16x32xf32>
    %cst_18 = arith.constant dense<0.000000e+00> : vector<16x16xf32>
    %28 = tpu.matmul %27, %10, %cst_18 {dimension_numbers = #tpu.dot_dimension_numbers<[1], [1], [0], [0], [0, 0, 1, 0], [], []>} : vector<16x32xf32>, vector<16x32xf32>, vector<16x16xf32> -> vector<16x16xf32>
    %cst_19 = arith.constant 0.353553385 : f32
    %29 = vector.broadcast %cst_19 : f32 to vector<16x16xf32>
    %30 = arith.mulf %28, %29 : vector<16x16xf32>
    %31 = arith.addf %30, %16 : vector<16x16xf32>
    %cst_20 = arith.constant dense<0xFF800000> : vector<16xf32>
    %32 = vector.multi_reduction <maximumf>, %31, %cst_20 [1] : vector<16x16xf32> to vector<16xf32>
    %33 = vector.shape_cast %32 : vector<16xf32> to vector<16x1xf32>
    %34 = vector.broadcast %33 : vector<16x1xf32> to vector<16x16xf32>
    %35 = arith.subf %31, %34 : vector<16x16xf32>
    %36 = math.exp %35 : vector<16x16xf32>
    %cst_21 = arith.constant dense<0.000000e+00> : vector<16xf32>
    %37 = vector.multi_reduction <add>, %36, %cst_21 [1] : vector<16x16xf32> to vector<16xf32>
    %38 = vector.shape_cast %37 : vector<16xf32> to vector<16x1xf32>
    %39 = tpu.reciprocal %38 {approx = true} : vector<16x1xf32> -> vector<16x1xf32>
    %40 = vector.broadcast %39 : vector<16x1xf32> to vector<16x16xf32>
    %41 = arith.mulf %36, %40 : vector<16x16xf32>
    %42 = vector.broadcast %25 : vector<1x32xf32> to vector<16x32xf32>
    %43 = arith.mulf %15, %42 : vector<16x32xf32>
    %cst_22 = arith.constant dense<0.000000e+00> : vector<16x32xf32>
    %44 = tpu.matmul %41, %43, %cst_22 {dimension_numbers = #tpu.dot_dimension_numbers<[1], [0], [0], [1], [0, 0, 1, 1], [], []>} : vector<16x16xf32>, vector<16x32xf32>, vector<16x32xf32> -> vector<16x32xf32>
    %45 = arith.addf %18, %44 : vector<16x32xf32>
    %c8_i32_23 = arith.constant 8 : i32
    %46 = vector.broadcast %c8_i32_23 : i32 to vector<1x32xi32>
    %47 = arith.cmpi sge, %17, %46 : vector<1x32xi32>
    %c16_i32 = arith.constant 16 : i32
    %48 = vector.broadcast %c16_i32 : i32 to vector<1x32xi32>
    %49 = arith.cmpi slt, %17, %48 : vector<1x32xi32>
    %50 = arith.andi %47, %49 : vector<1x32xi1>
    %51 = arith.extui %50 : vector<1x32xi1> to vector<1x32xi32>
    %52 = arith.sitofp %51 : vector<1x32xi32> to vector<1x32xf32>
    %53 = vector.broadcast %52 : vector<1x32xf32> to vector<16x32xf32>
    %54 = arith.mulf %5, %53 : vector<16x32xf32>
    %cst_24 = arith.constant dense<0.000000e+00> : vector<16x16xf32>
    %55 = tpu.matmul %54, %10, %cst_24 {dimension_numbers = #tpu.dot_dimension_numbers<[1], [1], [0], [0], [0, 0, 1, 0], [], []>} : vector<16x32xf32>, vector<16x32xf32>, vector<16x16xf32> -> vector<16x16xf32>
    %cst_25 = arith.constant 0.353553385 : f32
    %56 = vector.broadcast %cst_25 : f32 to vector<16x16xf32>
    %57 = arith.mulf %55, %56 : vector<16x16xf32>
    %58 = arith.addf %57, %16 : vector<16x16xf32>
    %cst_26 = arith.constant dense<0xFF800000> : vector<16xf32>
    %59 = vector.multi_reduction <maximumf>, %58, %cst_26 [1] : vector<16x16xf32> to vector<16xf32>
    %60 = vector.shape_cast %59 : vector<16xf32> to vector<16x1xf32>
    %61 = vector.broadcast %60 : vector<16x1xf32> to vector<16x16xf32>
    %62 = arith.subf %58, %61 : vector<16x16xf32>
    %63 = math.exp %62 : vector<16x16xf32>
    %cst_27 = arith.constant dense<0.000000e+00> : vector<16xf32>
    %64 = vector.multi_reduction <add>, %63, %cst_27 [1] : vector<16x16xf32> to vector<16xf32>
    %65 = vector.shape_cast %64 : vector<16xf32> to vector<16x1xf32>
    %66 = tpu.reciprocal %65 {approx = true} : vector<16x1xf32> -> vector<16x1xf32>
    %67 = vector.broadcast %66 : vector<16x1xf32> to vector<16x16xf32>
    %68 = arith.mulf %63, %67 : vector<16x16xf32>
    %69 = vector.broadcast %52 : vector<1x32xf32> to vector<16x32xf32>
    %70 = arith.mulf %15, %69 : vector<16x32xf32>
    %cst_28 = arith.constant dense<0.000000e+00> : vector<16x32xf32>
    %71 = tpu.matmul %68, %70, %cst_28 {dimension_numbers = #tpu.dot_dimension_numbers<[1], [0], [0], [1], [0, 0, 1, 1], [], []>} : vector<16x16xf32>, vector<16x32xf32>, vector<16x32xf32> -> vector<16x32xf32>
    %72 = arith.addf %45, %71 : vector<16x32xf32>
    %c16_i32_29 = arith.constant 16 : i32
    %73 = vector.broadcast %c16_i32_29 : i32 to vector<1x32xi32>
    %74 = arith.cmpi sge, %17, %73 : vector<1x32xi32>
    %c24_i32 = arith.constant 24 : i32
    %75 = vector.broadcast %c24_i32 : i32 to vector<1x32xi32>
    %76 = arith.cmpi slt, %17, %75 : vector<1x32xi32>
    %77 = arith.andi %74, %76 : vector<1x32xi1>
    %78 = arith.extui %77 : vector<1x32xi1> to vector<1x32xi32>
    %79 = arith.sitofp %78 : vector<1x32xi32> to vector<1x32xf32>
    %80 = vector.broadcast %79 : vector<1x32xf32> to vector<16x32xf32>
    %81 = arith.mulf %5, %80 : vector<16x32xf32>
    %cst_30 = arith.constant dense<0.000000e+00> : vector<16x16xf32>
    %82 = tpu.matmul %81, %10, %cst_30 {dimension_numbers = #tpu.dot_dimension_numbers<[1], [1], [0], [0], [0, 0, 1, 0], [], []>} : vector<16x32xf32>, vector<16x32xf32>, vector<16x16xf32> -> vector<16x16xf32>
    %cst_31 = arith.constant 0.353553385 : f32
    %83 = vector.broadcast %cst_31 : f32 to vector<16x16xf32>
    %84 = arith.mulf %82, %83 : vector<16x16xf32>
    %85 = arith.addf %84, %16 : vector<16x16xf32>
    %cst_32 = arith.constant dense<0xFF800000> : vector<16xf32>
    %86 = vector.multi_reduction <maximumf>, %85, %cst_32 [1] : vector<16x16xf32> to vector<16xf32>
    %87 = vector.shape_cast %86 : vector<16xf32> to vector<16x1xf32>
    %88 = vector.broadcast %87 : vector<16x1xf32> to vector<16x16xf32>
    %89 = arith.subf %85, %88 : vector<16x16xf32>
    %90 = math.exp %89 : vector<16x16xf32>
    %cst_33 = arith.constant dense<0.000000e+00> : vector<16xf32>
    %91 = vector.multi_reduction <add>, %90, %cst_33 [1] : vector<16x16xf32> to vector<16xf32>
    %92 = vector.shape_cast %91 : vector<16xf32> to vector<16x1xf32>
    %93 = tpu.reciprocal %92 {approx = true} : vector<16x1xf32> -> vector<16x1xf32>
    %94 = vector.broadcast %93 : vector<16x1xf32> to vector<16x16xf32>
    %95 = arith.mulf %90, %94 : vector<16x16xf32>
    %96 = vector.broadcast %79 : vector<1x32xf32> to vector<16x32xf32>
    %97 = arith.mulf %15, %96 : vector<16x32xf32>
    %cst_34 = arith.constant dense<0.000000e+00> : vector<16x32xf32>
    %98 = tpu.matmul %95, %97, %cst_34 {dimension_numbers = #tpu.dot_dimension_numbers<[1], [0], [0], [1], [0, 0, 1, 1], [], []>} : vector<16x16xf32>, vector<16x32xf32>, vector<16x32xf32> -> vector<16x32xf32>
    %99 = arith.addf %72, %98 : vector<16x32xf32>
    %c24_i32_35 = arith.constant 24 : i32
    %100 = vector.broadcast %c24_i32_35 : i32 to vector<1x32xi32>
    %101 = arith.cmpi sge, %17, %100 : vector<1x32xi32>
    %c32_i32 = arith.constant 32 : i32
    %102 = vector.broadcast %c32_i32 : i32 to vector<1x32xi32>
    %103 = arith.cmpi slt, %17, %102 : vector<1x32xi32>
    %104 = arith.andi %101, %103 : vector<1x32xi1>
    %105 = arith.extui %104 : vector<1x32xi1> to vector<1x32xi32>
    %106 = arith.sitofp %105 : vector<1x32xi32> to vector<1x32xf32>
    %107 = vector.broadcast %106 : vector<1x32xf32> to vector<16x32xf32>
    %108 = arith.mulf %5, %107 : vector<16x32xf32>
    %cst_36 = arith.constant dense<0.000000e+00> : vector<16x16xf32>
    %109 = tpu.matmul %108, %10, %cst_36 {dimension_numbers = #tpu.dot_dimension_numbers<[1], [1], [0], [0], [0, 0, 1, 0], [], []>} : vector<16x32xf32>, vector<16x32xf32>, vector<16x16xf32> -> vector<16x16xf32>
    %cst_37 = arith.constant 0.353553385 : f32
    %110 = vector.broadcast %cst_37 : f32 to vector<16x16xf32>
    %111 = arith.mulf %109, %110 : vector<16x16xf32>
    %112 = arith.addf %111, %16 : vector<16x16xf32>
    %cst_38 = arith.constant dense<0xFF800000> : vector<16xf32>
    %113 = vector.multi_reduction <maximumf>, %112, %cst_38 [1] : vector<16x16xf32> to vector<16xf32>
    %114 = vector.shape_cast %113 : vector<16xf32> to vector<16x1xf32>
    %115 = vector.broadcast %114 : vector<16x1xf32> to vector<16x16xf32>
    %116 = arith.subf %112, %115 : vector<16x16xf32>
    %117 = math.exp %116 : vector<16x16xf32>
    %cst_39 = arith.constant dense<0.000000e+00> : vector<16xf32>
    %118 = vector.multi_reduction <add>, %117, %cst_39 [1] : vector<16x16xf32> to vector<16xf32>
    %119 = vector.shape_cast %118 : vector<16xf32> to vector<16x1xf32>
    %120 = tpu.reciprocal %119 {approx = true} : vector<16x1xf32> -> vector<16x1xf32>
    %121 = vector.broadcast %120 : vector<16x1xf32> to vector<16x16xf32>
    %122 = arith.mulf %117, %121 : vector<16x16xf32>
    %123 = vector.broadcast %106 : vector<1x32xf32> to vector<16x32xf32>
    %124 = arith.mulf %15, %123 : vector<16x32xf32>
    %cst_40 = arith.constant dense<0.000000e+00> : vector<16x32xf32>
    %125 = tpu.matmul %122, %124, %cst_40 {dimension_numbers = #tpu.dot_dimension_numbers<[1], [0], [0], [1], [0, 0, 1, 1], [], []>} : vector<16x16xf32>, vector<16x32xf32>, vector<16x32xf32> -> vector<16x32xf32>
    %126 = arith.addf %99, %125 : vector<16x32xf32>
    %c0_41 = arith.constant 0 : index
    %c0_42 = arith.constant 0 : index
    %127 = vector.load %arg9[%c0_41, %c0_42] : memref<32x32xf32, #tpu.memory_space<vmem>>, vector<32x32xf32>
    %cst_43 = arith.constant dense<0.000000e+00> : vector<16x32xf32>
    %128 = tpu.matmul %126, %127, %cst_43 {dimension_numbers = #tpu.dot_dimension_numbers<[1], [0], [0], [1], [0, 0, 1, 1], [], []>} : vector<16x32xf32>, vector<32x32xf32>, vector<16x32xf32> -> vector<16x32xf32>
    %c0_44 = arith.constant 0 : index
    %c0_45 = arith.constant 0 : index
    %129 = vector.load %arg10[%c0_44, %c0_45] : memref<1x32xf32, #tpu.memory_space<vmem>>, vector<1x32xf32>
    %130 = vector.broadcast %129 : vector<1x32xf32> to vector<16x32xf32>
    %131 = arith.addf %128, %130 : vector<16x32xf32>
    %132 = arith.addf %131, %0 : vector<16x32xf32>
    %c0_46 = arith.constant 0 : index
    %c0_47 = arith.constant 0 : index
    %133 = vector.load %arg11[%c0_46, %c0_47] : memref<1x32xf32, #tpu.memory_space<vmem>>, vector<1x32xf32>
    %c0_48 = arith.constant 0 : index
    %c0_49 = arith.constant 0 : index
    %134 = vector.load %arg12[%c0_48, %c0_49] : memref<1x32xf32, #tpu.memory_space<vmem>>, vector<1x32xf32>
    %cst_50 = arith.constant dense<0.000000e+00> : vector<16xf32>
    %135 = vector.multi_reduction <add>, %132, %cst_50 [1] : vector<16x32xf32> to vector<16xf32>
    %136 = vector.shape_cast %135 : vector<16xf32> to vector<16x1xf32>
    %cst_51 = arith.constant 3.200000e+01 : f32
    %137 = vector.broadcast %cst_51 : f32 to vector<16x1xf32>
    %138 = arith.divf %136, %137 : vector<16x1xf32>
    %139 = vector.broadcast %138 : vector<16x1xf32> to vector<16x32xf32>
    %140 = arith.subf %132, %139 : vector<16x32xf32>
    %141 = arith.mulf %140, %140 : vector<16x32xf32>
    %cst_52 = arith.constant dense<0.000000e+00> : vector<16xf32>
    %142 = vector.multi_reduction <add>, %141, %cst_52 [1] : vector<16x32xf32> to vector<16xf32>
    %143 = vector.shape_cast %142 : vector<16xf32> to vector<16x1xf32>
    %cst_53 = arith.constant 3.200000e+01 : f32
    %144 = vector.broadcast %cst_53 : f32 to vector<16x1xf32>
    %145 = arith.divf %143, %144 : vector<16x1xf32>
    %146 = vector.broadcast %138 : vector<16x1xf32> to vector<16x32xf32>
    %147 = arith.subf %132, %146 : vector<16x32xf32>
    %cst_54 = arith.constant 9.99999996E-13 : f32
    %148 = vector.broadcast %cst_54 : f32 to vector<16x1xf32>
    %149 = arith.addf %145, %148 : vector<16x1xf32>
    %150 = math.rsqrt %149 : vector<16x1xf32>
    %151 = vector.broadcast %150 : vector<16x1xf32> to vector<16x32xf32>
    %152 = arith.mulf %147, %151 : vector<16x32xf32>
    %153 = vector.broadcast %133 : vector<1x32xf32> to vector<16x32xf32>
    %154 = arith.mulf %152, %153 : vector<16x32xf32>
    %155 = vector.broadcast %134 : vector<1x32xf32> to vector<16x32xf32>
    %156 = arith.addf %154, %155 : vector<16x32xf32>
    %c0_55 = arith.constant 0 : index
    %c0_56 = arith.constant 0 : index
    %157 = vector.load %arg13[%c0_55, %c0_56] : memref<32x64xf32, #tpu.memory_space<vmem>>, vector<32x64xf32>
    %cst_57 = arith.constant dense<0.000000e+00> : vector<16x64xf32>
    %158 = tpu.matmul %156, %157, %cst_57 {dimension_numbers = #tpu.dot_dimension_numbers<[1], [0], [0], [1], [0, 0, 1, 1], [], []>} : vector<16x32xf32>, vector<32x64xf32>, vector<16x64xf32> -> vector<16x64xf32>
    %c0_58 = arith.constant 0 : index
    %c0_59 = arith.constant 0 : index
    %159 = vector.load %arg14[%c0_58, %c0_59] : memref<1x64xf32, #tpu.memory_space<vmem>>, vector<1x64xf32>
    %160 = vector.broadcast %159 : vector<1x64xf32> to vector<16x64xf32>
    %161 = arith.addf %158, %160 : vector<16x64xf32>
    %162 = arith.mulf %161, %161 : vector<16x64xf32>
    %163 = arith.mulf %161, %162 : vector<16x64xf32>
    %cst_60 = arith.constant 4.471500e-02 : f32
    %164 = vector.broadcast %cst_60 : f32 to vector<16x64xf32>
    %165 = arith.mulf %164, %163 : vector<16x64xf32>
    %166 = arith.addf %161, %165 : vector<16x64xf32>
    %cst_61 = arith.constant 0.797884583 : f32
    %167 = vector.broadcast %cst_61 : f32 to vector<16x64xf32>
    %168 = arith.mulf %167, %166 : vector<16x64xf32>
    %169 = math.tanh %168 : vector<16x64xf32>
    %cst_62 = arith.constant 1.000000e+00 : f32
    %170 = vector.broadcast %cst_62 : f32 to vector<16x64xf32>
    %171 = arith.addf %170, %169 : vector<16x64xf32>
    %cst_63 = arith.constant 5.000000e-01 : f32
    %172 = vector.broadcast %cst_63 : f32 to vector<16x64xf32>
    %173 = arith.mulf %172, %171 : vector<16x64xf32>
    %174 = arith.mulf %161, %173 : vector<16x64xf32>
    %c0_64 = arith.constant 0 : index
    %c0_65 = arith.constant 0 : index
    %175 = vector.load %arg15[%c0_64, %c0_65] : memref<64x32xf32, #tpu.memory_space<vmem>>, vector<64x32xf32>
    %cst_66 = arith.constant dense<0.000000e+00> : vector<16x32xf32>
    %176 = tpu.matmul %174, %175, %cst_66 {dimension_numbers = #tpu.dot_dimension_numbers<[1], [0], [0], [1], [0, 0, 1, 1], [], []>} : vector<16x64xf32>, vector<64x32xf32>, vector<16x32xf32> -> vector<16x32xf32>
    %c0_67 = arith.constant 0 : index
    %c0_68 = arith.constant 0 : index
    %177 = vector.load %arg16[%c0_67, %c0_68] : memref<1x32xf32, #tpu.memory_space<vmem>>, vector<1x32xf32>
    %178 = vector.broadcast %177 : vector<1x32xf32> to vector<16x32xf32>
    %179 = arith.addf %176, %178 : vector<16x32xf32>
    %180 = arith.addf %179, %156 : vector<16x32xf32>
    %c0_69 = arith.constant 0 : index
    %c0_70 = arith.constant 0 : index
    %181 = vector.load %arg17[%c0_69, %c0_70] : memref<1x32xf32, #tpu.memory_space<vmem>>, vector<1x32xf32>
    %c0_71 = arith.constant 0 : index
    %c0_72 = arith.constant 0 : index
    %182 = vector.load %arg18[%c0_71, %c0_72] : memref<1x32xf32, #tpu.memory_space<vmem>>, vector<1x32xf32>
    %cst_73 = arith.constant dense<0.000000e+00> : vector<16xf32>
    %183 = vector.multi_reduction <add>, %180, %cst_73 [1] : vector<16x32xf32> to vector<16xf32>
    %184 = vector.shape_cast %183 : vector<16xf32> to vector<16x1xf32>
    %cst_74 = arith.constant 3.200000e+01 : f32
    %185 = vector.broadcast %cst_74 : f32 to vector<16x1xf32>
    %186 = arith.divf %184, %185 : vector<16x1xf32>
    %187 = vector.broadcast %186 : vector<16x1xf32> to vector<16x32xf32>
    %188 = arith.subf %180, %187 : vector<16x32xf32>
    %189 = arith.mulf %188, %188 : vector<16x32xf32>
    %cst_75 = arith.constant dense<0.000000e+00> : vector<16xf32>
    %190 = vector.multi_reduction <add>, %189, %cst_75 [1] : vector<16x32xf32> to vector<16xf32>
    %191 = vector.shape_cast %190 : vector<16xf32> to vector<16x1xf32>
    %cst_76 = arith.constant 3.200000e+01 : f32
    %192 = vector.broadcast %cst_76 : f32 to vector<16x1xf32>
    %193 = arith.divf %191, %192 : vector<16x1xf32>
    %194 = vector.broadcast %186 : vector<16x1xf32> to vector<16x32xf32>
    %195 = arith.subf %180, %194 : vector<16x32xf32>
    %cst_77 = arith.constant 9.99999996E-13 : f32
    %196 = vector.broadcast %cst_77 : f32 to vector<16x1xf32>
    %197 = arith.addf %193, %196 : vector<16x1xf32>
    %198 = math.rsqrt %197 : vector<16x1xf32>
    %199 = vector.broadcast %198 : vector<16x1xf32> to vector<16x32xf32>
    %200 = arith.mulf %195, %199 : vector<16x32xf32>
    %201 = vector.broadcast %181 : vector<1x32xf32> to vector<16x32xf32>
    %202 = arith.mulf %200, %201 : vector<16x32xf32>
    %203 = vector.broadcast %182 : vector<1x32xf32> to vector<16x32xf32>
    %204 = arith.addf %202, %203 : vector<16x32xf32>
    %c0_78 = arith.constant 0 : index
    %c0_79 = arith.constant 0 : index
    %205 = vector.load %arg19[%c0_78, %c0_79] : memref<16x32xf32, #tpu.memory_space<vmem>>, vector<16x32xf32>
    tpu.vector_store %arg19[%c0_78, %c0_79], %204 {strides = array<i32>} : memref<16x32xf32, #tpu.memory_space<vmem>>, vector<16x32xf32>,
    return
  }
  func.func @transform_0(%arg0: i32) -> (i32, i32) {
    %c0_i32 = arith.constant 0 : i32
    %c0_i32_0 = arith.constant 0 : i32
    %c0_i32_1 = arith.constant 0 : i32
    return %c0_i32, %c0_i32_0 : i32, i32
  }
  func.func @transform_1(%arg0: i32) -> (i32, i32) {
    %c0_i32 = arith.constant 0 : i32
    %c0_i32_0 = arith.constant 0 : i32
    %c0_i32_1 = arith.constant 0 : i32
    return %c0_i32, %c0_i32_0 : i32, i32
  }
  func.func @transform_2(%arg0: i32) -> (i32, i32) {
    %c0_i32 = arith.constant 0 : i32
    %c0_i32_0 = arith.constant 0 : i32
    %c0_i32_1 = arith.constant 0 : i32
    return %c0_i32, %c0_i32_0 : i32, i32
  }
  func.func @transform_3(%arg0: i32) -> (i32, i32) {
    %c0_i32 = arith.constant 0 : i32
    %c0_i32_0 = arith.constant 0 : i32
    %c0_i32_1 = arith.constant 0 : i32
    return %c0_i32, %c0_i32_0 : i32, i32
  }
  func.func @transform_4(%arg0: i32) -> (i32, i32) {
    %c0_i32 = arith.constant 0 : i32
    %c0_i32_0 = arith.constant 0 : i32
    %c0_i32_1 = arith.constant 0 : i32
    return %c0_i32, %c0_i32_0 : i32, i32
  }
  func.func @transform_5(%arg0: i32) -> (i32, i32) {
    %c0_i32 = arith.constant 0 : i32
    %c0_i32_0 = arith.constant 0 : i32
    %c0_i32_1 = arith.constant 0 : i32
    return %c0_i32, %c0_i32_0 : i32, i32
  }
  func.func @transform_6(%arg0: i32) -> (i32, i32) {
    %c0_i32 = arith.constant 0 : i32
    %c0_i32_0 = arith.constant 0 : i32
    %c0_i32_1 = arith.constant 0 : i32
    return %c0_i32, %c0_i32_0 : i32, i32
  }
  func.func @transform_7(%arg0: i32) -> (i32, i32) {
    %c0_i32 = arith.constant 0 : i32
    %c0_i32_0 = arith.constant 0 : i32
    %c0_i32_1 = arith.constant 0 : i32
    return %c0_i32, %c0_i32_0 : i32, i32
  }
  func.func @transform_8(%arg0: i32) -> (i32, i32) {
    %c0_i32 = arith.constant 0 : i32
    %c0_i32_0 = arith.constant 0 : i32
    %c0_i32_1 = arith.constant 0 : i32
    return %c0_i32, %c0_i32_0 : i32, i32
  }
  func.func @transform_9(%arg0: i32) -> (i32, i32) {
    %c0_i32 = arith.constant 0 : i32
    %c0_i32_0 = arith.constant 0 : i32
    %c0_i32_1 = arith.constant 0 : i32
    return %c0_i32, %c0_i32_0 : i32, i32
  }
  func.func @transform_10(%arg0: i32) -> (i32, i32) {
    %c0_i32 = arith.constant 0 : i32
    %c0_i32_0 = arith.constant 0 : i32
    %c0_i32_1 = arith.constant 0 : i32
    return %c0_i32, %c0_i32_0 : i32, i32
  }
  func.func @transform_11(%arg0: i32) -> (i32, i32) {
    %c0_i32 = arith.constant 0 : i32
    %c0_i32_0 = arith.constant 0 : i32
    %c0_i32_1 = arith.constant 0 : i32
    return %c0_i32, %c0_i32_0 : i32, i32
  }
  func.func @transform_12(%arg0: i32) -> (i32, i32) {
    %c0_i32 = arith.constant 0 : i32
    %c0_i32_0 = arith.constant 0 : i32
    %c0_i32_1 = arith.constant 0 : i32
    return %c0_i32, %c0_i32_0 : i32, i32
  }
  func.func @transform_13(%arg0: i32) -> (i32, i32) {
    %c0_i32 = arith.constant 0 : i32
    %c0_i32_0 = arith.constant 0 : i32
    %c0_i32_1 = arith.constant 0 : i32
    return %c0_i32, %c0_i32_0 : i32, i32
  }
  func.func @transform_14(%arg0: i32) -> (i32, i32) {
    %c0_i32 = arith.constant 0 : i32
    %c0_i32_0 = arith.constant 0 : i32
    %c0_i32_1 = arith.constant 0 : i32
    return %c0_i32, %c0_i32_0 : i32, i32
  }
  func.func @transform_15(%arg0: i32) -> (i32, i32) {
    %c0_i32 = arith.constant 0 : i32
    %c0_i32_0 = arith.constant 0 : i32
    %c0_i32_1 = arith.constant 0 : i32
    return %c0_i32, %c0_i32_0 : i32, i32
  }
  func.func @transform_16(%arg0: i32) -> (i32, i32) {
    %c0_i32 = arith.constant 0 : i32
    %c0_i32_0 = arith.constant 0 : i32
    %c0_i32_1 = arith.constant 0 : i32
    return %c0_i32, %c0_i32_0 : i32, i32
  }
  func.func @transform_17(%arg0: i32) -> (i32, i32) {
    %c0_i32 = arith.constant 0 : i32
    %c0_i32_0 = arith.constant 0 : i32
    %c0_i32_1 = arith.constant 0 : i32
    return %c0_i32, %c0_i32_0 : i32, i32
  }
  func.func @transform_18(%arg0: i32) -> (i32, i32) {
    %c0_i32 = arith.constant 0 : i32
    %c0_i32_0 = arith.constant 0 : i32
    %c0_i32_1 = arith.constant 0 : i32
    return %c0_i32, %c0_i32_0 : i32, i32
  }
}

module attributes {stable_mosaic.version = 11 : i64} {
  func.func @_heads_kernel(%arg0: i32, %arg1: memref<8x16xf32, #tpu.memory_space<vmem>>, %arg2: memref<2x8xf32, #tpu.memory_space<vmem>>, %arg3: memref<2x32xf32, #tpu.memory_space<vmem>>, %arg4: memref<16x32xf32, #tpu.memory_space<vmem>>, %arg5: memref<1x32xf32, #tpu.memory_space<vmem>>, %arg6: memref<32x32xf32, #tpu.memory_space<vmem>>, %arg7: memref<1x32xf32, #tpu.memory_space<vmem>>, %arg8: memref<32x16xf32, #tpu.memory_space<vmem>>, %arg9: memref<1x16xf32, #tpu.memory_space<vmem>>, %arg10: memref<32x16xf32, #tpu.memory_space<vmem>>, %arg11: memref<1x16xf32, #tpu.memory_space<vmem>>, %arg12: memref<32x16xf32, #tpu.memory_space<vmem>>, %arg13: memref<32x16xf32, #tpu.memory_space<vmem>>, %arg14: memref<1x16xf32, #tpu.memory_space<vmem>>, %arg15: memref<1x16xf32, #tpu.memory_space<vmem>>, %arg16: memref<1x1xf32, #tpu.memory_space<vmem>>, %arg17: memref<2x1xf32, #tpu.memory_space<vmem>>, %arg18: memref<2x16xf32, #tpu.memory_space<vmem>>, %arg19: memref<2x16xf32, #tpu.memory_space<vmem>>) attributes {dimension_semantics = [#tpu.dimension_semantics<arbitrary>], iteration_bounds = array<i64: 1>, scalar_prefetch = 0 : i64, scratch_operands = 0 : i64, tpu.core_type = #tpu.core_type<tc>, window_params = [{pipeline_mode = #tpu.pipeline_mode<synchronous>, transform_indices = @transform_0, window_bounds = array<i64: 8, 16>}, {pipeline_mode = #tpu.pipeline_mode<synchronous>, transform_indices = @transform_1, window_bounds = array<i64: 2, 8>}, {pipeline_mode = #tpu.pipeline_mode<synchronous>, transform_indices = @transform_2, window_bounds = array<i64: 2, 32>}, {pipeline_mode = #tpu.pipeline_mode<synchronous>, transform_indices = @transform_3, window_bounds = array<i64: 16, 32>}, {pipeline_mode = #tpu.pipeline_mode<synchronous>, transform_indices = @transform_4, window_bounds = array<i64: 1, 32>}, {pipeline_mode = #tpu.pipeline_mode<synchronous>, transform_indices = @transform_5, window_bounds = array<i64: 32, 32>}, {pipeline_mode = #tpu.pipeline_mode<synchronous>, transform_indices = @transform_6, window_bounds = array<i64: 1, 32>}, {pipeline_mode = #tpu.pipeline_mode<synchronous>, transform_indices = @transform_7, window_bounds = array<i64: 32, 16>}, {pipeline_mode = #tpu.pipeline_mode<synchronous>, transform_indices = @transform_8, window_bounds = array<i64: 1, 16>}, {pipeline_mode = #tpu.pipeline_mode<synchronous>, transform_indices = @transform_9, window_bounds = array<i64: 32, 16>}, {pipeline_mode = #tpu.pipeline_mode<synchronous>, transform_indices = @transform_10, window_bounds = array<i64: 1, 16>}, {pipeline_mode = #tpu.pipeline_mode<synchronous>, transform_indices = @transform_11, window_bounds = array<i64: 32, 16>}, {pipeline_mode = #tpu.pipeline_mode<synchronous>, transform_indices = @transform_12, window_bounds = array<i64: 32, 16>}, {pipeline_mode = #tpu.pipeline_mode<synchronous>, transform_indices = @transform_13, window_bounds = array<i64: 1, 16>}, {pipeline_mode = #tpu.pipeline_mode<synchronous>, transform_indices = @transform_14, window_bounds = array<i64: 1, 16>}, {pipeline_mode = #tpu.pipeline_mode<synchronous>, transform_indices = @transform_15, window_bounds = array<i64: 1, 1>}, {pipeline_mode = #tpu.pipeline_mode<synchronous>, transform_indices = @transform_16, window_bounds = array<i64: 2, 1>}, {pipeline_mode = #tpu.pipeline_mode<synchronous>, transform_indices = @transform_17, window_bounds = array<i64: 2, 16>}, {pipeline_mode = #tpu.pipeline_mode<synchronous>, transform_indices = @transform_18, window_bounds = array<i64: 2, 16>}]} {
    %c0 = arith.constant 0 : index
    %c0_0 = arith.constant 0 : index
    %0 = vector.load %arg2[%c0, %c0_0] : memref<2x8xf32, #tpu.memory_space<vmem>>, vector<2x8xf32>
    %c0_1 = arith.constant 0 : index
    %c0_2 = arith.constant 0 : index
    %1 = vector.load %arg1[%c0_1, %c0_2] : memref<8x16xf32, #tpu.memory_space<vmem>>, vector<8x16xf32>
    %cst = arith.constant dense<0.000000e+00> : vector<2x16xf32>
    %2 = tpu.matmul %0, %1, %cst {dimension_numbers = #tpu.dot_dimension_numbers<[1], [0], [0], [1], [0, 0, 1, 1], [], []>} : vector<2x8xf32>, vector<8x16xf32>, vector<2x16xf32> -> vector<2x16xf32>
    %c0_3 = arith.constant 0 : index
    %c0_4 = arith.constant 0 : index
    %3 = vector.load %arg4[%c0_3, %c0_4] : memref<16x32xf32, #tpu.memory_space<vmem>>, vector<16x32xf32>
    %cst_5 = arith.constant dense<0.000000e+00> : vector<2x32xf32>
    %4 = tpu.matmul %2, %3, %cst_5 {dimension_numbers = #tpu.dot_dimension_numbers<[1], [0], [0], [1], [0, 0, 1, 1], [], []>} : vector<2x16xf32>, vector<16x32xf32>, vector<2x32xf32> -> vector<2x32xf32>
    %c0_6 = arith.constant 0 : index
    %c0_7 = arith.constant 0 : index
    %5 = vector.load %arg5[%c0_6, %c0_7] : memref<1x32xf32, #tpu.memory_space<vmem>>, vector<1x32xf32>
    %6 = vector.broadcast %5 : vector<1x32xf32> to vector<2x32xf32>
    %7 = arith.addf %4, %6 : vector<2x32xf32>
    %c0_8 = arith.constant 0 : index
    %c0_9 = arith.constant 0 : index
    %8 = vector.load %arg3[%c0_8, %c0_9] : memref<2x32xf32, #tpu.memory_space<vmem>>, vector<2x32xf32>
    %c0_10 = arith.constant 0 : index
    %c0_11 = arith.constant 0 : index
    %9 = vector.load %arg6[%c0_10, %c0_11] : memref<32x32xf32, #tpu.memory_space<vmem>>, vector<32x32xf32>
    %cst_12 = arith.constant dense<0.000000e+00> : vector<2x32xf32>
    %10 = tpu.matmul %8, %9, %cst_12 {dimension_numbers = #tpu.dot_dimension_numbers<[1], [0], [0], [1], [0, 0, 1, 1], [], []>} : vector<2x32xf32>, vector<32x32xf32>, vector<2x32xf32> -> vector<2x32xf32>
    %c0_13 = arith.constant 0 : index
    %c0_14 = arith.constant 0 : index
    %11 = vector.load %arg7[%c0_13, %c0_14] : memref<1x32xf32, #tpu.memory_space<vmem>>, vector<1x32xf32>
    %12 = vector.broadcast %11 : vector<1x32xf32> to vector<2x32xf32>
    %13 = arith.addf %10, %12 : vector<2x32xf32>
    %14 = math.tanh %13 : vector<2x32xf32>
    %c0_15 = arith.constant 0 : index
    %c0_16 = arith.constant 0 : index
    %15 = vector.load %arg8[%c0_15, %c0_16] : memref<32x16xf32, #tpu.memory_space<vmem>>, vector<32x16xf32>
    %cst_17 = arith.constant dense<0.000000e+00> : vector<2x16xf32>
    %16 = tpu.matmul %7, %15, %cst_17 {dimension_numbers = #tpu.dot_dimension_numbers<[1], [0], [0], [1], [0, 0, 1, 1], [], []>} : vector<2x32xf32>, vector<32x16xf32>, vector<2x16xf32> -> vector<2x16xf32>
    %c0_18 = arith.constant 0 : index
    %c0_19 = arith.constant 0 : index
    %17 = vector.load %arg9[%c0_18, %c0_19] : memref<1x16xf32, #tpu.memory_space<vmem>>, vector<1x16xf32>
    %18 = vector.broadcast %17 : vector<1x16xf32> to vector<2x16xf32>
    %19 = arith.addf %16, %18 : vector<2x16xf32>
    %c0_20 = arith.constant 0 : index
    %c0_21 = arith.constant 0 : index
    %20 = vector.load %arg10[%c0_20, %c0_21] : memref<32x16xf32, #tpu.memory_space<vmem>>, vector<32x16xf32>
    %cst_22 = arith.constant dense<0.000000e+00> : vector<2x16xf32>
    %21 = tpu.matmul %14, %20, %cst_22 {dimension_numbers = #tpu.dot_dimension_numbers<[1], [0], [0], [1], [0, 0, 1, 1], [], []>} : vector<2x32xf32>, vector<32x16xf32>, vector<2x16xf32> -> vector<2x16xf32>
    %c0_23 = arith.constant 0 : index
    %c0_24 = arith.constant 0 : index
    %22 = vector.load %arg11[%c0_23, %c0_24] : memref<1x16xf32, #tpu.memory_space<vmem>>, vector<1x16xf32>
    %23 = vector.broadcast %22 : vector<1x16xf32> to vector<2x16xf32>
    %24 = arith.addf %21, %23 : vector<2x16xf32>
    %25 = arith.mulf %19, %19 : vector<2x16xf32>
    %cst_25 = arith.constant dense<0.000000e+00> : vector<2xf32>
    %26 = vector.multi_reduction <add>, %25, %cst_25 [1] : vector<2x16xf32> to vector<2xf32>
    %27 = vector.shape_cast %26 : vector<2xf32> to vector<2x1xf32>
    %28 = math.sqrt %27 : vector<2x1xf32>
    %cst_26 = arith.constant 9.99999996E-13 : f32
    %29 = vector.broadcast %cst_26 : f32 to vector<2x1xf32>
    %30 = arith.maximumf %28, %29 : vector<2x1xf32>
    %31 = vector.broadcast %30 : vector<2x1xf32> to vector<2x16xf32>
    %32 = arith.divf %19, %31 : vector<2x16xf32>
    %c0_27 = arith.constant 0 : index
    %c0_28 = arith.constant 0 : index
    %33 = vector.load %arg18[%c0_27, %c0_28] : memref<2x16xf32, #tpu.memory_space<vmem>>, vector<2x16xf32>
    tpu.vector_store %arg18[%c0_27, %c0_28], %32 {strides = array<i32>} : memref<2x16xf32, #tpu.memory_space<vmem>>, vector<2x16xf32>,
    %34 = arith.mulf %24, %24 : vector<2x16xf32>
    %cst_29 = arith.constant dense<0.000000e+00> : vector<2xf32>
    %35 = vector.multi_reduction <add>, %34, %cst_29 [1] : vector<2x16xf32> to vector<2xf32>
    %36 = vector.shape_cast %35 : vector<2xf32> to vector<2x1xf32>
    %37 = math.sqrt %36 : vector<2x1xf32>
    %cst_30 = arith.constant 9.99999996E-13 : f32
    %38 = vector.broadcast %cst_30 : f32 to vector<2x1xf32>
    %39 = arith.maximumf %37, %38 : vector<2x1xf32>
    %40 = vector.broadcast %39 : vector<2x1xf32> to vector<2x16xf32>
    %41 = arith.divf %24, %40 : vector<2x16xf32>
    %c0_31 = arith.constant 0 : index
    %c0_32 = arith.constant 0 : index
    %42 = vector.load %arg19[%c0_31, %c0_32] : memref<2x16xf32, #tpu.memory_space<vmem>>, vector<2x16xf32>
    tpu.vector_store %arg19[%c0_31, %c0_32], %41 {strides = array<i32>} : memref<2x16xf32, #tpu.memory_space<vmem>>, vector<2x16xf32>,
    %c0_33 = arith.constant 0 : index
    %c0_34 = arith.constant 0 : index
    %43 = vector.load %arg12[%c0_33, %c0_34] : memref<32x16xf32, #tpu.memory_space<vmem>>, vector<32x16xf32>
    %cst_35 = arith.constant dense<0.000000e+00> : vector<2x16xf32>
    %44 = tpu.matmul %7, %43, %cst_35 {dimension_numbers = #tpu.dot_dimension_numbers<[1], [0], [0], [1], [0, 0, 1, 1], [], []>} : vector<2x32xf32>, vector<32x16xf32>, vector<2x16xf32> -> vector<2x16xf32>
    %c0_36 = arith.constant 0 : index
    %c0_37 = arith.constant 0 : index
    %45 = vector.load %arg13[%c0_36, %c0_37] : memref<32x16xf32, #tpu.memory_space<vmem>>, vector<32x16xf32>
    %cst_38 = arith.constant dense<0.000000e+00> : vector<2x16xf32>
    %46 = tpu.matmul %14, %45, %cst_38 {dimension_numbers = #tpu.dot_dimension_numbers<[1], [0], [0], [1], [0, 0, 1, 1], [], []>} : vector<2x32xf32>, vector<32x16xf32>, vector<2x16xf32> -> vector<2x16xf32>
    %47 = arith.addf %44, %46 : vector<2x16xf32>
    %c0_39 = arith.constant 0 : index
    %c0_40 = arith.constant 0 : index
    %48 = vector.load %arg14[%c0_39, %c0_40] : memref<1x16xf32, #tpu.memory_space<vmem>>, vector<1x16xf32>
    %49 = vector.broadcast %48 : vector<1x16xf32> to vector<2x16xf32>
    %50 = arith.addf %47, %49 : vector<2x16xf32>
    %cst_41 = arith.constant 0.000000e+00 : f32
    %51 = vector.broadcast %cst_41 : f32 to vector<2x16xf32>
    %52 = arith.maximumf %50, %51 : vector<2x16xf32>
    %c0_42 = arith.constant 0 : index
    %c0_43 = arith.constant 0 : index
    %53 = vector.load %arg15[%c0_42, %c0_43] : memref<1x16xf32, #tpu.memory_space<vmem>>, vector<1x16xf32>
    %54 = vector.broadcast %53 : vector<1x16xf32> to vector<2x16xf32>
    %55 = arith.mulf %52, %54 : vector<2x16xf32>
    %cst_44 = arith.constant dense<0.000000e+00> : vector<2xf32>
    %56 = vector.multi_reduction <add>, %55, %cst_44 [1] : vector<2x16xf32> to vector<2xf32>
    %57 = vector.shape_cast %56 : vector<2xf32> to vector<2x1xf32>
    %c0_45 = arith.constant 0 : index
    %c0_46 = arith.constant 0 : index
    %58 = vector.load %arg16[%c0_45, %c0_46] : memref<1x1xf32, #tpu.memory_space<vmem>>, vector<1x1xf32>
    %59 = vector.broadcast %58 : vector<1x1xf32> to vector<2x1xf32>
    %60 = arith.addf %57, %59 : vector<2x1xf32>
    %c0_47 = arith.constant 0 : index
    %c0_48 = arith.constant 0 : index
    %61 = vector.load %arg17[%c0_47, %c0_48] : memref<2x1xf32, #tpu.memory_space<vmem>>, vector<2x1xf32>
    tpu.vector_store %arg17[%c0_47, %c0_48], %60 {strides = array<i32>} : memref<2x1xf32, #tpu.memory_space<vmem>>, vector<2x1xf32>,
    return
  }
  func.func @transform_0(%arg0: i32) -> (i32, i32) {
    %c0_i32 = arith.constant 0 : i32
    %c0_i32_0 = arith.constant 0 : i32
    %c0_i32_1 = arith.constant 0 : i32
    return %c0_i32, %c0_i32_0 : i32, i32
  }
  func.func @transform_1(%arg0: i32) -> (i32, i32) {
    %c0_i32 = arith.constant 0 : i32
    %c0_i32_0 = arith.constant 0 : i32
    %c0_i32_1 = arith.constant 0 : i32
    return %c0_i32, %c0_i32_0 : i32, i32
  }
  func.func @transform_2(%arg0: i32) -> (i32, i32) {
    %c0_i32 = arith.constant 0 : i32
    %c0_i32_0 = arith.constant 0 : i32
    %c0_i32_1 = arith.constant 0 : i32
    return %c0_i32, %c0_i32_0 : i32, i32
  }
  func.func @transform_3(%arg0: i32) -> (i32, i32) {
    %c0_i32 = arith.constant 0 : i32
    %c0_i32_0 = arith.constant 0 : i32
    %c0_i32_1 = arith.constant 0 : i32
    return %c0_i32, %c0_i32_0 : i32, i32
  }
  func.func @transform_4(%arg0: i32) -> (i32, i32) {
    %c0_i32 = arith.constant 0 : i32
    %c0_i32_0 = arith.constant 0 : i32
    %c0_i32_1 = arith.constant 0 : i32
    return %c0_i32, %c0_i32_0 : i32, i32
  }
  func.func @transform_5(%arg0: i32) -> (i32, i32) {
    %c0_i32 = arith.constant 0 : i32
    %c0_i32_0 = arith.constant 0 : i32
    %c0_i32_1 = arith.constant 0 : i32
    return %c0_i32, %c0_i32_0 : i32, i32
  }
  func.func @transform_6(%arg0: i32) -> (i32, i32) {
    %c0_i32 = arith.constant 0 : i32
    %c0_i32_0 = arith.constant 0 : i32
    %c0_i32_1 = arith.constant 0 : i32
    return %c0_i32, %c0_i32_0 : i32, i32
  }
  func.func @transform_7(%arg0: i32) -> (i32, i32) {
    %c0_i32 = arith.constant 0 : i32
    %c0_i32_0 = arith.constant 0 : i32
    %c0_i32_1 = arith.constant 0 : i32
    return %c0_i32, %c0_i32_0 : i32, i32
  }
  func.func @transform_8(%arg0: i32) -> (i32, i32) {
    %c0_i32 = arith.constant 0 : i32
    %c0_i32_0 = arith.constant 0 : i32
    %c0_i32_1 = arith.constant 0 : i32
    return %c0_i32, %c0_i32_0 : i32, i32
  }
  func.func @transform_9(%arg0: i32) -> (i32, i32) {
    %c0_i32 = arith.constant 0 : i32
    %c0_i32_0 = arith.constant 0 : i32
    %c0_i32_1 = arith.constant 0 : i32
    return %c0_i32, %c0_i32_0 : i32, i32
  }
  func.func @transform_10(%arg0: i32) -> (i32, i32) {
    %c0_i32 = arith.constant 0 : i32
    %c0_i32_0 = arith.constant 0 : i32
    %c0_i32_1 = arith.constant 0 : i32
    return %c0_i32, %c0_i32_0 : i32, i32
  }
  func.func @transform_11(%arg0: i32) -> (i32, i32) {
    %c0_i32 = arith.constant 0 : i32
    %c0_i32_0 = arith.constant 0 : i32
    %c0_i32_1 = arith.constant 0 : i32
    return %c0_i32, %c0_i32_0 : i32, i32
  }
  func.func @transform_12(%arg0: i32) -> (i32, i32) {
    %c0_i32 = arith.constant 0 : i32
    %c0_i32_0 = arith.constant 0 : i32
    %c0_i32_1 = arith.constant 0 : i32
    return %c0_i32, %c0_i32_0 : i32, i32
  }
  func.func @transform_13(%arg0: i32) -> (i32, i32) {
    %c0_i32 = arith.constant 0 : i32
    %c0_i32_0 = arith.constant 0 : i32
    %c0_i32_1 = arith.constant 0 : i32
    return %c0_i32, %c0_i32_0 : i32, i32
  }
  func.func @transform_14(%arg0: i32) -> (i32, i32) {
    %c0_i32 = arith.constant 0 : i32
    %c0_i32_0 = arith.constant 0 : i32
    %c0_i32_1 = arith.constant 0 : i32
    return %c0_i32, %c0_i32_0 : i32, i32
  }
  func.func @transform_15(%arg0: i32) -> (i32, i32) {
    %c0_i32 = arith.constant 0 : i32
    %c0_i32_0 = arith.constant 0 : i32
    %c0_i32_1 = arith.constant 0 : i32
    return %c0_i32, %c0_i32_0 : i32, i32
  }
  func.func @transform_16(%arg0: i32) -> (i32, i32) {
    %c0_i32 = arith.constant 0 : i32
    %c0_i32_0 = arith.constant 0 : i32
    %c0_i32_1 = arith.constant 0 : i32
    return %c0_i32, %c0_i32_0 : i32, i32
  }
  func.func @transform_17(%arg0: i32) -> (i32, i32) {
    %c0_i32 = arith.constant 0 : i32
    %c0_i32_0 = arith.constant 0 : i32
    %c0_i32_1 = arith.constant 0 : i32
    return %c0_i32, %c0_i32_0 : i32, i32
  }
  func.func @transform_18(%arg0: i32) -> (i32, i32) {
    %c0_i32 = arith.constant 0 : i32
    %c0_i32_0 = arith.constant 0 : i32
    %c0_i32_1 = arith.constant 0 : i32
    return %c0_i32, %c0_i32_0 : i32, i32
  }
}

</mosaic_0001>

<llo_original>
// kernel: vilt_forward.14
$region0: #{vilt_forward.14}
  #allocation0 [shape = 'u32[]', space=smem, size = 0x4, offset = 0x4, fixed_abs, tag = 'smem constant byte address 0x4 - core index']
  #allocation1 [shape = 'u32[72,128]{1,0:T(1,128)}', space=vmem, size = 0x9000, scoped, tag = 'internal scratch']
  %s0 = inlined_call_operand.vmem [shape: f32[128,27], index: 0, kind: input, shape index: {}]
  %s1 = inlined_call_operand.vmem [shape: f32[27,8], index: 1, kind: input, shape index: {}]
  %s2 = inlined_call_operand.vmem [shape: f32[1,8], index: 2, kind: input, shape index: {}]
  %s3 = inlined_call_operand.vmem [shape: f32[1,8], index: 3, kind: input, shape index: {}]
  %s4 = inlined_call_operand.vmem [shape: f32[128,8], index: 4, kind: output, shape index: {}]
  %s5 = sld [smem:[#allocation0]]
  $region26: #{vilt_forward.14} parent=0
    _
  %s7 = ssub.s32 1, %s5
  %s8 = scalar_select 0, %s7, %s5
  // Predicated region
  $region2: #{vilt_forward.14} parent=0 // pred_check
    _
  $region3: #{vilt_forward.14} parent=0 // pred_check_branch
    %10 = sbr.rel (0) target = $region5
  $region4: #{vilt_forward.14} parent=0 // pred_region
    _
  $region5: #{vilt_forward.14} parent=0 // pred_fallthru
    _
  // Predicated region
  $region6: #{vilt_forward.14} parent=0 // pred_check
    _
  $region7: #{vilt_forward.14} parent=0 // pred_check_branch
    %12 = sbr.rel (0) target = $region9
  $region8: #{vilt_forward.14} parent=0 // pred_region
    _
  $region9: #{vilt_forward.14} parent=0 // pred_fallthru
    _
  // Predicated region
  $region10: #{vilt_forward.14} parent=0 // pred_check
    _
  $region11: #{vilt_forward.14} parent=0 // pred_check_branch
    %14 = sbr.rel (0) target = $region13
  $region12: #{vilt_forward.14} parent=0 // pred_region
    _
  $region13: #{vilt_forward.14} parent=0 // pred_fallthru
    _
  // Predicated region
  $region14: #{vilt_forward.14} parent=0 // pred_check
    _
  $region15: #{vilt_forward.14} parent=0 // pred_check_branch
    %16 = sbr.rel (0) target = $region17
  $region16: #{vilt_forward.14} parent=0 // pred_region
    _
  $region17: #{vilt_forward.14} parent=0 // pred_fallthru
    _
  %v17 = vld [vmem:[%s0] sm:$0xff]
  %v18 = vld [vmem:[%s0 + $0x8] sm:$0xff]
  %v19 = vld [vmem:[%s0 + $0x10] sm:$0xff]
  %v20 = vld [vmem:[%s0 + $0x18] sm:$0xff]
  %v21 = vld [vmem:[%s0 + $0x20] sm:$0xff]
  %v22 = vld [vmem:[%s0 + $0x28] sm:$0xff]
  %v23 = vld [vmem:[%s0 + $0x30] sm:$0xff]
  %v24 = vld [vmem:[%s0 + $0x38] sm:$0xff]
  %v25 = vld [vmem:[%s0 + $0x40] sm:$0xff]
  %v26 = vld [vmem:[%s0 + $0x48] sm:$0xff]
  %v27 = vld [vmem:[%s0 + $0x50] sm:$0xff]
  %v28 = vld [vmem:[%s0 + $0x58] sm:$0xff]
  %v29 = vld [vmem:[%s0 + $0x60] sm:$0xff]
  %v30 = vld [vmem:[%s0 + $0x68] sm:$0xff]
  %v31 = vld [vmem:[%s0 + $0x70] sm:$0xff]
  %v32 = vld [vmem:[%s0 + $0x78] sm:$0xff]
  %v33 = vld [vmem:[%s1] sm:$0xff]
  %v34 = vld [vmem:[%s1 + $0x8] sm:$0xff]
  %v35 = vld [vmem:[%s1 + $0x10] sm:$0xff]
  %v36 = vld [vmem:[%s1 + $0x18] sm:$0x7]
  %vm37 = vcmask 220160
  %v39 = vsel %vm37, %v17, 0
  %v42 = vsel %vm37, %v18, 0
  %v45 = vsel %vm37, %v19, 0
  %v48 = vsel %vm37, %v20, 0
  %v51 = vsel %vm37, %v21, 0
  %v54 = vsel %vm37, %v22, 0
  %v57 = vsel %vm37, %v23, 0
  %v60 = vsel %vm37, %v24, 0
  %v63 = vsel %vm37, %v25, 0
  %v66 = vsel %vm37, %v26, 0
  %v69 = vsel %vm37, %v27, 0
  %v72 = vsel %vm37, %v28, 0
  %v75 = vsel %vm37, %v29, 0
  %v78 = vsel %vm37, %v30, 0
  %v81 = vsel %vm37, %v31, 0
  %v84 = vsel %vm37, %v32, 0
  %vm86 = vcmask 1042432
  %v88 = vsel %vm86, %v36, 0
  %90 = vmatpush.msra.mxu0 0.0
  %91 = vmatpush.msra.mxu0 0.0
  %92 = vmatpush.msra.mxu0 0.0
  %93 = vmatpush.msra.mxu0 0.0
  %94 = vmatpush.msra.mxu0 0.0
  %95 = vmatpush.msra.mxu0 0.0
  %96 = vmatpush.msra.mxu0 0.0
  %97 = vmatpush.msra.mxu0 0.0
  %98 = vmatpush.msra.mxu0 0.0
  %99 = vmatpush.msra.mxu0 0.0
  %100 = vmatpush.msra.mxu0 0.0
  %101 = vmatpush.msra.mxu0 0.0
  %102 = vmatpush.msra.mxu0 %v88
  %103 = vmatpush.msra.mxu0 %v35
  %104 = vmatpush.msra.mxu0 %v34
  %105 = vmatpush.msra.mxu0 %v33
  %106 = vmatmul.f32.gmra.mxu0 %v39
  %v107 = vpop.f32.mrf.mxu0
  %v108 = vadd.f32 0.0, %v107
  %109 = vmatmul.f32.gmra.mxu0 %v42
  %v110 = vpop.f32.mrf.mxu0
  %v111 = vadd.f32 0.0, %v110
  %112 = vmatmul.f32.gmra.mxu0 %v45
  %v113 = vpop.f32.mrf.mxu0
  %v114 = vadd.f32 0.0, %v113
  %115 = vmatmul.f32.gmra.mxu0 %v48
  %v116 = vpop.f32.mrf.mxu0
  %v117 = vadd.f32 0.0, %v116
  %118 = vmatmul.f32.gmra.mxu0 %v51
  %v119 = vpop.f32.mrf.mxu0
  %v120 = vadd.f32 0.0, %v119
  %121 = vmatmul.f32.gmra.mxu0 %v54
  %v122 = vpop.f32.mrf.mxu0
  %v123 = vadd.f32 0.0, %v122
  %124 = vmatmul.f32.gmra.mxu0 %v57
  %v125 = vpop.f32.mrf.mxu0
  %v126 = vadd.f32 0.0, %v125
  %127 = vmatmul.f32.gmra.mxu0 %v60
  %v128 = vpop.f32.mrf.mxu0
  %v129 = vadd.f32 0.0, %v128
  %130 = vmatmul.f32.gmra.mxu0 %v63
  %v131 = vpop.f32.mrf.mxu0
  %v132 = vadd.f32 0.0, %v131
  %133 = vmatmul.f32.gmra.mxu0 %v66
  %v134 = vpop.f32.mrf.mxu0
  %v135 = vadd.f32 0.0, %v134
  %136 = vmatmul.f32.gmra.mxu0 %v69
  %v137 = vpop.f32.mrf.mxu0
  %v138 = vadd.f32 0.0, %v137
  %139 = vmatmul.f32.gmra.mxu0 %v72
  %v140 = vpop.f32.mrf.mxu0
  %v141 = vadd.f32 0.0, %v140
  %142 = vmatmul.f32.gmra.mxu0 %v75
  %v143 = vpop.f32.mrf.mxu0
  %v144 = vadd.f32 0.0, %v143
  %145 = vmatmul.f32.gmra.mxu0 %v78
  %v146 = vpop.f32.mrf.mxu0
  %v147 = vadd.f32 0.0, %v146
  %148 = vmatmul.f32.gmra.mxu0 %v81
  %v149 = vpop.f32.mrf.mxu0
  %v150 = vadd.f32 0.0, %v149
  %151 = vmatmul.f32.gmra.mxu0 %v84
  %v152 = vpop.f32.mrf.mxu0
  %v153 = vadd.f32 0.0, %v152
  %154 = vdwg.mxu0
  %v155 = vld [vmem:[%s2] sm:$0x1]
  %v157 = vperm.slane %v155, 0
  %v159 = vmul.f32 %v108, %v157
  %v160 = vmul.f32 %v111, %v157
  %v161 = vmul.f32 %v114, %v157
  %v162 = vmul.f32 %v117, %v157
  %v163 = vmul.f32 %v120, %v157
  %v164 = vmul.f32 %v123, %v157
  %v165 = vmul.f32 %v126, %v157
  %v166 = vmul.f32 %v129, %v157
  %v167 = vmul.f32 %v132, %v157
  %v168 = vmul.f32 %v135, %v157
  %v169 = vmul.f32 %v138, %v157
  %v170 = vmul.f32 %v141, %v157
  %v171 = vmul.f32 %v144, %v157
  %v172 = vmul.f32 %v147, %v157
  %v173 = vmul.f32 %v150, %v157
  %v174 = vmul.f32 %v153, %v157
  %v175 = vld [vmem:[%s3] sm:$0x1]
  %v177 = vperm.slane %v175, 0
  %v179 = vadd.f32 %v159, %v177
  %v180 = vadd.f32 %v160, %v177
  %v181 = vadd.f32 %v161, %v177
  %v182 = vadd.f32 %v162, %v177
  %v183 = vadd.f32 %v163, %v177
  %v184 = vadd.f32 %v164, %v177
  %v185 = vadd.f32 %v165, %v177
  %v186 = vadd.f32 %v166, %v177
  %v187 = vadd.f32 %v167, %v177
  %v188 = vadd.f32 %v168, %v177
  %v189 = vadd.f32 %v169, %v177
  %v190 = vadd.f32 %v170, %v177
  %v191 = vadd.f32 %v171, %v177
  %v192 = vadd.f32 %v172, %v177
  %v193 = vadd.f32 %v173, %v177
  %v194 = vadd.f32 %v174, %v177
  %v195 = vmax.f32 %v179, 0.0
  %v196 = vmax.f32 %v180, 0.0
  %v197 = vmax.f32 %v181, 0.0
  %v198 = vmax.f32 %v182, 0.0
  %v199 = vmax.f32 %v183, 0.0
  %v200 = vmax.f32 %v184, 0.0
  %v201 = vmax.f32 %v185, 0.0
  %v202 = vmax.f32 %v186, 0.0
  %v203 = vmax.f32 %v187, 0.0
  %v204 = vmax.f32 %v188, 0.0
  %v205 = vmax.f32 %v189, 0.0
  %v206 = vmax.f32 %v190, 0.0
  %v207 = vmax.f32 %v191, 0.0
  %v208 = vmax.f32 %v192, 0.0
  %v209 = vmax.f32 %v193, 0.0
  %v210 = vmax.f32 %v194, 0.0
  %vm211 = vcmask 64512
  %212 = vst.msk [vmem:[%s4] sm:$0xff] %vm211, %v195
  %213 = vst.msk [vmem:[%s4 + $0x8] sm:$0xff] %vm211, %v196
  %214 = vst.msk [vmem:[%s4 + $0x10] sm:$0xff] %vm211, %v197
  %215 = vst.msk [vmem:[%s4 + $0x18] sm:$0xff] %vm211, %v198
  %216 = vst.msk [vmem:[%s4 + $0x20] sm:$0xff] %vm211, %v199
  %217 = vst.msk [vmem:[%s4 + $0x28] sm:$0xff] %vm211, %v200
  %218 = vst.msk [vmem:[%s4 + $0x30] sm:$0xff] %vm211, %v201
  %219 = vst.msk [vmem:[%s4 + $0x38] sm:$0xff] %vm211, %v202
  %220 = vst.msk [vmem:[%s4 + $0x40] sm:$0xff] %vm211, %v203
  %221 = vst.msk [vmem:[%s4 + $0x48] sm:$0xff] %vm211, %v204
  %222 = vst.msk [vmem:[%s4 + $0x50] sm:$0xff] %vm211, %v205
  %223 = vst.msk [vmem:[%s4 + $0x58] sm:$0xff] %vm211, %v206
  %224 = vst.msk [vmem:[%s4 + $0x60] sm:$0xff] %vm211, %v207
  %225 = vst.msk [vmem:[%s4 + $0x68] sm:$0xff] %vm211, %v208
  %226 = vst.msk [vmem:[%s4 + $0x70] sm:$0xff] %vm211, %v209
  %227 = vst.msk [vmem:[%s4 + $0x78] sm:$0xff] %vm211, %v210
  // Predicated region
  $region18: #{vilt_forward.14} parent=0 // pred_check
    _
  $region19: #{vilt_forward.14} parent=0 // pred_check_branch
    %229 = sbr.rel (0) target = $region21
  $region20: #{vilt_forward.14} parent=0 // pred_region
    _
  $region21: #{vilt_forward.14} parent=0 // pred_fallthru
    _
  // Predicated region
  $region22: #{vilt_forward.14} parent=0 // pred_check
    _
  $region23: #{vilt_forward.14} parent=0 // pred_check_branch
    %231 = sbr.rel (0) target = $region25
  $region24: #{vilt_forward.14} parent=0 // pred_region
    _
  $region25: #{vilt_forward.14} parent=0 // pred_fallthru
    _

// kernel: vilt_forward.15
$region0: #{vilt_forward.15}
  #allocation0 [shape = 'u32[]', space=smem, size = 0x4, offset = 0x4, fixed_abs, tag = 'smem constant byte address 0x4 - core index']
  #allocation1 [shape = 'u32[72,128]{1,0:T(1,128)}', space=vmem, size = 0x9000, scoped, tag = 'internal scratch']
  %s0 = inlined_call_operand.vmem [shape: f32[32,4,8], index: 0, kind: input, shape index: {}]
  %s1 = inlined_call_operand.vmem [shape: f32[32,8], index: 1, kind: output, shape index: {}]
  %s2 = sld [smem:[#allocation0]]
  $region14: #{vilt_forward.15} parent=0
    _
  %s4 = ssub.s32 1, %s2
  %s5 = scalar_select 0, %s4, %s2
  // Predicated region
  $region2: #{vilt_forward.15} parent=0 // pred_check
    _
  $region3: #{vilt_forward.15} parent=0 // pred_check_branch
    %7 = sbr.rel (0) target = $region5
  $region4: #{vilt_forward.15} parent=0 // pred_region
    _
  $region5: #{vilt_forward.15} parent=0 // pred_fallthru
    _
  %v8 = vld [vmem:[%s0] sm:$0xf]
  %v9 = vld [vmem:[%s0 + $0x4] sm:$0xf]
  %v10 = vld [vmem:[%s0 + $0x8] sm:$0xf]
  %v11 = vld [vmem:[%s0 + $0xc] sm:$0xf]
  %v12 = vld [vmem:[%s0 + $0x10] sm:$0xf]
  %v13 = vld [vmem:[%s0 + $0x14] sm:$0xf]
  %v14 = vld [vmem:[%s0 + $0x18] sm:$0xf]
  %v15 = vld [vmem:[%s0 + $0x1c] sm:$0xf]
  %v16 = vld [vmem:[%s0 + $0x20] sm:$0xf]
  %v17 = vld [vmem:[%s0 + $0x24] sm:$0xf]
  %v18 = vld [vmem:[%s0 + $0x28] sm:$0xf]
  %v19 = vld [vmem:[%s0 + $0x2c] sm:$0xf]
  %v20 = vld [vmem:[%s0 + $0x30] sm:$0xf]
  %v21 = vld [vmem:[%s0 + $0x34] sm:$0xf]
  %v22 = vld [vmem:[%s0 + $0x38] sm:$0xf]
  %v23 = vld [vmem:[%s0 + $0x3c] sm:$0xf]
  %v24 = vld [vmem:[%s0 + $0x40] sm:$0xf]
  %v25 = vld [vmem:[%s0 + $0x44] sm:$0xf]
  %v26 = vld [vmem:[%s0 + $0x48] sm:$0xf]
  %v27 = vld [vmem:[%s0 + $0x4c] sm:$0xf]
  %v28 = vld [vmem:[%s0 + $0x50] sm:$0xf]
  %v29 = vld [vmem:[%s0 + $0x54] sm:$0xf]
  %v30 = vld [vmem:[%s0 + $0x58] sm:$0xf]
  %v31 = vld [vmem:[%s0 + $0x5c] sm:$0xf]
  %v32 = vld [vmem:[%s0 + $0x60] sm:$0xf]
  %v33 = vld [vmem:[%s0 + $0x64] sm:$0xf]
  %v34 = vld [vmem:[%s0 + $0x68] sm:$0xf]
  %v35 = vld [vmem:[%s0 + $0x6c] sm:$0xf]
  %v36 = vld [vmem:[%s0 + $0x70] sm:$0xf]
  %v37 = vld [vmem:[%s0 + $0x74] sm:$0xf]
  %v38 = vld [vmem:[%s0 + $0x78] sm:$0xf]
  %v39 = vld [vmem:[%s0 + $0x7c] sm:$0xf]
  %vm40 = vcmask 60416
  %v41 = vsel %vm40, %v8, -inf
  %v42 = vrot.slane %v41, 4
  %v43 = vmax.f32 %v41, %v42
  %v44 = vrot.slane %v43, 2
  %v45 = vmax.f32 %v43, %v44
  %v46 = vrot.slane %v45, 1
  %v47 = vmax.f32 %v45, %v46
  %v48 = vsel %vm40, %v9, -inf
  %v49 = vrot.slane %v48, 4
  %v50 = vmax.f32 %v48, %v49
  %v51 = vrot.slane %v50, 2
  %v52 = vmax.f32 %v50, %v51
  %v53 = vrot.slane %v52, 1
  %v54 = vmax.f32 %v52, %v53
  %v55 = vsel %vm40, %v10, -inf
  %v56 = vrot.slane %v55, 4
  %v57 = vmax.f32 %v55, %v56
  %v58 = vrot.slane %v57, 2
  %v59 = vmax.f32 %v57, %v58
  %v60 = vrot.slane %v59, 1
  %v61 = vmax.f32 %v59, %v60
  %v62 = vsel %vm40, %v11, -inf
  %v63 = vrot.slane %v62, 4
  %v64 = vmax.f32 %v62, %v63
  %v65 = vrot.slane %v64, 2
  %v66 = vmax.f32 %v64, %v65
  %v67 = vrot.slane %v66, 1
  %v68 = vmax.f32 %v66, %v67
  %v69 = vsel %vm40, %v12, -inf
  %v70 = vrot.slane %v69, 4
  %v71 = vmax.f32 %v69, %v70
  %v72 = vrot.slane %v71, 2
  %v73 = vmax.f32 %v71, %v72
  %v74 = vrot.slane %v73, 1
  %v75 = vmax.f32 %v73, %v74
  %v76 = vsel %vm40, %v13, -inf
  %v77 = vrot.slane %v76, 4
  %v78 = vmax.f32 %v76, %v77
  %v79 = vrot.slane %v78, 2
  %v80 = vmax.f32 %v78, %v79
  %v81 = vrot.slane %v80, 1
  %v82 = vmax.f32 %v80, %v81
  %v83 = vsel %vm40, %v14, -inf
  %v84 = vrot.slane %v83, 4
  %v85 = vmax.f32 %v83, %v84
  %v86 = vrot.slane %v85, 2
  %v87 = vmax.f32 %v85, %v86
  %v88 = vrot.slane %v87, 1
  %v89 = vmax.f32 %v87, %v88
  %v90 = vsel %vm40, %v15, -inf
  %v91 = vrot.slane %v90, 4
  %v92 = vmax.f32 %v90, %v91
  %v93 = vrot.slane %v92, 2
  %v94 = vmax.f32 %v92, %v93
  %v95 = vrot.slane %v94, 1
  %v96 = vmax.f32 %v94, %v95
  %v97 = vsel %vm40, %v16, -inf
  %v98 = vrot.slane %v97, 4
  %v99 = vmax.f32 %v97, %v98
  %v100 = vrot.slane %v99, 2
  %v101 = vmax.f32 %v99, %v100
  %v102 = vrot.slane %v101, 1
  %v103 = vmax.f32 %v101, %v102
  %v104 = vsel %vm40, %v17, -inf
  %v105 = vrot.slane %v104, 4
  %v106 = vmax.f32 %v104, %v105
  %v107 = vrot.slane %v106, 2
  %v108 = vmax.f32 %v106, %v107
  %v109 = vrot.slane %v108, 1
  %v110 = vmax.f32 %v108, %v109
  %v111 = vsel %vm40, %v18, -inf
  %v112 = vrot.slane %v111, 4
  %v113 = vmax.f32 %v111, %v112
  %v114 = vrot.slane %v113, 2
  %v115 = vmax.f32 %v113, %v114
  %v116 = vrot.slane %v115, 1
  %v117 = vmax.f32 %v115, %v116
  %v118 = vsel %vm40, %v19, -inf
  %v119 = vrot.slane %v118, 4
  %v120 = vmax.f32 %v118, %v119
  %v121 = vrot.slane %v120, 2
  %v122 = vmax.f32 %v120, %v121
  %v123 = vrot.slane %v122, 1
  %v124 = vmax.f32 %v122, %v123
  %v125 = vsel %vm40, %v20, -inf
  %v126 = vrot.slane %v125, 4
  %v127 = vmax.f32 %v125, %v126
  %v128 = vrot.slane %v127, 2
  %v129 = vmax.f32 %v127, %v128
  %v130 = vrot.slane %v129, 1
  %v131 = vmax.f32 %v129, %v130
  %v132 = vsel %vm40, %v21, -inf
  %v133 = vrot.slane %v132, 4
  %v134 = vmax.f32 %v132, %v133
  %v135 = vrot.slane %v134, 2
  %v136 = vmax.f32 %v134, %v135
  %v137 = vrot.slane %v136, 1
  %v138 = vmax.f32 %v136, %v137
  %v139 = vsel %vm40, %v22, -inf
  %v140 = vrot.slane %v139, 4
  %v141 = vmax.f32 %v139, %v140
  %v142 = vrot.slane %v141, 2
  %v143 = vmax.f32 %v141, %v142
  %v144 = vrot.slane %v143, 1
  %v145 = vmax.f32 %v143, %v144
  %v146 = vsel %vm40, %v23, -inf
  %v147 = vrot.slane %v146, 4
  %v148 = vmax.f32 %v146, %v147
  %v149 = vrot.slane %v148, 2
  %v150 = vmax.f32 %v148, %v149
  %v151 = vrot.slane %v150, 1
  %v152 = vmax.f32 %v150, %v151
  %v153 = vsel %vm40, %v24, -inf
  %v154 = vrot.slane %v153, 4
  %v155 = vmax.f32 %v153, %v154
  %v156 = vrot.slane %v155, 2
  %v157 = vmax.f32 %v155, %v156
  %v158 = vrot.slane %v157, 1
  %v159 = vmax.f32 %v157, %v158
  %v160 = vsel %vm40, %v25, -inf
  %v161 = vrot.slane %v160, 4
  %v162 = vmax.f32 %v160, %v161
  %v163 = vrot.slane %v162, 2
  %v164 = vmax.f32 %v162, %v163
  %v165 = vrot.slane %v164, 1
  %v166 = vmax.f32 %v164, %v165
  %v167 = vsel %vm40, %v26, -inf
  %v168 = vrot.slane %v167, 4
  %v169 = vmax.f32 %v167, %v168
  %v170 = vrot.slane %v169, 2
  %v171 = vmax.f32 %v169, %v170
  %v172 = vrot.slane %v171, 1
  %v173 = vmax.f32 %v171, %v172
  %v174 = vsel %vm40, %v27, -inf
  %v175 = vrot.slane %v174, 4
  %v176 = vmax.f32 %v174, %v175
  %v177 = vrot.slane %v176, 2
  %v178 = vmax.f32 %v176, %v177
  %v179 = vrot.slane %v178, 1
  %v180 = vmax.f32 %v178, %v179
  %v181 = vsel %vm40, %v28, -inf
  %v182 = vrot.slane %v181, 4
  %v183 = vmax.f32 %v181, %v182
  %v184 = vrot.slane %v183, 2
  %v185 = vmax.f32 %v183, %v184
  %v186 = vrot.slane %v185, 1
  %v187 = vmax.f32 %v185, %v186
  %v188 = vsel %vm40, %v29, -inf
  %v189 = vrot.slane %v188, 4
  %v190 = vmax.f32 %v188, %v189
  %v191 = vrot.slane %v190, 2
  %v192 = vmax.f32 %v190, %v191
  %v193 = vrot.slane %v192, 1
  %v194 = vmax.f32 %v192, %v193
  %v195 = vsel %vm40, %v30, -inf
  %v196 = vrot.slane %v195, 4
  %v197 = vmax.f32 %v195, %v196
  %v198 = vrot.slane %v197, 2
  %v199 = vmax.f32 %v197, %v198
  %v200 = vrot.slane %v199, 1
  %v201 = vmax.f32 %v199, %v200
  %v202 = vsel %vm40, %v31, -inf
  %v203 = vrot.slane %v202, 4
  %v204 = vmax.f32 %v202, %v203
  %v205 = vrot.slane %v204, 2
  %v206 = vmax.f32 %v204, %v205
  %v207 = vrot.slane %v206, 1
  %v208 = vmax.f32 %v206, %v207
  %v209 = vsel %vm40, %v32, -inf
  %v210 = vrot.slane %v209, 4
  %v211 = vmax.f32 %v209, %v210
  %v212 = vrot.slane %v211, 2
  %v213 = vmax.f32 %v211, %v212
  %v214 = vrot.slane %v213, 1
  %v215 = vmax.f32 %v213, %v214
  %v216 = vsel %vm40, %v33, -inf
  %v217 = vrot.slane %v216, 4
  %v218 = vmax.f32 %v216, %v217
  %v219 = vrot.slane %v218, 2
  %v220 = vmax.f32 %v218, %v219
  %v221 = vrot.slane %v220, 1
  %v222 = vmax.f32 %v220, %v221
  %v223 = vsel %vm40, %v34, -inf
  %v224 = vrot.slane %v223, 4
  %v225 = vmax.f32 %v223, %v224
  %v226 = vrot.slane %v225, 2
  %v227 = vmax.f32 %v225, %v226
  %v228 = vrot.slane %v227, 1
  %v229 = vmax.f32 %v227, %v228
  %v230 = vsel %vm40, %v35, -inf
  %v231 = vrot.slane %v230, 4
  %v232 = vmax.f32 %v230, %v231
  %v233 = vrot.slane %v232, 2
  %v234 = vmax.f32 %v232, %v233
  %v235 = vrot.slane %v234, 1
  %v236 = vmax.f32 %v234, %v235
  %v237 = vsel %vm40, %v36, -inf
  %v238 = vrot.slane %v237, 4
  %v239 = vmax.f32 %v237, %v238
  %v240 = vrot.slane %v239, 2
  %v241 = vmax.f32 %v239, %v240
  %v242 = vrot.slane %v241, 1
  %v243 = vmax.f32 %v241, %v242
  %v244 = vsel %vm40, %v37, -inf
  %v245 = vrot.slane %v244, 4
  %v246 = vmax.f32 %v244, %v245
  %v247 = vrot.slane %v246, 2
  %v248 = vmax.f32 %v246, %v247
  %v249 = vrot.slane %v248, 1
  %v250 = vmax.f32 %v248, %v249
  %v251 = vsel %vm40, %v38, -inf
  %v252 = vrot.slane %v251, 4
  %v253 = vmax.f32 %v251, %v252
  %v254 = vrot.slane %v253, 2
  %v255 = vmax.f32 %v253, %v254
  %v256 = vrot.slane %v255, 1
  %v257 = vmax.f32 %v255, %v256
  %v258 = vsel %vm40, %v39, -inf
  %v259 = vrot.slane %v258, 4
  %v260 = vmax.f32 %v258, %v259
  %v261 = vrot.slane %v260, 2
  %v262 = vmax.f32 %v260, %v261
  %v263 = vrot.slane %v262, 1
  %v264 = vmax.f32 %v262, %v263
  %vm297 = vcmask 1041409
  %v298 = vsel %vm297, %v54, %v47
  %vm299 = vcmask 1042434
  %v300 = vsel %vm299, %v61, %v298
  %vm301 = vcmask 1043459
  %v302 = vsel %vm301, %v68, %v300
  %vm303 = vcmask 1044484
  %v304 = vsel %vm303, %v75, %v302
  %vm305 = vcmask 1045509
  %v306 = vsel %vm305, %v82, %v304
  %vm307 = vcmask 1046534
  %v308 = vsel %vm307, %v89, %v306
  %vm309 = vcmask 1047559
  %v310 = vsel %vm309, %v96, %v308
  %v311 = vsel %vm297, %v110, %v103
  %v312 = vsel %vm299, %v117, %v311
  %v313 = vsel %vm301, %v124, %v312
  %v314 = vsel %vm303, %v131, %v313
  %v315 = vsel %vm305, %v138, %v314
  %v316 = vsel %vm307, %v145, %v315
  %v317 = vsel %vm309, %v152, %v316
  %v318 = vsel %vm297, %v166, %v159
  %v319 = vsel %vm299, %v173, %v318
  %v320 = vsel %vm301, %v180, %v319
  %v321 = vsel %vm303, %v187, %v320
  %v322 = vsel %vm305, %v194, %v321
  %v323 = vsel %vm307, %v201, %v322
  %v324 = vsel %vm309, %v208, %v323
  %v325 = vsel %vm297, %v222, %v215
  %v326 = vsel %vm299, %v229, %v325
  %v327 = vsel %vm301, %v236, %v326
  %v328 = vsel %vm303, %v243, %v327
  %v329 = vsel %vm305, %v250, %v328
  %v330 = vsel %vm307, %v257, %v329
  %v331 = vsel %vm309, %v264, %v330
  %vm336 = vcmask 64512
  %337 = vst.msk [vmem:[%s1] sm:$0xff] %vm336, %v310
  %338 = vst.msk [vmem:[%s1 + $0x8] sm:$0xff] %vm336, %v317
  %339 = vst.msk [vmem:[%s1 + $0x10] sm:$0xff] %vm336, %v324
  %340 = vst.msk [vmem:[%s1 + $0x18] sm:$0xff] %vm336, %v331
  // Predicated region
  $region6: #{vilt_forward.15} parent=0 // pred_check
    _
  $region7: #{vilt_forward.15} parent=0 // pred_check_branch
    %342 = sbr.rel (0) target = $region9
  $region8: #{vilt_forward.15} parent=0 // pred_region
    _
  $region9: #{vilt_forward.15} parent=0 // pred_fallthru
    _
  // Predicated region
  $region10: #{vilt_forward.15} parent=0 // pred_check
    _
  $region11: #{vilt_forward.15} parent=0 // pred_check_branch
    %344 = sbr.rel (0) target = $region13
  $region12: #{vilt_forward.15} parent=0 // pred_region
    _
  $region13: #{vilt_forward.15} parent=0 // pred_fallthru
    _

// kernel: vilt_forward.16
$region0: #{vilt_forward.16}
  #allocation0 [shape = 'u32[]', space=smem, size = 0x4, offset = 0x4, fixed_abs, tag = 'smem constant byte address 0x4 - core index']
  #allocation1 [shape = 'u32[72,128]{1,0:T(1,128)}', space=vmem, size = 0x9000, scoped, tag = 'internal scratch']
  %s0 = inlined_call_operand.vmem [shape: f32[32,72], index: 0, kind: input, shape index: {}]
  %s1 = inlined_call_operand.vmem [shape: f32[72,8], index: 1, kind: input, shape index: {}]
  %s2 = inlined_call_operand.vmem [shape: f32[1,8], index: 2, kind: input, shape index: {}]
  %s3 = inlined_call_operand.vmem [shape: f32[1,8], index: 3, kind: input, shape index: {}]
  %s4 = inlined_call_operand.vmem [shape: f32[32,8], index: 4, kind: output, shape index: {}]
  %s5 = sld [smem:[#allocation0]]
  $region26: #{vilt_forward.16} parent=0
    _
  %s7 = ssub.s32 1, %s5
  %s8 = scalar_select 0, %s7, %s5
  // Predicated region
  $region2: #{vilt_forward.16} parent=0 // pred_check
    _
  $region3: #{vilt_forward.16} parent=0 // pred_check_branch
    %10 = sbr.rel (0) target = $region5
  $region4: #{vilt_forward.16} parent=0 // pred_region
    _
  $region5: #{vilt_forward.16} parent=0 // pred_fallthru
    _
  // Predicated region
  $region6: #{vilt_forward.16} parent=0 // pred_check
    _
  $region7: #{vilt_forward.16} parent=0 // pred_check_branch
    %12 = sbr.rel (0) target = $region9
  $region8: #{vilt_forward.16} parent=0 // pred_region
    _
  $region9: #{vilt_forward.16} parent=0 // pred_fallthru
    _
  // Predicated region
  $region10: #{vilt_forward.16} parent=0 // pred_check
    _
  $region11: #{vilt_forward.16} parent=0 // pred_check_branch
    %14 = sbr.rel (0) target = $region13
  $region12: #{vilt_forward.16} parent=0 // pred_region
    _
  $region13: #{vilt_forward.16} parent=0 // pred_fallthru
    _
  // Predicated region
  $region14: #{vilt_forward.16} parent=0 // pred_check
    _
  $region15: #{vilt_forward.16} parent=0 // pred_check_branch
    %16 = sbr.rel (0) target = $region17
  $region16: #{vilt_forward.16} parent=0 // pred_region
    _
  $region17: #{vilt_forward.16} parent=0 // pred_fallthru
    _
  %v17 = vld [vmem:[%s0] sm:$0xff]
  %v18 = vld [vmem:[%s0 + $0x8] sm:$0xff]
  %v19 = vld [vmem:[%s0 + $0x10] sm:$0xff]
  %v20 = vld [vmem:[%s0 + $0x18] sm:$0xff]
  %v21 = vld [vmem:[%s1] sm:$0xff]
  %v22 = vld [vmem:[%s1 + $0x8] sm:$0xff]
  %v23 = vld [vmem:[%s1 + $0x10] sm:$0xff]
  %v24 = vld [vmem:[%s1 + $0x18] sm:$0xff]
  %v25 = vld [vmem:[%s1 + $0x20] sm:$0xff]
  %v26 = vld [vmem:[%s1 + $0x28] sm:$0xff]
  %v27 = vld [vmem:[%s1 + $0x30] sm:$0xff]
  %v28 = vld [vmem:[%s1 + $0x38] sm:$0xff]
  %v29 = vld [vmem:[%s1 + $0x40] sm:$0xff]
  %vm30 = vcmask 588800
  %v32 = vsel %vm30, %v17, 0
  %v35 = vsel %vm30, %v18, 0
  %v38 = vsel %vm30, %v19, 0
  %v41 = vsel %vm30, %v20, 0
  %43 = vmatpush.msra.mxu0 0.0
  %44 = vmatpush.msra.mxu0 0.0
  %45 = vmatpush.msra.mxu0 0.0
  %46 = vmatpush.msra.mxu0 0.0
  %47 = vmatpush.msra.mxu0 0.0
  %48 = vmatpush.msra.mxu0 0.0
  %49 = vmatpush.msra.mxu0 0.0
  %50 = vmatpush.msra.mxu0 %v29
  %51 = vmatpush.msra.mxu0 %v28
  %52 = vmatpush.msra.mxu0 %v27
  %53 = vmatpush.msra.mxu0 %v26
  %54 = vmatpush.msra.mxu0 %v25
  %55 = vmatpush.msra.mxu0 %v24
  %56 = vmatpush.msra.mxu0 %v23
  %57 = vmatpush.msra.mxu0 %v22
  %58 = vmatpush.msra.mxu0 %v21
  %59 = vmatmul.f32.gmra.mxu0 %v32
  %v60 = vpop.f32.mrf.mxu0
  %v61 = vadd.f32 0.0, %v60
  %62 = vmatmul.f32.gmra.mxu0 %v35
  %v63 = vpop.f32.mrf.mxu0
  %v64 = vadd.f32 0.0, %v63
  %65 = vmatmul.f32.gmra.mxu0 %v38
  %v66 = vpop.f32.mrf.mxu0
  %v67 = vadd.f32 0.0, %v66
  %68 = vmatmul.f32.gmra.mxu0 %v41
  %v69 = vpop.f32.mrf.mxu0
  %v70 = vadd.f32 0.0, %v69
  %71 = vdwg.mxu0
  %v72 = vld [vmem:[%s2] sm:$0x1]
  %v74 = vperm.slane %v72, 0
  %v76 = vmul.f32 %v61, %v74
  %v77 = vmul.f32 %v64, %v74
  %v78 = vmul.f32 %v67, %v74
  %v79 = vmul.f32 %v70, %v74
  %v80 = vld [vmem:[%s3] sm:$0x1]
  %v82 = vperm.slane %v80, 0
  %v84 = vadd.f32 %v76, %v82
  %v85 = vadd.f32 %v77, %v82
  %v86 = vadd.f32 %v78, %v82
  %v87 = vadd.f32 %v79, %v82
  %v88 = vmax.f32 %v84, 0.0
  %v89 = vmax.f32 %v85, 0.0
  %v90 = vmax.f32 %v86, 0.0
  %v91 = vmax.f32 %v87, 0.0
  %vm92 = vcmask 64512
  %93 = vst.msk [vmem:[%s4] sm:$0xff] %vm92, %v88
  %94 = vst.msk [vmem:[%s4 + $0x8] sm:$0xff] %vm92, %v89
  %95 = vst.msk [vmem:[%s4 + $0x10] sm:$0xff] %vm92, %v90
  %96 = vst.msk [vmem:[%s4 + $0x18] sm:$0xff] %vm92, %v91
  // Predicated region
  $region18: #{vilt_forward.16} parent=0 // pred_check
    _
  $region19: #{vilt_forward.16} parent=0 // pred_check_branch
    %98 = sbr.rel (0) target = $region21
  $region20: #{vilt_forward.16} parent=0 // pred_region
    _
  $region21: #{vilt_forward.16} parent=0 // pred_fallthru
    _
  // Predicated region
  $region22: #{vilt_forward.16} parent=0 // pred_check
    _
  $region23: #{vilt_forward.16} parent=0 // pred_check_branch
    %100 = sbr.rel (0) target = $region25
  $region24: #{vilt_forward.16} parent=0 // pred_region
    _
  $region25: #{vilt_forward.16} parent=0 // pred_fallthru
    _

// kernel: vilt_forward.17
$region0: #{vilt_forward.17}
  #allocation0 [shape = 'u32[]', space=smem, size = 0x4, offset = 0x4, fixed_abs, tag = 'smem constant byte address 0x4 - core index']
  #allocation1 [shape = 'u32[72,128]{1,0:T(1,128)}', space=vmem, size = 0x9000, scoped, tag = 'internal scratch']
  %s0 = inlined_call_operand.vmem [shape: f32[32,72], index: 0, kind: input, shape index: {}]
  %s1 = inlined_call_operand.vmem [shape: f32[72,8], index: 1, kind: input, shape index: {}]
  %s2 = inlined_call_operand.vmem [shape: f32[1,8], index: 2, kind: input, shape index: {}]
  %s3 = inlined_call_operand.vmem [shape: f32[1,8], index: 3, kind: input, shape index: {}]
  %s4 = inlined_call_operand.vmem [shape: f32[32,8], index: 4, kind: input, shape index: {}]
  %s5 = inlined_call_operand.vmem [shape: f32[32,8], index: 5, kind: output, shape index: {}]
  %s6 = sld [smem:[#allocation0]]
  $region30: #{vilt_forward.17} parent=0
    _
  %s8 = ssub.s32 1, %s6
  %s9 = scalar_select 0, %s8, %s6
  // Predicated region
  $region2: #{vilt_forward.17} parent=0 // pred_check
    _
  $region3: #{vilt_forward.17} parent=0 // pred_check_branch
    %11 = sbr.rel (0) target = $region5
  $region4: #{vilt_forward.17} parent=0 // pred_region
    _
  $region5: #{vilt_forward.17} parent=0 // pred_fallthru
    _
  // Predicated region
  $region6: #{vilt_forward.17} parent=0 // pred_check
    _
  $region7: #{vilt_forward.17} parent=0 // pred_check_branch
    %13 = sbr.rel (0) target = $region9
  $region8: #{vilt_forward.17} parent=0 // pred_region
    _
  $region9: #{vilt_forward.17} parent=0 // pred_fallthru
    _
  // Predicated region
  $region10: #{vilt_forward.17} parent=0 // pred_check
    _
  $region11: #{vilt_forward.17} parent=0 // pred_check_branch
    %15 = sbr.rel (0) target = $region13
  $region12: #{vilt_forward.17} parent=0 // pred_region
    _
  $region13: #{vilt_forward.17} parent=0 // pred_fallthru
    _
  // Predicated region
  $region14: #{vilt_forward.17} parent=0 // pred_check
    _
  $region15: #{vilt_forward.17} parent=0 // pred_check_branch
    %17 = sbr.rel (0) target = $region17
  $region16: #{vilt_forward.17} parent=0 // pred_region
    _
  $region17: #{vilt_forward.17} parent=0 // pred_fallthru
    _
  // Predicated region
  $region18: #{vilt_forward.17} parent=0 // pred_check
    _
  $region19: #{vilt_forward.17} parent=0 // pred_check_branch
    %19 = sbr.rel (0) target = $region21
  $region20: #{vilt_forward.17} parent=0 // pred_region
    _
  $region21: #{vilt_forward.17} parent=0 // pred_fallthru
    _
  %v20 = vld [vmem:[%s0] sm:$0xff]
  %v21 = vld [vmem:[%s0 + $0x8] sm:$0xff]
  %v22 = vld [vmem:[%s0 + $0x10] sm:$0xff]
  %v23 = vld [vmem:[%s0 + $0x18] sm:$0xff]
  %v24 = vld [vmem:[%s1] sm:$0xff]
  %v25 = vld [vmem:[%s1 + $0x8] sm:$0xff]
  %v26 = vld [vmem:[%s1 + $0x10] sm:$0xff]
  %v27 = vld [vmem:[%s1 + $0x18] sm:$0xff]
  %v28 = vld [vmem:[%s1 + $0x20] sm:$0xff]
  %v29 = vld [vmem:[%s1 + $0x28] sm:$0xff]
  %v30 = vld [vmem:[%s1 + $0x30] sm:$0xff]
  %v31 = vld [vmem:[%s1 + $0x38] sm:$0xff]
  %v32 = vld [vmem:[%s1 + $0x40] sm:$0xff]
  %vm33 = vcmask 588800
  %v35 = vsel %vm33, %v20, 0
  %v38 = vsel %vm33, %v21, 0
  %v41 = vsel %vm33, %v22, 0
  %v44 = vsel %vm33, %v23, 0
  %46 = vmatpush.msra.mxu0 0.0
  %47 = vmatpush.msra.mxu0 0.0
  %48 = vmatpush.msra.mxu0 0.0
  %49 = vmatpush.msra.mxu0 0.0
  %50 = vmatpush.msra.mxu0 0.0
  %51 = vmatpush.msra.mxu0 0.0
  %52 = vmatpush.msra.mxu0 0.0
  %53 = vmatpush.msra.mxu0 %v32
  %54 = vmatpush.msra.mxu0 %v31
  %55 = vmatpush.msra.mxu0 %v30
  %56 = vmatpush.msra.mxu0 %v29
  %57 = vmatpush.msra.mxu0 %v28
  %58 = vmatpush.msra.mxu0 %v27
  %59 = vmatpush.msra.mxu0 %v26
  %60 = vmatpush.msra.mxu0 %v25
  %61 = vmatpush.msra.mxu0 %v24
  %62 = vmatmul.f32.gmra.mxu0 %v35
  %v63 = vpop.f32.mrf.mxu0
  %v64 = vadd.f32 0.0, %v63
  %65 = vmatmul.f32.gmra.mxu0 %v38
  %v66 = vpop.f32.mrf.mxu0
  %v67 = vadd.f32 0.0, %v66
  %68 = vmatmul.f32.gmra.mxu0 %v41
  %v69 = vpop.f32.mrf.mxu0
  %v70 = vadd.f32 0.0, %v69
  %71 = vmatmul.f32.gmra.mxu0 %v44
  %v72 = vpop.f32.mrf.mxu0
  %v73 = vadd.f32 0.0, %v72
  %74 = vdwg.mxu0
  %v75 = vld [vmem:[%s2] sm:$0x1]
  %v77 = vperm.slane %v75, 0
  %v79 = vmul.f32 %v64, %v77
  %v80 = vmul.f32 %v67, %v77
  %v81 = vmul.f32 %v70, %v77
  %v82 = vmul.f32 %v73, %v77
  %v83 = vld [vmem:[%s3] sm:$0x1]
  %v85 = vperm.slane %v83, 0
  %v87 = vadd.f32 %v79, %v85
  %v88 = vadd.f32 %v80, %v85
  %v89 = vadd.f32 %v81, %v85
  %v90 = vadd.f32 %v82, %v85
  %v91 = vld [vmem:[%s4] sm:$0xff]
  %v92 = vld [vmem:[%s4 + $0x8] sm:$0xff]
  %v93 = vld [vmem:[%s4 + $0x10] sm:$0xff]
  %v94 = vld [vmem:[%s4 + $0x18] sm:$0xff]
  %v95 = vadd.f32 %v87, %v91
  %v96 = vadd.f32 %v88, %v92
  %v97 = vadd.f32 %v89, %v93
  %v98 = vadd.f32 %v90, %v94
  %v99 = vmax.f32 %v95, 0.0
  %v100 = vmax.f32 %v96, 0.0
  %v101 = vmax.f32 %v97, 0.0
  %v102 = vmax.f32 %v98, 0.0
  %vm103 = vcmask 64512
  %104 = vst.msk [vmem:[%s5] sm:$0xff] %vm103, %v99
  %105 = vst.msk [vmem:[%s5 + $0x8] sm:$0xff] %vm103, %v100
  %106 = vst.msk [vmem:[%s5 + $0x10] sm:$0xff] %vm103, %v101
  %107 = vst.msk [vmem:[%s5 + $0x18] sm:$0xff] %vm103, %v102
  // Predicated region
  $region22: #{vilt_forward.17} parent=0 // pred_check
    _
  $region23: #{vilt_forward.17} parent=0 // pred_check_branch
    %109 = sbr.rel (0) target = $region25
  $region24: #{vilt_forward.17} parent=0 // pred_region
    _
  $region25: #{vilt_forward.17} parent=0 // pred_fallthru
    _
  // Predicated region
  $region26: #{vilt_forward.17} parent=0 // pred_check
    _
  $region27: #{vilt_forward.17} parent=0 // pred_check_branch
    %111 = sbr.rel (0) target = $region29
  $region28: #{vilt_forward.17} parent=0 // pred_region
    _
  $region29: #{vilt_forward.17} parent=0 // pred_fallthru
    _

// kernel: vilt_forward.19
$region0: #{vilt_forward.19}
  #allocation0 [shape = 'u32[]', space=smem, size = 0x4, offset = 0x4, fixed_abs, tag = 'smem constant byte address 0x4 - core index']
  #allocation1 [shape = 'u32[72,128]{1,0:T(1,128)}', space=vmem, size = 0x9000, scoped, tag = 'internal scratch']
  %s0 = inlined_call_operand.vmem [shape: f32[8,72], index: 0, kind: input, shape index: {}]
  %s1 = inlined_call_operand.vmem [shape: f32[72,16], index: 1, kind: input, shape index: {}]
  %s2 = inlined_call_operand.vmem [shape: f32[1,16], index: 2, kind: input, shape index: {}]
  %s3 = inlined_call_operand.vmem [shape: f32[1,16], index: 3, kind: input, shape index: {}]
  %s4 = inlined_call_operand.vmem [shape: f32[8,16], index: 4, kind: output, shape index: {}]
  %s5 = sld [smem:[#allocation0]]
  $region26: #{vilt_forward.19} parent=0
    _
  %s7 = ssub.s32 1, %s5
  %s8 = scalar_select 0, %s7, %s5
  // Predicated region
  $region2: #{vilt_forward.19} parent=0 // pred_check
    _
  $region3: #{vilt_forward.19} parent=0 // pred_check_branch
    %10 = sbr.rel (0) target = $region5
  $region4: #{vilt_forward.19} parent=0 // pred_region
    _
  $region5: #{vilt_forward.19} parent=0 // pred_fallthru
    _
  // Predicated region
  $region6: #{vilt_forward.19} parent=0 // pred_check
    _
  $region7: #{vilt_forward.19} parent=0 // pred_check_branch
    %12 = sbr.rel (0) target = $region9
  $region8: #{vilt_forward.19} parent=0 // pred_region
    _
  $region9: #{vilt_forward.19} parent=0 // pred_fallthru
    _
  // Predicated region
  $region10: #{vilt_forward.19} parent=0 // pred_check
    _
  $region11: #{vilt_forward.19} parent=0 // pred_check_branch
    %14 = sbr.rel (0) target = $region13
  $region12: #{vilt_forward.19} parent=0 // pred_region
    _
  $region13: #{vilt_forward.19} parent=0 // pred_fallthru
    _
  // Predicated region
  $region14: #{vilt_forward.19} parent=0 // pred_check
    _
  $region15: #{vilt_forward.19} parent=0 // pred_check_branch
    %16 = sbr.rel (0) target = $region17
  $region16: #{vilt_forward.19} parent=0 // pred_region
    _
  $region17: #{vilt_forward.19} parent=0 // pred_fallthru
    _
  %v17 = vld [vmem:[%s0] sm:$0xff]
  %v18 = vld [vmem:[%s1] sm:$0xff]
  %v19 = vld [vmem:[%s1 + $0x8] sm:$0xff]
  %v20 = vld [vmem:[%s1 + $0x10] sm:$0xff]
  %v21 = vld [vmem:[%s1 + $0x18] sm:$0xff]
  %v22 = vld [vmem:[%s1 + $0x20] sm:$0xff]
  %v23 = vld [vmem:[%s1 + $0x28] sm:$0xff]
  %v24 = vld [vmem:[%s1 + $0x30] sm:$0xff]
  %v25 = vld [vmem:[%s1 + $0x38] sm:$0xff]
  %v26 = vld [vmem:[%s1 + $0x40] sm:$0xff]
  %vm27 = vcmask 588800
  %v29 = vsel %vm27, %v17, 0
  %31 = vmatpush.msra.mxu0 0.0
  %32 = vmatpush.msra.mxu0 0.0
  %33 = vmatpush.msra.mxu0 0.0
  %34 = vmatpush.msra.mxu0 0.0
  %35 = vmatpush.msra.mxu0 0.0
  %36 = vmatpush.msra.mxu0 0.0
  %37 = vmatpush.msra.mxu0 0.0
  %38 = vmatpush.msra.mxu0 %v26
  %39 = vmatpush.msra.mxu0 %v25
  %40 = vmatpush.msra.mxu0 %v24
  %41 = vmatpush.msra.mxu0 %v23
  %42 = vmatpush.msra.mxu0 %v22
  %43 = vmatpush.msra.mxu0 %v21
  %44 = vmatpush.msra.mxu0 %v20
  %45 = vmatpush.msra.mxu0 %v19
  %46 = vmatpush.msra.mxu0 %v18
  %47 = vmatmul.f32.gmra.mxu0 %v29
  %v48 = vpop.f32.mrf.mxu0
  %v49 = vadd.f32 0.0, %v48
  %50 = vdwg.mxu0
  %v51 = vld [vmem:[%s2] sm:$0x1]
  %v53 = vperm.slane %v51, 0
  %v55 = vmul.f32 %v49, %v53
  %v56 = vld [vmem:[%s3] sm:$0x1]
  %v58 = vperm.slane %v56, 0
  %v60 = vadd.f32 %v55, %v58
  %v61 = vmax.f32 %v60, 0.0
  %vm62 = vcmask 130048
  %63 = vst.msk [vmem:[%s4] sm:$0xff] %vm62, %v61
  // Predicated region
  $region18: #{vilt_forward.19} parent=0 // pred_check
    _
  $region19: #{vilt_forward.19} parent=0 // pred_check_branch
    %65 = sbr.rel (0) target = $region21
  $region20: #{vilt_forward.19} parent=0 // pred_region
    _
  $region21: #{vilt_forward.19} parent=0 // pred_fallthru
    _
  // Predicated region
  $region22: #{vilt_forward.19} parent=0 // pred_check
    _
  $region23: #{vilt_forward.19} parent=0 // pred_check_branch
    %67 = sbr.rel (0) target = $region25
  $region24: #{vilt_forward.19} parent=0 // pred_region
    _
  $region25: #{vilt_forward.19} parent=0 // pred_fallthru
    _

// kernel: vilt_forward.18
$region0: #{vilt_forward.18}
  #allocation0 [shape = 'u32[]', space=smem, size = 0x4, offset = 0x4, fixed_abs, tag = 'smem constant byte address 0x4 - core index']
  #allocation1 [shape = 'u32[72,128]{1,0:T(1,128)}', space=vmem, size = 0x9000, scoped, tag = 'internal scratch']
  %s0 = inlined_call_operand.vmem [shape: f32[8,8], index: 0, kind: input, shape index: {}]
  %s1 = inlined_call_operand.vmem [shape: f32[8,16], index: 1, kind: input, shape index: {}]
  %s2 = inlined_call_operand.vmem [shape: f32[1,16], index: 2, kind: input, shape index: {}]
  %s3 = inlined_call_operand.vmem [shape: f32[1,16], index: 3, kind: input, shape index: {}]
  %s4 = inlined_call_operand.vmem [shape: f32[8,16], index: 4, kind: output, shape index: {}]
  %s5 = sld [smem:[#allocation0]]
  $region26: #{vilt_forward.18} parent=0
    _
  %s7 = ssub.s32 1, %s5
  %s8 = scalar_select 0, %s7, %s5
  // Predicated region
  $region2: #{vilt_forward.18} parent=0 // pred_check
    _
  $region3: #{vilt_forward.18} parent=0 // pred_check_branch
    %10 = sbr.rel (0) target = $region5
  $region4: #{vilt_forward.18} parent=0 // pred_region
    _
  $region5: #{vilt_forward.18} parent=0 // pred_fallthru
    _
  // Predicated region
  $region6: #{vilt_forward.18} parent=0 // pred_check
    _
  $region7: #{vilt_forward.18} parent=0 // pred_check_branch
    %12 = sbr.rel (0) target = $region9
  $region8: #{vilt_forward.18} parent=0 // pred_region
    _
  $region9: #{vilt_forward.18} parent=0 // pred_fallthru
    _
  // Predicated region
  $region10: #{vilt_forward.18} parent=0 // pred_check
    _
  $region11: #{vilt_forward.18} parent=0 // pred_check_branch
    %14 = sbr.rel (0) target = $region13
  $region12: #{vilt_forward.18} parent=0 // pred_region
    _
  $region13: #{vilt_forward.18} parent=0 // pred_fallthru
    _
  // Predicated region
  $region14: #{vilt_forward.18} parent=0 // pred_check
    _
  $region15: #{vilt_forward.18} parent=0 // pred_check_branch
    %16 = sbr.rel (0) target = $region17
  $region16: #{vilt_forward.18} parent=0 // pred_region
    _
  $region17: #{vilt_forward.18} parent=0 // pred_fallthru
    _
  %v17 = vld [vmem:[%s0] sm:$0xff]
  %v18 = vld [vmem:[%s1] sm:$0xff]
  %vm19 = vcmask 64512
  %v21 = vsel %vm19, %v17, 0
  %23 = vmatpush.msra.mxu0 0.0
  %24 = vmatpush.msra.mxu0 0.0
  %25 = vmatpush.msra.mxu0 0.0
  %26 = vmatpush.msra.mxu0 0.0
  %27 = vmatpush.msra.mxu0 0.0
  %28 = vmatpush.msra.mxu0 0.0
  %29 = vmatpush.msra.mxu0 0.0
  %30 = vmatpush.msra.mxu0 0.0
  %31 = vmatpush.msra.mxu0 0.0
  %32 = vmatpush.msra.mxu0 0.0
  %33 = vmatpush.msra.mxu0 0.0
  %34 = vmatpush.msra.mxu0 0.0
  %35 = vmatpush.msra.mxu0 0.0
  %36 = vmatpush.msra.mxu0 0.0
  %37 = vmatpush.msra.mxu0 0.0
  %38 = vmatpush.msra.mxu0 %v18
  %39 = vmatmul.f32.gmra.mxu0 %v21
  %v40 = vpop.f32.mrf.mxu0
  %v41 = vadd.f32 0.0, %v40
  %42 = vdwg.mxu0
  %v43 = vld [vmem:[%s2] sm:$0x1]
  %v45 = vperm.slane %v43, 0
  %v47 = vmul.f32 %v41, %v45
  %v48 = vld [vmem:[%s3] sm:$0x1]
  %v50 = vperm.slane %v48, 0
  %v52 = vadd.f32 %v47, %v50
  %vm53 = vcmask 130048
  %54 = vst.msk [vmem:[%s4] sm:$0xff] %vm53, %v52
  // Predicated region
  $region18: #{vilt_forward.18} parent=0 // pred_check
    _
  $region19: #{vilt_forward.18} parent=0 // pred_check_branch
    %56 = sbr.rel (0) target = $region21
  $region20: #{vilt_forward.18} parent=0 // pred_region
    _
  $region21: #{vilt_forward.18} parent=0 // pred_fallthru
    _
  // Predicated region
  $region22: #{vilt_forward.18} parent=0 // pred_check
    _
  $region23: #{vilt_forward.18} parent=0 // pred_check_branch
    %58 = sbr.rel (0) target = $region25
  $region24: #{vilt_forward.18} parent=0 // pred_region
    _
  $region25: #{vilt_forward.18} parent=0 // pred_fallthru
    _

// kernel: vilt_forward.20
$region0: #{vilt_forward.20}
  #allocation0 [shape = 'u32[]', space=smem, size = 0x4, offset = 0x4, fixed_abs, tag = 'smem constant byte address 0x4 - core index']
  #allocation1 [shape = 'u32[72,128]{1,0:T(1,128)}', space=vmem, size = 0x9000, scoped, tag = 'internal scratch']
  %s0 = inlined_call_operand.vmem [shape: f32[8,144], index: 0, kind: input, shape index: {}]
  %s1 = inlined_call_operand.vmem [shape: f32[144,16], index: 1, kind: input, shape index: {}]
  %s2 = inlined_call_operand.vmem [shape: f32[1,16], index: 2, kind: input, shape index: {}]
  %s3 = inlined_call_operand.vmem [shape: f32[1,16], index: 3, kind: input, shape index: {}]
  %s4 = inlined_call_operand.vmem [shape: f32[8,16], index: 4, kind: input, shape index: {}]
  %s5 = inlined_call_operand.vmem [shape: f32[8,16], index: 5, kind: output, shape index: {}]
  %s6 = sld [smem:[#allocation0]]
  $region30: #{vilt_forward.20} parent=0
    _
  %s8 = ssub.s32 1, %s6
  %s9 = scalar_select 0, %s8, %s6
  // Predicated region
  $region2: #{vilt_forward.20} parent=0 // pred_check
    _
  $region3: #{vilt_forward.20} parent=0 // pred_check_branch
    %11 = sbr.rel (0) target = $region5
  $region4: #{vilt_forward.20} parent=0 // pred_region
    _
  $region5: #{vilt_forward.20} parent=0 // pred_fallthru
    _
  // Predicated region
  $region6: #{vilt_forward.20} parent=0 // pred_check
    _
  $region7: #{vilt_forward.20} parent=0 // pred_check_branch
    %13 = sbr.rel (0) target = $region9
  $region8: #{vilt_forward.20} parent=0 // pred_region
    _
  $region9: #{vilt_forward.20} parent=0 // pred_fallthru
    _
  // Predicated region
  $region10: #{vilt_forward.20} parent=0 // pred_check
    _
  $region11: #{vilt_forward.20} parent=0 // pred_check_branch
    %15 = sbr.rel (0) target = $region13
  $region12: #{vilt_forward.20} parent=0 // pred_region
    _
  $region13: #{vilt_forward.20} parent=0 // pred_fallthru
    _
  // Predicated region
  $region14: #{vilt_forward.20} parent=0 // pred_check
    _
  $region15: #{vilt_forward.20} parent=0 // pred_check_branch
    %17 = sbr.rel (0) target = $region17
  $region16: #{vilt_forward.20} parent=0 // pred_region
    _
  $region17: #{vilt_forward.20} parent=0 // pred_fallthru
    _
  // Predicated region
  $region18: #{vilt_forward.20} parent=0 // pred_check
    _
  $region19: #{vilt_forward.20} parent=0 // pred_check_branch
    %19 = sbr.rel (0) target = $region21
  $region20: #{vilt_forward.20} parent=0 // pred_region
    _
  $region21: #{vilt_forward.20} parent=0 // pred_fallthru
    _
  %v20 = vld [vmem:[%s0] sm:$0xff]
  %v21 = vld [vmem:[%s0 + $0x8] sm:$0xff]
  %v22 = vld [vmem:[%s1] sm:$0xff]
  %v23 = vld [vmem:[%s1 + $0x8] sm:$0xff]
  %v24 = vld [vmem:[%s1 + $0x10] sm:$0xff]
  %v25 = vld [vmem:[%s1 + $0x18] sm:$0xff]
  %v26 = vld [vmem:[%s1 + $0x20] sm:$0xff]
  %v27 = vld [vmem:[%s1 + $0x28] sm:$0xff]
  %v28 = vld [vmem:[%s1 + $0x30] sm:$0xff]
  %v29 = vld [vmem:[%s1 + $0x38] sm:$0xff]
  %v30 = vld [vmem:[%s1 + $0x40] sm:$0xff]
  %v31 = vld [vmem:[%s1 + $0x48] sm:$0xff]
  %v32 = vld [vmem:[%s1 + $0x50] sm:$0xff]
  %v33 = vld [vmem:[%s1 + $0x58] sm:$0xff]
  %v34 = vld [vmem:[%s1 + $0x60] sm:$0xff]
  %v35 = vld [vmem:[%s1 + $0x68] sm:$0xff]
  %v36 = vld [vmem:[%s1 + $0x70] sm:$0xff]
  %v37 = vld [vmem:[%s1 + $0x78] sm:$0xff]
  %v38 = vld [vmem:[%s1 + $0x80] sm:$0xff]
  %v39 = vld [vmem:[%s1 + $0x88] sm:$0xff]
  %vm40 = vcmask 130048
  %v42 = vsel %vm40, %v21, 0
  %44 = vmatpush.msra.mxu0 %v37
  %45 = vmatpush.msra.mxu0 %v36
  %46 = vmatpush.msra.mxu0 %v35
  %47 = vmatpush.msra.mxu0 %v34
  %48 = vmatpush.msra.mxu0 %v33
  %49 = vmatpush.msra.mxu0 %v32
  %50 = vmatpush.msra.mxu0 %v31
  %51 = vmatpush.msra.mxu0 %v30
  %52 = vmatpush.msra.mxu0 %v29
  %53 = vmatpush.msra.mxu0 %v28
  %54 = vmatpush.msra.mxu0 %v27
  %55 = vmatpush.msra.mxu0 %v26
  %56 = vmatpush.msra.mxu0 %v25
  %57 = vmatpush.msra.mxu0 %v24
  %58 = vmatpush.msra.mxu0 %v23
  %59 = vmatpush.msra.mxu0 %v22
  %60 = vmatmul.f32.gmra.mxu0 %v20
  %v61 = vpop.f32.mrf.mxu0
  %v62 = vadd.f32 0.0, %v61
  %63 = vdwg.mxu0
  %64 = vmatpush.msra.mxu0 0.0
  %65 = vmatpush.msra.mxu0 0.0
  %66 = vmatpush.msra.mxu0 0.0
  %67 = vmatpush.msra.mxu0 0.0
  %68 = vmatpush.msra.mxu0 0.0
  %69 = vmatpush.msra.mxu0 0.0
  %70 = vmatpush.msra.mxu0 0.0
  %71 = vmatpush.msra.mxu0 0.0
  %72 = vmatpush.msra.mxu0 0.0
  %73 = vmatpush.msra.mxu0 0.0
  %74 = vmatpush.msra.mxu0 0.0
  %75 = vmatpush.msra.mxu0 0.0
  %76 = vmatpush.msra.mxu0 0.0
  %77 = vmatpush.msra.mxu0 0.0
  %78 = vmatpush.msra.mxu0 %v39
  %79 = vmatpush.msra.mxu0 %v38
  %80 = vmatmul.f32.gmra.mxu0 %v42
  %v81 = vpop.f32.mrf.mxu0
  %v82 = vadd.f32 %v62, %v81
  %83 = vdwg.mxu0
  %v84 = vld [vmem:[%s2] sm:$0x1]
  %v86 = vperm.slane %v84, 0
  %v88 = vmul.f32 %v82, %v86
  %v89 = vld [vmem:[%s3] sm:$0x1]
  %v91 = vperm.slane %v89, 0
  %v93 = vadd.f32 %v88, %v91
  %v94 = vld [vmem:[%s4] sm:$0xff]
  %v95 = vadd.f32 %v93, %v94
  %v96 = vmax.f32 %v95, 0.0
  %97 = vst.msk [vmem:[%s5] sm:$0xff] %vm40, %v96
  // Predicated region
  $region22: #{vilt_forward.20} parent=0 // pred_check
    _
  $region23: #{vilt_forward.20} parent=0 // pred_check_branch
    %99 = sbr.rel (0) target = $region25
  $region24: #{vilt_forward.20} parent=0 // pred_region
    _
  $region25: #{vilt_forward.20} parent=0 // pred_fallthru
    _
  // Predicated region
  $region26: #{vilt_forward.20} parent=0 // pred_check
    _
  $region27: #{vilt_forward.20} parent=0 // pred_check_branch
    %101 = sbr.rel (0) target = $region29
  $region28: #{vilt_forward.20} parent=0 // pred_region
    _
  $region29: #{vilt_forward.20} parent=0 // pred_fallthru
    _

// kernel: vilt_forward.11
$region0: #{vilt_forward.11}
  #allocation0 [shape = 'u32[]', space=smem, size = 0x4, offset = 0x4, fixed_abs, tag = 'smem constant byte address 0x4 - core index']
  #allocation1 [shape = 'u32[72,128]{1,0:T(1,128)}', space=vmem, size = 0x9000, scoped, tag = 'internal scratch']
  %s0 = inlined_call_operand.vmem [shape: f32[16,32], index: 0, kind: input, shape index: {}]
  %s1 = inlined_call_operand.vmem [shape: f32[1,32], index: 1, kind: input, shape index: {}]
  %s2 = inlined_call_operand.vmem [shape: f32[1,32], index: 2, kind: input, shape index: {}]
  %s3 = inlined_call_operand.vmem [shape: f32[16,32], index: 3, kind: output, shape index: {}]
  %s4 = sld [smem:[#allocation0]]
  $region22: #{vilt_forward.11} parent=0
    _
  %s6 = ssub.s32 1, %s4
  %s7 = scalar_select 0, %s6, %s4
  // Predicated region
  $region2: #{vilt_forward.11} parent=0 // pred_check
    _
  $region3: #{vilt_forward.11} parent=0 // pred_check_branch
    %9 = sbr.rel (0) target = $region5
  $region4: #{vilt_forward.11} parent=0 // pred_region
    _
  $region5: #{vilt_forward.11} parent=0 // pred_fallthru
    _
  // Predicated region
  $region6: #{vilt_forward.11} parent=0 // pred_check
    _
  $region7: #{vilt_forward.11} parent=0 // pred_check_branch
    %11 = sbr.rel (0) target = $region9
  $region8: #{vilt_forward.11} parent=0 // pred_region
    _
  $region9: #{vilt_forward.11} parent=0 // pred_fallthru
    _
  // Predicated region
  $region10: #{vilt_forward.11} parent=0 // pred_check
    _
  $region11: #{vilt_forward.11} parent=0 // pred_check_branch
    %13 = sbr.rel (0) target = $region13
  $region12: #{vilt_forward.11} parent=0 // pred_region
    _
  $region13: #{vilt_forward.11} parent=0 // pred_fallthru
    _
  %v14 = vld [vmem:[%s0] sm:$0xff]
  %v15 = vld [vmem:[%s0 + $0x8] sm:$0xff]
  %v16 = vld [vmem:[%s1] sm:$0x1]
  %v17 = vld [vmem:[%s2] sm:$0x1]
  %vm18 = vcmask 261120
  %v19 = vsel %vm18, %v14, 0.0
  %20 = vadd.xlane.f32.xlu0 %v19
  %v21 = vpop.xlane.xlu0 %20
  %v22 = vsel %vm18, %v15, 0.0
  %23 = vadd.xlane.f32.xlu0 %v22
  %v24 = vpop.xlane.xlu0 %23
  %v25 = vrcp.pop 32.0
  %v26 = vmul.f32 32.0, %v25
  %v27 = vsub.f32 1.0, %v26
  %v28 = vmul.f32 %v25, %v27
  %v29 = vadd.f32 %v25, %v28
  %vm30 = vweird.f32 %v25
  %v31 = vsel %vm30, %v25, %v29
  %v32 = vmul.f32 %v21, %v31
  %v33 = vmul.f32 %v24, %v31
  %v34 = vsub.f32 %v14, %v32
  %v35 = vsub.f32 %v15, %v33
  %v36 = vmul.f32 %v34, %v34
  %v37 = vmul.f32 %v35, %v35
  %v38 = vsel %vm18, %v36, 0.0
  %39 = vadd.xlane.f32.xlu0 %v38
  %v40 = vpop.xlane.xlu0 %39
  %v41 = vsel %vm18, %v37, 0.0
  %42 = vadd.xlane.f32.xlu0 %v41
  %v43 = vpop.xlane.xlu0 %42
  %v44 = vmul.f32 %v40, %v31
  %v45 = vmul.f32 %v43, %v31
  %v46 = vadd.f32 %v44, 1e-12
  %v47 = vadd.f32 %v45, 1e-12
  %v48 = vrsqrt.pop %v46
  %v49 = vmul.f32 %v48, %v46
  %v50 = vmul.f32 %v49, %v48
  %v51 = vmul.f32 0.5, %v50
  %v52 = vsub.f32 1.5, %v51
  %v53 = vmul.f32 %v48, %v52
  %vm54 = vweird.f32 %v46
  %vm55 = vweird.f32 %v48
  %vm56 = vmor %vm54, %vm55
  %v57 = vsel %vm56, %v48, %v53
  %v58 = vrsqrt.pop %v47
  %v59 = vmul.f32 %v58, %v47
  %v60 = vmul.f32 %v59, %v58
  %v61 = vmul.f32 0.5, %v60
  %v62 = vsub.f32 1.5, %v61
  %v63 = vmul.f32 %v58, %v62
  %vm64 = vweird.f32 %v47
  %vm65 = vweird.f32 %v58
  %vm66 = vmor %vm64, %vm65
  %v67 = vsel %vm66, %v58, %v63
  %v68 = vmul.f32 %v34, %v57
  %v69 = vmul.f32 %v35, %v67
  %v71 = vperm.slane %v16, 0
  %v73 = vmul.f32 %v68, %v71
  %v74 = vmul.f32 %v69, %v71
  %v76 = vperm.slane %v17, 0
  %v78 = vadd.f32 %v73, %v76
  %v79 = vadd.f32 %v74, %v76
  %80 = vst.msk [vmem:[%s3] sm:$0xff] %vm18, %v78
  %81 = vst.msk [vmem:[%s3 + $0x8] sm:$0xff] %vm18, %v79
  // Predicated region
  $region14: #{vilt_forward.11} parent=0 // pred_check
    _
  $region15: #{vilt_forward.11} parent=0 // pred_check_branch
    %83 = sbr.rel (0) target = $region17
  $region16: #{vilt_forward.11} parent=0 // pred_region
    _
  $region17: #{vilt_forward.11} parent=0 // pred_fallthru
    _
  // Predicated region
  $region18: #{vilt_forward.11} parent=0 // pred_check
    _
  $region19: #{vilt_forward.11} parent=0 // pred_check_branch
    %85 = sbr.rel (0) target = $region21
  $region20: #{vilt_forward.11} parent=0 // pred_region
    _
  $region21: #{vilt_forward.11} parent=0 // pred_fallthru
    _

// kernel: vilt_forward.12
$region0: #{vilt_forward.12}
  #allocation0 [shape = 'u32[]', space=smem, size = 0x4, offset = 0x4, fixed_abs, tag = 'smem constant byte address 0x4 - core index']
  #allocation1 [shape = 'u32[72,128]{1,0:T(1,128)}', space=vmem, size = 0x9000, scoped, tag = 'internal scratch']
  %s0 = inlined_call_operand.vmem [shape: f32[16,32], index: 0, kind: input, shape index: {}]
  %s1 = inlined_call_operand.vmem [shape: f32[16,16], index: 1, kind: input, shape index: {}]
  %s2 = inlined_call_operand.vmem [shape: f32[32,32], index: 2, kind: input, shape index: {}]
  %s3 = inlined_call_operand.vmem [shape: f32[1,32], index: 3, kind: input, shape index: {}]
  %s4 = inlined_call_operand.vmem [shape: f32[32,32], index: 4, kind: input, shape index: {}]
  %s5 = inlined_call_operand.vmem [shape: f32[1,32], index: 5, kind: input, shape index: {}]
  %s6 = inlined_call_operand.vmem [shape: f32[32,32], index: 6, kind: input, shape index: {}]
  %s7 = inlined_call_operand.vmem [shape: f32[1,32], index: 7, kind: input, shape index: {}]
  %s8 = inlined_call_operand.vmem [shape: f32[32,32], index: 8, kind: input, shape index: {}]
  %s9 = inlined_call_operand.vmem [shape: f32[1,32], index: 9, kind: input, shape index: {}]
  %s10 = inlined_call_operand.vmem [shape: f32[1,32], index: 10, kind: input, shape index: {}]
  %s11 = inlined_call_operand.vmem [shape: f32[1,32], index: 11, kind: input, shape index: {}]
  %s12 = inlined_call_operand.vmem [shape: f32[32,64], index: 12, kind: input, shape index: {}]
  %s13 = inlined_call_operand.vmem [shape: f32[1,64], index: 13, kind: input, shape index: {}]
  %s14 = inlined_call_operand.vmem [shape: f32[64,32], index: 14, kind: input, shape index: {}]
  %s15 = inlined_call_operand.vmem [shape: f32[1,32], index: 15, kind: input, shape index: {}]
  %s16 = inlined_call_operand.vmem [shape: f32[1,32], index: 16, kind: input, shape index: {}]
  %s17 = inlined_call_operand.vmem [shape: f32[1,32], index: 17, kind: input, shape index: {}]
  %s18 = inlined_call_operand.vmem [shape: f32[16,32], index: 18, kind: output, shape index: {}]
  %s19 = sld [smem:[#allocation0]]
  $region82: #{vilt_forward.12} parent=0
    _
  %s21 = ssub.s32 1, %s19
  %s22 = scalar_select 0, %s21, %s19
  // Predicated region
  $region2: #{vilt_forward.12} parent=0 // pred_check
    _
  $region3: #{vilt_forward.12} parent=0 // pred_check_branch
    %24 = sbr.rel (0) target = $region5
  $region4: #{vilt_forward.12} parent=0 // pred_region
    _
  $region5: #{vilt_forward.12} parent=0 // pred_fallthru
    _
  // Predicated region
  $region6: #{vilt_forward.12} parent=0 // pred_check
    _
  $region7: #{vilt_forward.12} parent=0 // pred_check_branch
    %26 = sbr.rel (0) target = $region9
  $region8: #{vilt_forward.12} parent=0 // pred_region
    _
  $region9: #{vilt_forward.12} parent=0 // pred_fallthru
    _
  // Predicated region
  $region10: #{vilt_forward.12} parent=0 // pred_check
    _
  $region11: #{vilt_forward.12} parent=0 // pred_check_branch
    %28 = sbr.rel (0) target = $region13
  $region12: #{vilt_forward.12} parent=0 // pred_region
    _
  $region13: #{vilt_forward.12} parent=0 // pred_fallthru
    _
  // Predicated region
  $region14: #{vilt_forward.12} parent=0 // pred_check
    _
  $region15: #{vilt_forward.12} parent=0 // pred_check_branch
    %30 = sbr.rel (0) target = $region17
  $region16: #{vilt_forward.12} parent=0 // pred_region
    _
  $region17: #{vilt_forward.12} parent=0 // pred_fallthru
    _
  // Predicated region
  $region18: #{vilt_forward.12} parent=0 // pred_check
    _
  $region19: #{vilt_forward.12} parent=0 // pred_check_branch
    %32 = sbr.rel (0) target = $region21
  $region20: #{vilt_forward.12} parent=0 // pred_region
    _
  $region21: #{vilt_forward.12} parent=0 // pred_fallthru
    _
  // Predicated region
  $region22: #{vilt_forward.12} parent=0 // pred_check
    _
  $region23: #{vilt_forward.12} parent=0 // pred_check_branch
    %34 = sbr.rel (0) target = $region25
  $region24: #{vilt_forward.12} parent=0 // pred_region
    _
  $region25: #{vilt_forward.12} parent=0 // pred_fallthru
    _
  // Predicated region
  $region26: #{vilt_forward.12} parent=0 // pred_check
    _
  $region27: #{vilt_forward.12} parent=0 // pred_check_branch
    %36 = sbr.rel (0) target = $region29
  $region28: #{vilt_forward.12} parent=0 // pred_region
    _
  $region29: #{vilt_forward.12} parent=0 // pred_fallthru
    _
  // Predicated region
  $region30: #{vilt_forward.12} parent=0 // pred_check
    _
  $region31: #{vilt_forward.12} parent=0 // pred_check_branch
    %38 = sbr.rel (0) target = $region33
  $region32: #{vilt_forward.12} parent=0 // pred_region
    _
  $region33: #{vilt_forward.12} parent=0 // pred_fallthru
    _
  // Predicated region
  $region34: #{vilt_forward.12} parent=0 // pred_check
    _
  $region35: #{vilt_forward.12} parent=0 // pred_check_branch
    %40 = sbr.rel (0) target = $region37
  $region36: #{vilt_forward.12} parent=0 // pred_region
    _
  $region37: #{vilt_forward.12} parent=0 // pred_fallthru
    _
  // Predicated region
  $region38: #{vilt_forward.12} parent=0 // pred_check
    _
  $region39: #{vilt_forward.12} parent=0 // pred_check_branch
    %42 = sbr.rel (0) target = $region41
  $region40: #{vilt_forward.12} parent=0 // pred_region
    _
  $region41: #{vilt_forward.12} parent=0 // pred_fallthru
    _
  // Predicated region
  $region42: #{vilt_forward.12} parent=0 // pred_check
    _
  $region43: #{vilt_forward.12} parent=0 // pred_check_branch
    %44 = sbr.rel (0) target = $region45
  $region44: #{vilt_forward.12} parent=0 // pred_region
    _
  $region45: #{vilt_forward.12} parent=0 // pred_fallthru
    _
  // Predicated region
  $region46: #{vilt_forward.12} parent=0 // pred_check
    _
  $region47: #{vilt_forward.12} parent=0 // pred_check_branch
    %46 = sbr.rel (0) target = $region49
  $region48: #{vilt_forward.12} parent=0 // pred_region
    _
  $region49: #{vilt_forward.12} parent=0 // pred_fallthru
    _
  // Predicated region
  $region50: #{vilt_forward.12} parent=0 // pred_check
    _
  $region51: #{vilt_forward.12} parent=0 // pred_check_branch
    %48 = sbr.rel (0) target = $region53
  $region52: #{vilt_forward.12} parent=0 // pred_region
    _
  $region53: #{vilt_forward.12} parent=0 // pred_fallthru
    _
  // Predicated region
  $region54: #{vilt_forward.12} parent=0 // pred_check
    _
  $region55: #{vilt_forward.12} parent=0 // pred_check_branch
    %50 = sbr.rel (0) target = $region57
  $region56: #{vilt_forward.12} parent=0 // pred_region
    _
  $region57: #{vilt_forward.12} parent=0 // pred_fallthru
    _
  // Predicated region
  $region58: #{vilt_forward.12} parent=0 // pred_check
    _
  $region59: #{vilt_forward.12} parent=0 // pred_check_branch
    %52 = sbr.rel (0) target = $region61
  $region60: #{vilt_forward.12} parent=0 // pred_region
    _
  $region61: #{vilt_forward.12} parent=0 // pred_fallthru
    _
  // Predicated region
  $region62: #{vilt_forward.12} parent=0 // pred_check
    _
  $region63: #{vilt_forward.12} parent=0 // pred_check_branch
    %54 = sbr.rel (0) target = $region65
  $region64: #{vilt_forward.12} parent=0 // pred_region
    _
  $region65: #{vilt_forward.12} parent=0 // pred_fallthru
    _
  // Predicated region
  $region66: #{vilt_forward.12} parent=0 // pred_check
    _
  $region67: #{vilt_forward.12} parent=0 // pred_check_branch
    %56 = sbr.rel (0) target = $region69
  $region68: #{vilt_forward.12} parent=0 // pred_region
    _
  $region69: #{vilt_forward.12} parent=0 // pred_fallthru
    _
  // Predicated region
  $region70: #{vilt_forward.12} parent=0 // pred_check
    _
  $region71: #{vilt_forward.12} parent=0 // pred_check_branch
    %58 = sbr.rel (0) target = $region73
  $region72: #{vilt_forward.12} parent=0 // pred_region
    _
  $region73: #{vilt_forward.12} parent=0 // pred_fallthru
    _
  %v59 = vld [vmem:[%s0] sm:$0xff]
  %v60 = vld [vmem:[%s0 + $0x8] sm:$0xff]
  %v61 = vld [vmem:[%s2] sm:$0xff]
  %v62 = vld [vmem:[%s2 + $0x8] sm:$0xff]
  %v63 = vld [vmem:[%s2 + $0x10] sm:$0xff]
  %v64 = vld [vmem:[%s2 + $0x18] sm:$0xff]
  %v65 = vld [vmem:[%s3] sm:$0x1]
  %v67 = vperm.slane %v65, 0
  %vm69 = vcmask 261120
  %v71 = vsel %vm69, %v59, 0
  %v74 = vsel %vm69, %v60, 0
  %76 = vmatpush.msra.mxu0 0.0
  %77 = vmatpush.msra.mxu0 0.0
  %78 = vmatpush.msra.mxu0 0.0
  %79 = vmatpush.msra.mxu0 0.0
  %80 = vmatpush.msra.mxu0 0.0
  %81 = vmatpush.msra.mxu0 0.0
  %82 = vmatpush.msra.mxu0 0.0
  %83 = vmatpush.msra.mxu0 0.0
  %84 = vmatpush.msra.mxu0 0.0
  %85 = vmatpush.msra.mxu0 0.0
  %86 = vmatpush.msra.mxu0 0.0
  %87 = vmatpush.msra.mxu0 0.0
  %88 = vmatpush.msra.mxu0 %v64
  %89 = vmatpush.msra.mxu0 %v63
  %90 = vmatpush.msra.mxu0 %v62
  %91 = vmatpush.msra.mxu0 %v61
  %92 = vmatmul.f32.gmra.mxu0 %v71
  %v93 = vpop.f32.mrf.mxu0
  %v94 = vadd.f32 %v67, %v93
  %95 = vmatmul.f32.gmra.mxu0 %v74
  %v96 = vpop.f32.mrf.mxu0
  %v97 = vadd.f32 %v67, %v96
  %98 = vdwg.mxu0
  %v99 = vld [vmem:[%s4] sm:$0xff]
  %v100 = vld [vmem:[%s4 + $0x8] sm:$0xff]
  %v101 = vld [vmem:[%s4 + $0x10] sm:$0xff]
  %v102 = vld [vmem:[%s4 + $0x18] sm:$0xff]
  %v103 = vld [vmem:[%s5] sm:$0x1]
  %v105 = vperm.slane %v103, 0
  %107 = vmatpush.msra.mxu0 0.0
  %108 = vmatpush.msra.mxu0 0.0
  %109 = vmatpush.msra.mxu0 0.0
  %110 = vmatpush.msra.mxu0 0.0
  %111 = vmatpush.msra.mxu0 0.0
  %112 = vmatpush.msra.mxu0 0.0
  %113 = vmatpush.msra.mxu0 0.0
  %114 = vmatpush.msra.mxu0 0.0
  %115 = vmatpush.msra.mxu0 0.0
  %116 = vmatpush.msra.mxu0 0.0
  %117 = vmatpush.msra.mxu0 0.0
  %118 = vmatpush.msra.mxu0 0.0
  %119 = vmatpush.msra.mxu0 %v102
  %120 = vmatpush.msra.mxu0 %v101
  %121 = vmatpush.msra.mxu0 %v100
  %122 = vmatpush.msra.mxu0 %v99
  %123 = vmatmul.f32.gmra.mxu0 %v71
  %v124 = vpop.f32.mrf.mxu0
  %v125 = vadd.f32 %v105, %v124
  %126 = vmatmul.f32.gmra.mxu0 %v74
  %v127 = vpop.f32.mrf.mxu0
  %v128 = vadd.f32 %v105, %v127
  %129 = vdwg.mxu0
  %v130 = vld [vmem:[%s6] sm:$0xff]
  %v131 = vld [vmem:[%s6 + $0x8] sm:$0xff]
  %v132 = vld [vmem:[%s6 + $0x10] sm:$0xff]
  %v133 = vld [vmem:[%s6 + $0x18] sm:$0xff]
  %v134 = vld [vmem:[%s7] sm:$0x1]
  %v136 = vperm.slane %v134, 0
  %138 = vmatpush.msra.mxu0 0.0
  %139 = vmatpush.msra.mxu0 0.0
  %140 = vmatpush.msra.mxu0 0.0
  %141 = vmatpush.msra.mxu0 0.0
  %142 = vmatpush.msra.mxu0 0.0
  %143 = vmatpush.msra.mxu0 0.0
  %144 = vmatpush.msra.mxu0 0.0
  %145 = vmatpush.msra.mxu0 0.0
  %146 = vmatpush.msra.mxu0 0.0
  %147 = vmatpush.msra.mxu0 0.0
  %148 = vmatpush.msra.mxu0 0.0
  %149 = vmatpush.msra.mxu0 0.0
  %150 = vmatpush.msra.mxu0 %v133
  %151 = vmatpush.msra.mxu0 %v132
  %152 = vmatpush.msra.mxu0 %v131
  %153 = vmatpush.msra.mxu0 %v130
  %154 = vmatmul.f32.gmra.mxu0 %v71
  %v155 = vpop.f32.mrf.mxu0
  %v156 = vadd.f32 %v136, %v155
  %157 = vmatmul.f32.gmra.mxu0 %v74
  %v158 = vpop.f32.mrf.mxu0
  %v159 = vadd.f32 %v136, %v158
  %160 = vdwg.mxu0
  %v161 = vld [vmem:[%s1] sm:$0xff]
  %v162 = vld [vmem:[%s1 + $0x8] sm:$0xff]
  %v163 = vlaneseq
  %v164 = vand.u32 %v163, 127
  %vm165 = vcmp.ge.s32.totalorder %v164, 0
  %vm166 = vcmp.lt.s32.totalorder %v164, 8
  %vm167 = vmand %vm165, %vm166
  %v168 = vsel %vm167, 1, 0
  %v169 = vcvt.s32.f32 %v168
  %v170 = vmul.f32 %v94, %v169
  %v171 = vmul.f32 %v97, %v169
  %v173 = vsel %vm69, %v170, 0
  %v176 = vsel %vm69, %v171, 0
  %v179 = vsel %vm69, %v125, 0
  %v182 = vsel %vm69, %v128, 0
  %184 = vmatpush.xpose.msra.mxu0 0.0
  %185 = vmatpush.xpose.msra.mxu0 0.0
  %186 = vmatpush.xpose.msra.mxu0 0.0
  %187 = vmatpush.xpose.msra.mxu0 0.0
  %188 = vmatpush.xpose.msra.mxu0 0.0
  %189 = vmatpush.xpose.msra.mxu0 0.0
  %190 = vmatpush.xpose.msra.mxu0 0.0
  %191 = vmatpush.xpose.msra.mxu0 0.0
  %192 = vmatpush.xpose.msra.mxu0 0.0
  %193 = vmatpush.xpose.msra.mxu0 0.0
  %194 = vmatpush.xpose.msra.mxu0 0.0
  %195 = vmatpush.xpose.msra.mxu0 0.0
  %196 = vmatpush.xpose.msra.mxu0 0.0
  %197 = vmatpush.xpose.msra.mxu0 0.0
  %198 = vmatpush.xpose.msra.mxu0 %v182
  %199 = vmatpush.xpose.msra.mxu0 %v179
  %200 = vmatmul.f32.gmra.mxu0 %v173
  %v201 = vpop.f32.mrf.mxu0
  %v202 = vadd.f32 0.0, %v201
  %203 = vmatmul.f32.gmra.mxu0 %v176
  %v204 = vpop.f32.mrf.mxu0
  %v205 = vadd.f32 0.0, %v204
  %206 = vdwg.mxu0
  %v207 = vmul.f32 %v202, 0.35355338
  %v208 = vmul.f32 %v205, 0.35355338
  %v209 = vadd.f32 %v207, %v161
  %v210 = vadd.f32 %v208, %v162
  %vm211 = vcmask 130048
  %v212 = vsel %vm211, %v209, -inf
  %213 = vmax.xlane.f32.xlu0 %v212
  %v214 = vpop.xlane.xlu0 %213
  %v215 = vsel %vm211, %v210, -inf
  %216 = vmax.xlane.f32.xlu0 %v215
  %v217 = vpop.xlane.xlu0 %216
  %v218 = vsub.f32 %v209, %v214
  %v219 = vsub.f32 %v210, %v217
  %v220 = vmul.f32 %v218, 1.442695
  %v221 = vpow.pop %v220
  %v222 = vmul.f32 %v219, 1.442695
  %v223 = vpow.pop %v222
  %v224 = vsel %vm211, %v221, 0.0
  %225 = vadd.xlane.f32.xlu0 %v224
  %v226 = vpop.xlane.xlu0 %225
  %v227 = vsel %vm211, %v223, 0.0
  %228 = vadd.xlane.f32.xlu0 %v227
  %v229 = vpop.xlane.xlu0 %228
  %v230 = vrcp.pop %v226
  %v231 = vrcp.pop %v229
  %v232 = vmul.f32 %v221, %v230
  %v233 = vmul.f32 %v223, %v231
  %v234 = vmul.f32 %v156, %v169
  %v235 = vmul.f32 %v159, %v169
  %vm236 = vcmp.ge.s32.totalorder %v164, 8
  %vm237 = vcmp.lt.s32.totalorder %v164, 16
  %vm238 = vmand %vm236, %vm237
  %v239 = vsel %vm238, 1, 0
  %v240 = vcvt.s32.f32 %v239
  %v241 = vmul.f32 %v94, %v240
  %v242 = vmul.f32 %v97, %v240
  %v244 = vsel %vm69, %v241, 0
  %v247 = vsel %vm69, %v242, 0
  %249 = vmatpush.xpose.msra.mxu0 0.0
  %250 = vmatpush.xpose.msra.mxu0 0.0
  %251 = vmatpush.xpose.msra.mxu0 0.0
  %252 = vmatpush.xpose.msra.mxu0 0.0
  %253 = vmatpush.xpose.msra.mxu0 0.0
  %254 = vmatpush.xpose.msra.mxu0 0.0
  %255 = vmatpush.xpose.msra.mxu0 0.0
  %256 = vmatpush.xpose.msra.mxu0 0.0
  %257 = vmatpush.xpose.msra.mxu0 0.0
  %258 = vmatpush.xpose.msra.mxu0 0.0
  %259 = vmatpush.xpose.msra.mxu0 0.0
  %260 = vmatpush.xpose.msra.mxu0 0.0
  %261 = vmatpush.xpose.msra.mxu0 0.0
  %262 = vmatpush.xpose.msra.mxu0 0.0
  %263 = vmatpush.xpose.msra.mxu0 %v182
  %264 = vmatpush.xpose.msra.mxu0 %v179
  %265 = vmatmul.f32.gmra.mxu0 %v244
  %v266 = vpop.f32.mrf.mxu0
  %v267 = vadd.f32 0.0, %v266
  %268 = vmatmul.f32.gmra.mxu0 %v247
  %v269 = vpop.f32.mrf.mxu0
  %v270 = vadd.f32 0.0, %v269
  %271 = vdwg.mxu0
  %v272 = vmul.f32 %v267, 0.35355338
  %v273 = vmul.f32 %v270, 0.35355338
  %v274 = vadd.f32 %v272, %v161
  %v275 = vadd.f32 %v273, %v162
  %v276 = vsel %vm211, %v274, -inf
  %277 = vmax.xlane.f32.xlu0 %v276
  %v278 = vpop.xlane.xlu0 %277
  %v279 = vsel %vm211, %v275, -inf
  %280 = vmax.xlane.f32.xlu0 %v279
  %v281 = vpop.xlane.xlu0 %280
  %v282 = vsub.f32 %v274, %v278
  %v283 = vsub.f32 %v275, %v281
  %v284 = vmul.f32 %v282, 1.442695
  %v285 = vpow.pop %v284
  %v286 = vmul.f32 %v283, 1.442695
  %v287 = vpow.pop %v286
  %v288 = vsel %vm211, %v285, 0.0
  %289 = vadd.xlane.f32.xlu0 %v288
  %v290 = vpop.xlane.xlu0 %289
  %v291 = vsel %vm211, %v287, 0.0
  %292 = vadd.xlane.f32.xlu0 %v291
  %v293 = vpop.xlane.xlu0 %292
  %v294 = vrcp.pop %v290
  %v295 = vrcp.pop %v293
  %v296 = vmul.f32 %v285, %v294
  %v297 = vmul.f32 %v287, %v295
  %v298 = vmul.f32 %v156, %v240
  %v299 = vmul.f32 %v159, %v240
  %v301 = vsel %vm211, %v296, 0
  %v304 = vsel %vm211, %v297, 0
  %306 = vmatpush.msra.mxu0 0.0
  %307 = vmatpush.msra.mxu0 0.0
  %308 = vmatpush.msra.mxu0 0.0
  %309 = vmatpush.msra.mxu0 0.0
  %310 = vmatpush.msra.mxu0 0.0
  %311 = vmatpush.msra.mxu0 0.0
  %312 = vmatpush.msra.mxu0 0.0
  %313 = vmatpush.msra.mxu0 0.0
  %314 = vmatpush.msra.mxu0 0.0
  %315 = vmatpush.msra.mxu0 0.0
  %316 = vmatpush.msra.mxu0 0.0
  %317 = vmatpush.msra.mxu0 0.0
  %318 = vmatpush.msra.mxu0 0.0
  %319 = vmatpush.msra.mxu0 0.0
  %320 = vmatpush.msra.mxu0 %v299
  %321 = vmatpush.msra.mxu0 %v298
  %322 = vmatmul.f32.gmra.mxu0 %v301
  %v323 = vpop.f32.mrf.mxu0
  %v324 = vadd.f32 0.0, %v323
  %325 = vmatmul.f32.gmra.mxu0 %v304
  %v326 = vpop.f32.mrf.mxu0
  %v327 = vadd.f32 0.0, %v326
  %328 = vdwg.mxu0
  %v330 = vsel %vm211, %v232, 0
  %v333 = vsel %vm211, %v233, 0
  %335 = vmatpush.msra.mxu0 0.0
  %336 = vmatpush.msra.mxu0 0.0
  %337 = vmatpush.msra.mxu0 0.0
  %338 = vmatpush.msra.mxu0 0.0
  %339 = vmatpush.msra.mxu0 0.0
  %340 = vmatpush.msra.mxu0 0.0
  %341 = vmatpush.msra.mxu0 0.0
  %342 = vmatpush.msra.mxu0 0.0
  %343 = vmatpush.msra.mxu0 0.0
  %344 = vmatpush.msra.mxu0 0.0
  %345 = vmatpush.msra.mxu0 0.0
  %346 = vmatpush.msra.mxu0 0.0
  %347 = vmatpush.msra.mxu0 0.0
  %348 = vmatpush.msra.mxu0 0.0
  %349 = vmatpush.msra.mxu0 %v235
  %350 = vmatpush.msra.mxu0 %v234
  %351 = vmatmul.f32.gmra.mxu0 %v330
  %v352 = vpop.f32.mrf.mxu0
  %v353 = vadd.f32 %v324, %v352
  %354 = vmatmul.f32.gmra.mxu0 %v333
  %v355 = vpop.f32.mrf.mxu0
  %v356 = vadd.f32 %v327, %v355
  %357 = vdwg.mxu0
  %vm358 = vcmp.ge.s32.totalorder %v164, 16
  %vm359 = vcmp.lt.s32.totalorder %v164, 24
  %vm360 = vmand %vm358, %vm359
  %v361 = vsel %vm360, 1, 0
  %v362 = vcvt.s32.f32 %v361
  %v363 = vmul.f32 %v94, %v362
  %v364 = vmul.f32 %v97, %v362
  %v366 = vsel %vm69, %v363, 0
  %v369 = vsel %vm69, %v364, 0
  %371 = vmatpush.xpose.msra.mxu0 0.0
  %372 = vmatpush.xpose.msra.mxu0 0.0
  %373 = vmatpush.xpose.msra.mxu0 0.0
  %374 = vmatpush.xpose.msra.mxu0 0.0
  %375 = vmatpush.xpose.msra.mxu0 0.0
  %376 = vmatpush.xpose.msra.mxu0 0.0
  %377 = vmatpush.xpose.msra.mxu0 0.0
  %378 = vmatpush.xpose.msra.mxu0 0.0
  %379 = vmatpush.xpose.msra.mxu0 0.0
  %380 = vmatpush.xpose.msra.mxu0 0.0
  %381 = vmatpush.xpose.msra.mxu0 0.0
  %382 = vmatpush.xpose.msra.mxu0 0.0
  %383 = vmatpush.xpose.msra.mxu0 0.0
  %384 = vmatpush.xpose.msra.mxu0 0.0
  %385 = vmatpush.xpose.msra.mxu0 %v182
  %386 = vmatpush.xpose.msra.mxu0 %v179
  %387 = vmatmul.f32.gmra.mxu0 %v366
  %v388 = vpop.f32.mrf.mxu0
  %v389 = vadd.f32 0.0, %v388
  %390 = vmatmul.f32.gmra.mxu0 %v369
  %v391 = vpop.f32.mrf.mxu0
  %v392 = vadd.f32 0.0, %v391
  %393 = vdwg.mxu0
  %v394 = vmul.f32 %v389, 0.35355338
  %v395 = vmul.f32 %v392, 0.35355338
  %v396 = vadd.f32 %v394, %v161
  %v397 = vadd.f32 %v395, %v162
  %v398 = vsel %vm211, %v396, -inf
  %399 = vmax.xlane.f32.xlu0 %v398
  %v400 = vpop.xlane.xlu0 %399
  %v401 = vsel %vm211, %v397, -inf
  %402 = vmax.xlane.f32.xlu0 %v401
  %v403 = vpop.xlane.xlu0 %402
  %v404 = vsub.f32 %v396, %v400
  %v405 = vsub.f32 %v397, %v403
  %v406 = vmul.f32 %v404, 1.442695
  %v407 = vpow.pop %v406
  %v408 = vmul.f32 %v405, 1.442695
  %v409 = vpow.pop %v408
  %v410 = vsel %vm211, %v407, 0.0
  %411 = vadd.xlane.f32.xlu0 %v410
  %v412 = vpop.xlane.xlu0 %411
  %v413 = vsel %vm211, %v409, 0.0
  %414 = vadd.xlane.f32.xlu0 %v413
  %v415 = vpop.xlane.xlu0 %414
  %v416 = vrcp.pop %v412
  %v417 = vrcp.pop %v415
  %v418 = vmul.f32 %v407, %v416
  %v419 = vmul.f32 %v409, %v417
  %v420 = vmul.f32 %v156, %v362
  %v421 = vmul.f32 %v159, %v362
  %v423 = vsel %vm211, %v418, 0
  %v426 = vsel %vm211, %v419, 0
  %428 = vmatpush.msra.mxu0 0.0
  %429 = vmatpush.msra.mxu0 0.0
  %430 = vmatpush.msra.mxu0 0.0
  %431 = vmatpush.msra.mxu0 0.0
  %432 = vmatpush.msra.mxu0 0.0
  %433 = vmatpush.msra.mxu0 0.0
  %434 = vmatpush.msra.mxu0 0.0
  %435 = vmatpush.msra.mxu0 0.0
  %436 = vmatpush.msra.mxu0 0.0
  %437 = vmatpush.msra.mxu0 0.0
  %438 = vmatpush.msra.mxu0 0.0
  %439 = vmatpush.msra.mxu0 0.0
  %440 = vmatpush.msra.mxu0 0.0
  %441 = vmatpush.msra.mxu0 0.0
  %442 = vmatpush.msra.mxu0 %v421
  %443 = vmatpush.msra.mxu0 %v420
  %444 = vmatmul.f32.gmra.mxu0 %v423
  %v445 = vpop.f32.mrf.mxu0
  %v446 = vadd.f32 0.0, %v445
  %447 = vmatmul.f32.gmra.mxu0 %v426
  %v448 = vpop.f32.mrf.mxu0
  %v449 = vadd.f32 0.0, %v448
  %450 = vdwg.mxu0
  %v451 = vadd.f32 %v353, %v446
  %v452 = vadd.f32 %v356, %v449
  %vm453 = vcmp.ge.s32.totalorder %v164, 24
  %vm454 = vcmp.lt.s32.totalorder %v164, 32
  %vm455 = vmand %vm453, %vm454
  %v456 = vsel %vm455, 1, 0
  %v457 = vcvt.s32.f32 %v456
  %v458 = vmul.f32 %v94, %v457
  %v459 = vmul.f32 %v97, %v457
  %v461 = vsel %vm69, %v458, 0
  %v464 = vsel %vm69, %v459, 0
  %466 = vmatpush.xpose.msra.mxu0 0.0
  %467 = vmatpush.xpose.msra.mxu0 0.0
  %468 = vmatpush.xpose.msra.mxu0 0.0
  %469 = vmatpush.xpose.msra.mxu0 0.0
  %470 = vmatpush.xpose.msra.mxu0 0.0
  %471 = vmatpush.xpose.msra.mxu0 0.0
  %472 = vmatpush.xpose.msra.mxu0 0.0
  %473 = vmatpush.xpose.msra.mxu0 0.0
  %474 = vmatpush.xpose.msra.mxu0 0.0
  %475 = vmatpush.xpose.msra.mxu0 0.0
  %476 = vmatpush.xpose.msra.mxu0 0.0
  %477 = vmatpush.xpose.msra.mxu0 0.0
  %478 = vmatpush.xpose.msra.mxu0 0.0
  %479 = vmatpush.xpose.msra.mxu0 0.0
  %480 = vmatpush.xpose.msra.mxu0 %v182
  %481 = vmatpush.xpose.msra.mxu0 %v179
  %482 = vmatmul.f32.gmra.mxu0 %v461
  %v483 = vpop.f32.mrf.mxu0
  %v484 = vadd.f32 0.0, %v483
  %485 = vmatmul.f32.gmra.mxu0 %v464
  %v486 = vpop.f32.mrf.mxu0
  %v487 = vadd.f32 0.0, %v486
  %488 = vdwg.mxu0
  %v489 = vmul.f32 %v484, 0.35355338
  %v490 = vmul.f32 %v487, 0.35355338
  %v491 = vadd.f32 %v489, %v161
  %v492 = vadd.f32 %v490, %v162
  %v493 = vsel %vm211, %v491, -inf
  %494 = vmax.xlane.f32.xlu0 %v493
  %v495 = vpop.xlane.xlu0 %494
  %v496 = vsel %vm211, %v492, -inf
  %497 = vmax.xlane.f32.xlu0 %v496
  %v498 = vpop.xlane.xlu0 %497
  %v499 = vsub.f32 %v491, %v495
  %v500 = vsub.f32 %v492, %v498
  %v501 = vmul.f32 %v499, 1.442695
  %v502 = vpow.pop %v501
  %v503 = vmul.f32 %v500, 1.442695
  %v504 = vpow.pop %v503
  %v505 = vsel %vm211, %v502, 0.0
  %506 = vadd.xlane.f32.xlu0 %v505
  %v507 = vpop.xlane.xlu0 %506
  %v508 = vsel %vm211, %v504, 0.0
  %509 = vadd.xlane.f32.xlu0 %v508
  %v510 = vpop.xlane.xlu0 %509
  %v511 = vrcp.pop %v507
  %v512 = vrcp.pop %v510
  %v513 = vmul.f32 %v502, %v511
  %v514 = vmul.f32 %v504, %v512
  %v515 = vmul.f32 %v156, %v457
  %v516 = vmul.f32 %v159, %v457
  %v518 = vsel %vm211, %v513, 0
  %v521 = vsel %vm211, %v514, 0
  %523 = vmatpush.msra.mxu0 0.0
  %524 = vmatpush.msra.mxu0 0.0
  %525 = vmatpush.msra.mxu0 0.0
  %526 = vmatpush.msra.mxu0 0.0
  %527 = vmatpush.msra.mxu0 0.0
  %528 = vmatpush.msra.mxu0 0.0
  %529 = vmatpush.msra.mxu0 0.0
  %530 = vmatpush.msra.mxu0 0.0
  %531 = vmatpush.msra.mxu0 0.0
  %532 = vmatpush.msra.mxu0 0.0
  %533 = vmatpush.msra.mxu0 0.0
  %534 = vmatpush.msra.mxu0 0.0
  %535 = vmatpush.msra.mxu0 0.0
  %536 = vmatpush.msra.mxu0 0.0
  %537 = vmatpush.msra.mxu0 %v516
  %538 = vmatpush.msra.mxu0 %v515
  %539 = vmatmul.f32.gmra.mxu0 %v518
  %v540 = vpop.f32.mrf.mxu0
  %v541 = vadd.f32 0.0, %v540
  %542 = vmatmul.f32.gmra.mxu0 %v521
  %v543 = vpop.f32.mrf.mxu0
  %v544 = vadd.f32 0.0, %v543
  %545 = vdwg.mxu0
  %v546 = vadd.f32 %v451, %v541
  %v547 = vadd.f32 %v452, %v544
  %v548 = vld [vmem:[%s8] sm:$0xff]
  %v549 = vld [vmem:[%s8 + $0x8] sm:$0xff]
  %v550 = vld [vmem:[%s8 + $0x10] sm:$0xff]
  %v551 = vld [vmem:[%s8 + $0x18] sm:$0xff]
  %v552 = vld [vmem:[%s9] sm:$0x1]
  %v554 = vperm.slane %v552, 0
  %v557 = vsel %vm69, %v546, 0
  %v560 = vsel %vm69, %v547, 0
  %562 = vmatpush.msra.mxu0 0.0
  %563 = vmatpush.msra.mxu0 0.0
  %564 = vmatpush.msra.mxu0 0.0
  %565 = vmatpush.msra.mxu0 0.0
  %566 = vmatpush.msra.mxu0 0.0
  %567 = vmatpush.msra.mxu0 0.0
  %568 = vmatpush.msra.mxu0 0.0
  %569 = vmatpush.msra.mxu0 0.0
  %570 = vmatpush.msra.mxu0 0.0
  %571 = vmatpush.msra.mxu0 0.0
  %572 = vmatpush.msra.mxu0 0.0
  %573 = vmatpush.msra.mxu0 0.0
  %574 = vmatpush.msra.mxu0 %v551
  %575 = vmatpush.msra.mxu0 %v550
  %576 = vmatpush.msra.mxu0 %v549
  %577 = vmatpush.msra.mxu0 %v548
  %578 = vmatmul.f32.gmra.mxu0 %v557
  %v579 = vpop.f32.mrf.mxu0
  %v580 = vadd.f32 %v554, %v579
  %581 = vmatmul.f32.gmra.mxu0 %v560
  %v582 = vpop.f32.mrf.mxu0
  %v583 = vadd.f32 %v554, %v582
  %584 = vdwg.mxu0
  %v585 = vadd.f32 %v580, %v59
  %v586 = vadd.f32 %v583, %v60
  %v587 = vld [vmem:[%s10] sm:$0x1]
  %v588 = vld [vmem:[%s11] sm:$0x1]
  %v589 = vsel %vm69, %v585, 0.0
  %590 = vadd.xlane.f32.xlu0 %v589
  %v591 = vpop.xlane.xlu0 %590
  %v592 = vsel %vm69, %v586, 0.0
  %593 = vadd.xlane.f32.xlu0 %v592
  %v594 = vpop.xlane.xlu0 %593
  %v595 = vrcp.pop 32.0
  %v596 = vmul.f32 32.0, %v595
  %v597 = vsub.f32 1.0, %v596
  %v598 = vmul.f32 %v595, %v597
  %v599 = vadd.f32 %v595, %v598
  %vm600 = vweird.f32 %v595
  %v601 = vsel %vm600, %v595, %v599
  %v602 = vmul.f32 %v591, %v601
  %v603 = vmul.f32 %v594, %v601
  %v604 = vsub.f32 %v585, %v602
  %v605 = vsub.f32 %v586, %v603
  %v606 = vmul.f32 %v604, %v604
  %v607 = vmul.f32 %v605, %v605
  %v608 = vsel %vm69, %v606, 0.0
  %609 = vadd.xlane.f32.xlu0 %v608
  %v610 = vpop.xlane.xlu0 %609
  %v611 = vsel %vm69, %v607, 0.0
  %612 = vadd.xlane.f32.xlu0 %v611
  %v613 = vpop.xlane.xlu0 %612
  %v614 = vmul.f32 %v610, %v601
  %v615 = vmul.f32 %v613, %v601
  %v616 = vadd.f32 %v614, 1e-12
  %v617 = vadd.f32 %v615, 1e-12
  %v618 = vrsqrt.pop %v616
  %v619 = vmul.f32 %v618, %v616
  %v620 = vmul.f32 %v619, %v618
  %v621 = vmul.f32 0.5, %v620
  %v622 = vsub.f32 1.5, %v621
  %v623 = vmul.f32 %v618, %v622
  %vm624 = vweird.f32 %v616
  %vm625 = vweird.f32 %v618
  %vm626 = vmor %vm624, %vm625
  %v627 = vsel %vm626, %v618, %v623
  %v628 = vrsqrt.pop %v617
  %v629 = vmul.f32 %v628, %v617
  %v630 = vmul.f32 %v629, %v628
  %v631 = vmul.f32 0.5, %v630
  %v632 = vsub.f32 1.5, %v631
  %v633 = vmul.f32 %v628, %v632
  %vm634 = vweird.f32 %v617
  %vm635 = vweird.f32 %v628
  %vm636 = vmor %vm634, %vm635
  %v637 = vsel %vm636, %v628, %v633
  %v638 = vmul.f32 %v604, %v627
  %v639 = vmul.f32 %v605, %v637
  %v641 = vperm.slane %v587, 0
  %v643 = vmul.f32 %v638, %v641
  %v644 = vmul.f32 %v639, %v641
  %v646 = vperm.slane %v588, 0
  %v648 = vadd.f32 %v643, %v646
  %v649 = vadd.f32 %v644, %v646
  %v650 = vld [vmem:[%s12] sm:$0xff]
  %v651 = vld [vmem:[%s12 + $0x8] sm:$0xff]
  %v652 = vld [vmem:[%s12 + $0x10] sm:$0xff]
  %v653 = vld [vmem:[%s12 + $0x18] sm:$0xff]
  %v654 = vld [vmem:[%s13] sm:$0x1]
  %v656 = vperm.slane %v654, 0
  %v659 = vsel %vm69, %v648, 0
  %v662 = vsel %vm69, %v649, 0
  %664 = vmatpush.msra.mxu0 0.0
  %665 = vmatpush.msra.mxu0 0.0
  %666 = vmatpush.msra.mxu0 0.0
  %667 = vmatpush.msra.mxu0 0.0
  %668 = vmatpush.msra.mxu0 0.0
  %669 = vmatpush.msra.mxu0 0.0
  %670 = vmatpush.msra.mxu0 0.0
  %671 = vmatpush.msra.mxu0 0.0
  %672 = vmatpush.msra.mxu0 0.0
  %673 = vmatpush.msra.mxu0 0.0
  %674 = vmatpush.msra.mxu0 0.0
  %675 = vmatpush.msra.mxu0 0.0
  %676 = vmatpush.msra.mxu0 %v653
  %677 = vmatpush.msra.mxu0 %v652
  %678 = vmatpush.msra.mxu0 %v651
  %679 = vmatpush.msra.mxu0 %v650
  %680 = vmatmul.f32.gmra.mxu0 %v659
  %v681 = vpop.f32.mrf.mxu0
  %v682 = vadd.f32 %v656, %v681
  %683 = vmatmul.f32.gmra.mxu0 %v662
  %v684 = vpop.f32.mrf.mxu0
  %v685 = vadd.f32 %v656, %v684
  %686 = vdwg.mxu0
  %v687 = vmul.f32 %v682, %v682
  %v688 = vmul.f32 %v685, %v685
  %v689 = vmul.f32 %v682, %v687
  %v690 = vmul.f32 %v685, %v688
  %v691 = vmul.f32 %v689, 0.044715
  %v692 = vmul.f32 %v690, 0.044715
  %v693 = vadd.f32 %v682, %v691
  %v694 = vadd.f32 %v685, %v692
  %v695 = vmul.f32 %v693, 0.7978846
  %v696 = vmul.f32 %v694, 0.7978846
  %v697 = vtanh.pop %v695
  %v698 = vtanh.pop %v696
  %v699 = vadd.f32 %v697, 1.0
  %v700 = vadd.f32 %v698, 1.0
  %v701 = vmul.f32 %v699, 0.5
  %v702 = vmul.f32 %v700, 0.5
  %v703 = vmul.f32 %v682, %v701
  %v704 = vmul.f32 %v685, %v702
  %v705 = vld [vmem:[%s14] sm:$0xff]
  %v706 = vld [vmem:[%s14 + $0x8] sm:$0xff]
  %v707 = vld [vmem:[%s14 + $0x10] sm:$0xff]
  %v708 = vld [vmem:[%s14 + $0x18] sm:$0xff]
  %v709 = vld [vmem:[%s14 + $0x20] sm:$0xff]
  %v710 = vld [vmem:[%s14 + $0x28] sm:$0xff]
  %v711 = vld [vmem:[%s14 + $0x30] sm:$0xff]
  %v712 = vld [vmem:[%s14 + $0x38] sm:$0xff]
  %v713 = vld [vmem:[%s15] sm:$0x1]
  %v715 = vperm.slane %v713, 0
  %vm717 = vcmask 523264
  %v719 = vsel %vm717, %v703, 0
  %v722 = vsel %vm717, %v704, 0
  %724 = vmatpush.msra.mxu0 0.0
  %725 = vmatpush.msra.mxu0 0.0
  %726 = vmatpush.msra.mxu0 0.0
  %727 = vmatpush.msra.mxu0 0.0
  %728 = vmatpush.msra.mxu0 0.0
  %729 = vmatpush.msra.mxu0 0.0
  %730 = vmatpush.msra.mxu0 0.0
  %731 = vmatpush.msra.mxu0 0.0
  %732 = vmatpush.msra.mxu0 %v712
  %733 = vmatpush.msra.mxu0 %v711
  %734 = vmatpush.msra.mxu0 %v710
  %735 = vmatpush.msra.mxu0 %v709
  %736 = vmatpush.msra.mxu0 %v708
  %737 = vmatpush.msra.mxu0 %v707
  %738 = vmatpush.msra.mxu0 %v706
  %739 = vmatpush.msra.mxu0 %v705
  %740 = vmatmul.f32.gmra.mxu0 %v719
  %v741 = vpop.f32.mrf.mxu0
  %v742 = vadd.f32 %v715, %v741
  %743 = vmatmul.f32.gmra.mxu0 %v722
  %v744 = vpop.f32.mrf.mxu0
  %v745 = vadd.f32 %v715, %v744
  %746 = vdwg.mxu0
  %v747 = vadd.f32 %v742, %v648
  %v748 = vadd.f32 %v745, %v649
  %v749 = vld [vmem:[%s16] sm:$0x1]
  %v750 = vld [vmem:[%s17] sm:$0x1]
  %v751 = vsel %vm69, %v747, 0.0
  %752 = vadd.xlane.f32.xlu0 %v751
  %v753 = vpop.xlane.xlu0 %752
  %v754 = vsel %vm69, %v748, 0.0
  %755 = vadd.xlane.f32.xlu0 %v754
  %v756 = vpop.xlane.xlu0 %755
  %v757 = vmul.f32 %v753, %v601
  %v758 = vmul.f32 %v756, %v601
  %v759 = vsub.f32 %v747, %v757
  %v760 = vsub.f32 %v748, %v758
  %v761 = vmul.f32 %v759, %v759
  %v762 = vmul.f32 %v760, %v760
  %v763 = vsel %vm69, %v761, 0.0
  %764 = vadd.xlane.f32.xlu0 %v763
  %v765 = vpop.xlane.xlu0 %764
  %v766 = vsel %vm69, %v762, 0.0
  %767 = vadd.xlane.f32.xlu0 %v766
  %v768 = vpop.xlane.xlu0 %767
  %v769 = vmul.f32 %v765, %v601
  %v770 = vmul.f32 %v768, %v601
  %v771 = vadd.f32 %v769, 1e-12
  %v772 = vadd.f32 %v770, 1e-12
  %v773 = vrsqrt.pop %v771
  %v774 = vmul.f32 %v773, %v771
  %v775 = vmul.f32 %v774, %v773
  %v776 = vmul.f32 0.5, %v775
  %v777 = vsub.f32 1.5, %v776
  %v778 = vmul.f32 %v773, %v777
  %vm779 = vweird.f32 %v771
  %vm780 = vweird.f32 %v773
  %vm781 = vmor %vm779, %vm780
  %v782 = vsel %vm781, %v773, %v778
  %v783 = vrsqrt.pop %v772
  %v784 = vmul.f32 %v783, %v772
  %v785 = vmul.f32 %v784, %v783
  %v786 = vmul.f32 0.5, %v785
  %v787 = vsub.f32 1.5, %v786
  %v788 = vmul.f32 %v783, %v787
  %vm789 = vweird.f32 %v772
  %vm790 = vweird.f32 %v783
  %vm791 = vmor %vm789, %vm790
  %v792 = vsel %vm791, %v783, %v788
  %v793 = vmul.f32 %v759, %v782
  %v794 = vmul.f32 %v760, %v792
  %v796 = vperm.slane %v749, 0
  %v798 = vmul.f32 %v793, %v796
  %v799 = vmul.f32 %v794, %v796
  %v801 = vperm.slane %v750, 0
  %v803 = vadd.f32 %v798, %v801
  %v804 = vadd.f32 %v799, %v801
  %805 = vst.msk [vmem:[%s18] sm:$0xff] %vm69, %v803
  %806 = vst.msk [vmem:[%s18 + $0x8] sm:$0xff] %vm69, %v804
  // Predicated region
  $region74: #{vilt_forward.12} parent=0 // pred_check
    _
  $region75: #{vilt_forward.12} parent=0 // pred_check_branch
    %808 = sbr.rel (0) target = $region77
  $region76: #{vilt_forward.12} parent=0 // pred_region
    _
  $region77: #{vilt_forward.12} parent=0 // pred_fallthru
    _
  // Predicated region
  $region78: #{vilt_forward.12} parent=0 // pred_check
    _
  $region79: #{vilt_forward.12} parent=0 // pred_check_branch
    %810 = sbr.rel (0) target = $region81
  $region80: #{vilt_forward.12} parent=0 // pred_region
    _
  $region81: #{vilt_forward.12} parent=0 // pred_fallthru
    _

// kernel: vilt_forward.21
$region0: #{vilt_forward.21}
  #allocation0 [shape = 'u32[]', space=smem, size = 0x4, offset = 0x4, fixed_abs, tag = 'smem constant byte address 0x4 - core index']
  #allocation1 [shape = 'u32[72,128]{1,0:T(1,128)}', space=vmem, size = 0x9000, scoped, tag = 'internal scratch']
  #allocation2 [shape = 'f32[1,1]{1,0:T(1,128)S(1)}', space=vmem, size = 0x200, scoped, tag = 'scoped memory for vilt_forward.21']
  %s0 = inlined_call_operand.vmem [shape: f32[8,16], index: 0, kind: input, shape index: {}]
  %s1 = inlined_call_operand.vmem [shape: f32[2,8], index: 1, kind: input, shape index: {}]
  %s2 = inlined_call_operand.vmem [shape: f32[2,32], index: 2, kind: input, shape index: {}]
  %s3 = inlined_call_operand.vmem [shape: f32[16,32], index: 3, kind: input, shape index: {}]
  %s4 = inlined_call_operand.vmem [shape: f32[1,32], index: 4, kind: input, shape index: {}]
  %s5 = inlined_call_operand.vmem [shape: f32[32,32], index: 5, kind: input, shape index: {}]
  %s6 = inlined_call_operand.vmem [shape: f32[1,32], index: 6, kind: input, shape index: {}]
  %s7 = inlined_call_operand.vmem [shape: f32[32,16], index: 7, kind: input, shape index: {}]
  %s8 = inlined_call_operand.vmem [shape: f32[1,16], index: 8, kind: input, shape index: {}]
  %s9 = inlined_call_operand.vmem [shape: f32[32,16], index: 9, kind: input, shape index: {}]
  %s10 = inlined_call_operand.vmem [shape: f32[1,16], index: 10, kind: input, shape index: {}]
  %s11 = inlined_call_operand.vmem [shape: f32[32,16], index: 11, kind: input, shape index: {}]
  %s12 = inlined_call_operand.vmem [shape: f32[32,16], index: 12, kind: input, shape index: {}]
  %s13 = inlined_call_operand.vmem [shape: f32[1,16], index: 13, kind: input, shape index: {}]
  %s14 = inlined_call_operand.vmem [shape: f32[1,16], index: 14, kind: input, shape index: {}]
  %s15 = inlined_call_operand.<no memory space> [shape: f32[1,1], index: 15, kind: input, shape index: {}]
  %s16 = inlined_call_operand.vmem [shape: f32[2,1], index: 16, kind: output, shape index: {0}]
  %s17 = inlined_call_operand.hbm [shape: f32[2,16], index: 17, kind: output, shape index: {1}]
  %s18 = inlined_call_operand.hbm [shape: f32[2,16], index: 18, kind: output, shape index: {2}]
  %19 = xla_tuple %s16, %s17, %s18
  %s20 = sld [smem:[#allocation0]]
  $region90: #{vilt_forward.21} parent=0
    _
  %s22 = ssub.s32 1, %s20
  %s23 = scalar_select 0, %s22, %s20
  %v24 = vstv %s15
  %25 = vst [vmem:[#allocation2] sm:$0x1] %v24
  $region1: #{vilt_forward.21} parent=0
    #allocation3 [shape = 'u8[1024]{0}', space=vmem, size = 0x400, scoped, tag = 'output window, operand 1, single buffered']
    #allocation4 [shape = 's32[1]{0}', space=sflag, size = 0x4, scoped, tag = 'scoped memory for vilt_forward.21']
    #allocation5 [shape = 'u8[1024]{0}', space=vmem, size = 0x400, scoped, tag = 'output window, operand 2, single buffered']
    #allocation6 [shape = 's32[1]{0}', space=sflag, size = 0x4, scoped, tag = 'scoped memory for vilt_forward.21']
    %26 = vsyncpa [#allocation4], 0
    %27 = vsyncpa [#allocation6], 0
    // Predicated region
    $region2: #{vilt_forward.21} parent=1 // pred_check
      _
    $region3: #{vilt_forward.21} parent=1 // pred_check_branch
      %29 = sbr.rel (0) target = $region5
    $region4: #{vilt_forward.21} parent=1 // pred_region
      _
    $region5: #{vilt_forward.21} parent=1 // pred_fallthru
      _
    // Predicated region
    $region6: #{vilt_forward.21} parent=1 // pred_check
      _
    $region7: #{vilt_forward.21} parent=1 // pred_check_branch
      %31 = sbr.rel (0) target = $region9
    $region8: #{vilt_forward.21} parent=1 // pred_region
      _
    $region9: #{vilt_forward.21} parent=1 // pred_fallthru
      _
    // Predicated region
    $region10: #{vilt_forward.21} parent=1 // pred_check
      _
    $region11: #{vilt_forward.21} parent=1 // pred_check_branch
      %33 = sbr.rel (0) target = $region13
    $region12: #{vilt_forward.21} parent=1 // pred_region
      _
    $region13: #{vilt_forward.21} parent=1 // pred_fallthru
      _
    // Predicated region
    $region14: #{vilt_forward.21} parent=1 // pred_check
      _
    $region15: #{vilt_forward.21} parent=1 // pred_check_branch
      %35 = sbr.rel (0) target = $region17
    $region16: #{vilt_forward.21} parent=1 // pred_region
      _
    $region17: #{vilt_forward.21} parent=1 // pred_fallthru
      _
    // Predicated region
    $region18: #{vilt_forward.21} parent=1 // pred_check
      _
    $region19: #{vilt_forward.21} parent=1 // pred_check_branch
      %37 = sbr.rel (0) target = $region21
    $region20: #{vilt_forward.21} parent=1 // pred_region
      _
    $region21: #{vilt_forward.21} parent=1 // pred_fallthru
      _
    // Predicated region
    $region22: #{vilt_forward.21} parent=1 // pred_check
      _
    $region23: #{vilt_forward.21} parent=1 // pred_check_branch
      %39 = sbr.rel (0) target = $region25
    $region24: #{vilt_forward.21} parent=1 // pred_region
      _
    $region25: #{vilt_forward.21} parent=1 // pred_fallthru
      _
    // Predicated region
    $region26: #{vilt_forward.21} parent=1 // pred_check
      _
    $region27: #{vilt_forward.21} parent=1 // pred_check_branch
      %41 = sbr.rel (0) target = $region29
    $region28: #{vilt_forward.21} parent=1 // pred_region
      _
    $region29: #{vilt_forward.21} parent=1 // pred_fallthru
      _
    // Predicated region
    $region30: #{vilt_forward.21} parent=1 // pred_check
      _
    $region31: #{vilt_forward.21} parent=1 // pred_check_branch
      %43 = sbr.rel (0) target = $region33
    $region32: #{vilt_forward.21} parent=1 // pred_region
      _
    $region33: #{vilt_forward.21} parent=1 // pred_fallthru
      _
    // Predicated region
    $region34: #{vilt_forward.21} parent=1 // pred_check
      _
    $region35: #{vilt_forward.21} parent=1 // pred_check_branch
      %45 = sbr.rel (0) target = $region37
    $region36: #{vilt_forward.21} parent=1 // pred_region
      _
    $region37: #{vilt_forward.21} parent=1 // pred_fallthru
      _
    // Predicated region
    $region38: #{vilt_forward.21} parent=1 // pred_check
      _
    $region39: #{vilt_forward.21} parent=1 // pred_check_branch
      %47 = sbr.rel (0) target = $region41
    $region40: #{vilt_forward.21} parent=1 // pred_region
      _
    $region41: #{vilt_forward.21} parent=1 // pred_fallthru
      _
    // Predicated region
    $region42: #{vilt_forward.21} parent=1 // pred_check
      _
    $region43: #{vilt_forward.21} parent=1 // pred_check_branch
      %49 = sbr.rel (0) target = $region45
    $region44: #{vilt_forward.21} parent=1 // pred_region
      _
    $region45: #{vilt_forward.21} parent=1 // pred_fallthru
      _
    // Predicated region
    $region46: #{vilt_forward.21} parent=1 // pred_check
      _
    $region47: #{vilt_forward.21} parent=1 // pred_check_branch
      %51 = sbr.rel (0) target = $region49
    $region48: #{vilt_forward.21} parent=1 // pred_region
      _
    $region49: #{vilt_forward.21} parent=1 // pred_fallthru
      _
    // Predicated region
    $region50: #{vilt_forward.21} parent=1 // pred_check
      _
    $region51: #{vilt_forward.21} parent=1 // pred_check_branch
      %53 = sbr.rel (0) target = $region53
    $region52: #{vilt_forward.21} parent=1 // pred_region
      _
    $region53: #{vilt_forward.21} parent=1 // pred_fallthru
      _
    // Predicated region
    $region54: #{vilt_forward.21} parent=1 // pred_check
      _
    $region55: #{vilt_forward.21} parent=1 // pred_check_branch
      %55 = sbr.rel (0) target = $region57
    $region56: #{vilt_forward.21} parent=1 // pred_region
      _
    $region57: #{vilt_forward.21} parent=1 // pred_fallthru
      _
    // Predicated region
    $region58: #{vilt_forward.21} parent=1 // pred_check
      _
    $region59: #{vilt_forward.21} parent=1 // pred_check_branch
      %57 = sbr.rel (0) target = $region61
    $region60: #{vilt_forward.21} parent=1 // pred_region
      _
    $region61: #{vilt_forward.21} parent=1 // pred_fallthru
      _
    // Predicated region
    $region62: #{vilt_forward.21} parent=1 // pred_check
      _
    $region63: #{vilt_forward.21} parent=1 // pred_check_branch
      %59 = sbr.rel (0) target = $region65
    $region64: #{vilt_forward.21} parent=1 // pred_region
      _
    $region65: #{vilt_forward.21} parent=1 // pred_fallthru
      _
    %v60 = vld [vmem:[%s1] sm:$0x3]
    %v61 = vld [vmem:[%s0] sm:$0xff]
    %vm62 = vcmask 64512
    %v64 = vsel %vm62, %v60, 0
    %66 = vmatpush.msra.mxu0 0.0
    %67 = vmatpush.msra.mxu0 0.0
    %68 = vmatpush.msra.mxu0 0.0
    %69 = vmatpush.msra.mxu0 0.0
    %70 = vmatpush.msra.mxu0 0.0
    %71 = vmatpush.msra.mxu0 0.0
    %72 = vmatpush.msra.mxu0 0.0
    %73 = vmatpush.msra.mxu0 0.0
    %74 = vmatpush.msra.mxu0 0.0
    %75 = vmatpush.msra.mxu0 0.0
    %76 = vmatpush.msra.mxu0 0.0
    %77 = vmatpush.msra.mxu0 0.0
    %78 = vmatpush.msra.mxu0 0.0
    %79 = vmatpush.msra.mxu0 0.0
    %80 = vmatpush.msra.mxu0 0.0
    %81 = vmatpush.msra.mxu0 %v61
    %82 = vmatmul.f32.gmra.mxu0 %v64
    %v83 = vpop.f32.mrf.mxu0
    %v84 = vadd.f32 0.0, %v83
    %85 = vdwg.mxu0
    %v86 = vld [vmem:[%s3] sm:$0xff]
    %v87 = vld [vmem:[%s3 + $0x8] sm:$0xff]
    %v88 = vld [vmem:[%s4] sm:$0x1]
    %v90 = vperm.slane %v88, 0
    %vm92 = vcmask 130048
    %v94 = vsel %vm92, %v84, 0
    %96 = vmatpush.msra.mxu0 0.0
    %97 = vmatpush.msra.mxu0 0.0
    %98 = vmatpush.msra.mxu0 0.0
    %99 = vmatpush.msra.mxu0 0.0
    %100 = vmatpush.msra.mxu0 0.0
    %101 = vmatpush.msra.mxu0 0.0
    %102 = vmatpush.msra.mxu0 0.0
    %103 = vmatpush.msra.mxu0 0.0
    %104 = vmatpush.msra.mxu0 0.0
    %105 = vmatpush.msra.mxu0 0.0
    %106 = vmatpush.msra.mxu0 0.0
    %107 = vmatpush.msra.mxu0 0.0
    %108 = vmatpush.msra.mxu0 0.0
    %109 = vmatpush.msra.mxu0 0.0
    %110 = vmatpush.msra.mxu0 %v87
    %111 = vmatpush.msra.mxu0 %v86
    %112 = vmatmul.f32.gmra.mxu0 %v94
    %v113 = vpop.f32.mrf.mxu0
    %v114 = vadd.f32 %v90, %v113
    %115 = vdwg.mxu0
    %v116 = vld [vmem:[%s2] sm:$0x3]
    %v117 = vld [vmem:[%s5] sm:$0xff]
    %v118 = vld [vmem:[%s5 + $0x8] sm:$0xff]
    %v119 = vld [vmem:[%s5 + $0x10] sm:$0xff]
    %v120 = vld [vmem:[%s5 + $0x18] sm:$0xff]
    %v121 = vld [vmem:[%s6] sm:$0x1]
    %v123 = vperm.slane %v121, 0
    %vm125 = vcmask 261120
    %v127 = vsel %vm125, %v116, 0
    %129 = vmatpush.msra.mxu0 0.0
    %130 = vmatpush.msra.mxu0 0.0
    %131 = vmatpush.msra.mxu0 0.0
    %132 = vmatpush.msra.mxu0 0.0
    %133 = vmatpush.msra.mxu0 0.0
    %134 = vmatpush.msra.mxu0 0.0
    %135 = vmatpush.msra.mxu0 0.0
    %136 = vmatpush.msra.mxu0 0.0
    %137 = vmatpush.msra.mxu0 0.0
    %138 = vmatpush.msra.mxu0 0.0
    %139 = vmatpush.msra.mxu0 0.0
    %140 = vmatpush.msra.mxu0 0.0
    %141 = vmatpush.msra.mxu0 %v120
    %142 = vmatpush.msra.mxu0 %v119
    %143 = vmatpush.msra.mxu0 %v118
    %144 = vmatpush.msra.mxu0 %v117
    %145 = vmatmul.f32.gmra.mxu0 %v127
    %v146 = vpop.f32.mrf.mxu0
    %v147 = vadd.f32 %v123, %v146
    %148 = vdwg.mxu0
    %v149 = vtanh.pop %v147
    %v150 = vld [vmem:[%s7] sm:$0xff]
    %v151 = vld [vmem:[%s7 + $0x8] sm:$0xff]
    %v152 = vld [vmem:[%s7 + $0x10] sm:$0xff]
    %v153 = vld [vmem:[%s7 + $0x18] sm:$0xff]
    %v154 = vld [vmem:[%s8] sm:$0x1]
    %v156 = vperm.slane %v154, 0
    %v159 = vsel %vm125, %v114, 0
    %161 = vmatpush.msra.mxu0 0.0
    %162 = vmatpush.msra.mxu0 0.0
    %163 = vmatpush.msra.mxu0 0.0
    %164 = vmatpush.msra.mxu0 0.0
    %165 = vmatpush.msra.mxu0 0.0
    %166 = vmatpush.msra.mxu0 0.0
    %167 = vmatpush.msra.mxu0 0.0
    %168 = vmatpush.msra.mxu0 0.0
    %169 = vmatpush.msra.mxu0 0.0
    %170 = vmatpush.msra.mxu0 0.0
    %171 = vmatpush.msra.mxu0 0.0
    %172 = vmatpush.msra.mxu0 0.0
    %173 = vmatpush.msra.mxu0 %v153
    %174 = vmatpush.msra.mxu0 %v152
    %175 = vmatpush.msra.mxu0 %v151
    %176 = vmatpush.msra.mxu0 %v150
    %177 = vmatmul.f32.gmra.mxu0 %v159
    %v178 = vpop.f32.mrf.mxu0
    %v179 = vadd.f32 %v156, %v178
    %180 = vdwg.mxu0
    %v181 = vld [vmem:[%s9] sm:$0xff]
    %v182 = vld [vmem:[%s9 + $0x8] sm:$0xff]
    %v183 = vld [vmem:[%s9 + $0x10] sm:$0xff]
    %v184 = vld [vmem:[%s9 + $0x18] sm:$0xff]
    %v185 = vld [vmem:[%s10] sm:$0x1]
    %v187 = vperm.slane %v185, 0
    %v190 = vsel %vm125, %v149, 0
    %192 = vmatpush.msra.mxu0 0.0
    %193 = vmatpush.msra.mxu0 0.0
    %194 = vmatpush.msra.mxu0 0.0
    %195 = vmatpush.msra.mxu0 0.0
    %196 = vmatpush.msra.mxu0 0.0
    %197 = vmatpush.msra.mxu0 0.0
    %198 = vmatpush.msra.mxu0 0.0
    %199 = vmatpush.msra.mxu0 0.0
    %200 = vmatpush.msra.mxu0 0.0
    %201 = vmatpush.msra.mxu0 0.0
    %202 = vmatpush.msra.mxu0 0.0
    %203 = vmatpush.msra.mxu0 0.0
    %204 = vmatpush.msra.mxu0 %v184
    %205 = vmatpush.msra.mxu0 %v183
    %206 = vmatpush.msra.mxu0 %v182
    %207 = vmatpush.msra.mxu0 %v181
    %208 = vmatmul.f32.gmra.mxu0 %v190
    %v209 = vpop.f32.mrf.mxu0
    %v210 = vadd.f32 %v187, %v209
    %211 = vdwg.mxu0
    %v212 = vmul.f32 %v179, %v179
    %vm213 = vcmask 123904
    %v214 = vsel %vm213, %v212, 0.0
    %215 = vadd.xlane.f32.xlu0 %v214
    %v216 = vpop.xlane.xlu0 %215
    %v217 = vrsqrt.pop %v216
    %v218 = vmul.f32 %v217, %v216
    %v219 = vmul.f32 %v218, %v217
    %v220 = vmul.f32 0.5, %v219
    %v221 = vsub.f32 1.5, %v220
    %v222 = vmul.f32 %v217, %v221
    %v223 = vmul.f32 %v216, %v222
    %vm224 = vcmp.eq.f32.partialorder %v216, inf
    %v225 = vsel %vm224, %v216, %v223
    %vm226 = vcmp.eq.f32.partialorder %v216, 0.0
    %v227 = vand.u32 %v216, 2147483648
    %v228 = vsel %vm226, %v227, %v225
    %v229 = vmax.f32 %v228, 1e-12
    %v230 = vrcp.pop %v229
    %v231 = vmul.f32 %v229, %v230
    %v232 = vsub.f32 1.0, %v231
    %v233 = vmul.f32 %v230, %v232
    %v234 = vadd.f32 %v230, %v233
    %vm235 = vweird.f32 %v229
    %vm236 = vweird.f32 %v230
    %vm237 = vmor %vm235, %vm236
    %v238 = vsel %vm237, %v230, %v234
    %v239 = vand.u32 2147483647, %v229
    %vm240 = vcmp.eq.f32.partialorder %v239, 8.507059e+37
    %v241 = vand.u32 %v229, 2147483648
    %v242 = vor.u32 1.1754944e-38, %v241
    %v243 = vsel %vm240, %v242, %v238
    %v244 = vmul.f32 %v179, %v243
    %245 = vst.msk [vmem:[#allocation3] sm:$0x3] %vm213, %v244
    %v246 = vmul.f32 %v210, %v210
    %v247 = vsel %vm213, %v246, 0.0
    %248 = vadd.xlane.f32.xlu0 %v247
    %v249 = vpop.xlane.xlu0 %248
    %v250 = vrsqrt.pop %v249
    %v251 = vmul.f32 %v250, %v249
    %v252 = vmul.f32 %v251, %v250
    %v253 = vmul.f32 0.5, %v252
    %v254 = vsub.f32 1.5, %v253
    %v255 = vmul.f32 %v250, %v254
    %v256 = vmul.f32 %v249, %v255
    %vm257 = vcmp.eq.f32.partialorder %v249, inf
    %v258 = vsel %vm257, %v249, %v256
    %vm259 = vcmp.eq.f32.partialorder %v249, 0.0
    %v260 = vand.u32 %v249, 2147483648
    %v261 = vsel %vm259, %v260, %v258
    %v262 = vmax.f32 %v261, 1e-12
    %v263 = vrcp.pop %v262
    %v264 = vmul.f32 %v262, %v263
    %v265 = vsub.f32 1.0, %v264
    %v266 = vmul.f32 %v263, %v265
    %v267 = vadd.f32 %v263, %v266
    %vm268 = vweird.f32 %v262
    %vm269 = vweird.f32 %v263
    %vm270 = vmor %vm268, %vm269
    %v271 = vsel %vm270, %v263, %v267
    %v272 = vand.u32 2147483647, %v262
    %vm273 = vcmp.eq.f32.partialorder %v272, 8.507059e+37
    %v274 = vand.u32 %v262, 2147483648
    %v275 = vor.u32 1.1754944e-38, %v274
    %v276 = vsel %vm273, %v275, %v271
    %v277 = vmul.f32 %v210, %v276
    %278 = vst.msk [vmem:[#allocation5] sm:$0x3] %vm213, %v277
    %v279 = vld [vmem:[%s11] sm:$0xff]
    %v280 = vld [vmem:[%s11 + $0x8] sm:$0xff]
    %v281 = vld [vmem:[%s11 + $0x10] sm:$0xff]
    %v282 = vld [vmem:[%s11 + $0x18] sm:$0xff]
    %v283 = vld [vmem:[%s12] sm:$0xff]
    %v284 = vld [vmem:[%s12 + $0x8] sm:$0xff]
    %v285 = vld [vmem:[%s12 + $0x10] sm:$0xff]
    %v286 = vld [vmem:[%s12 + $0x18] sm:$0xff]
    %287 = vmatpush.msra.mxu0 0.0
    %288 = vmatpush.msra.mxu0 0.0
    %289 = vmatpush.msra.mxu0 0.0
    %290 = vmatpush.msra.mxu0 0.0
    %291 = vmatpush.msra.mxu0 0.0
    %292 = vmatpush.msra.mxu0 0.0
    %293 = vmatpush.msra.mxu0 0.0
    %294 = vmatpush.msra.mxu0 0.0
    %295 = vmatpush.msra.mxu0 0.0
    %296 = vmatpush.msra.mxu0 0.0
    %297 = vmatpush.msra.mxu0 0.0
    %298 = vmatpush.msra.mxu0 0.0
    %299 = vmatpush.msra.mxu0 %v286
    %300 = vmatpush.msra.mxu0 %v285
    %301 = vmatpush.msra.mxu0 %v284
    %302 = vmatpush.msra.mxu0 %v283
    %303 = vmatmul.f32.gmra.mxu0 %v190
    %v304 = vpop.f32.mrf.mxu0
    %v305 = vadd.f32 0.0, %v304
    %306 = vdwg.mxu0
    %307 = vmatpush.msra.mxu0 0.0
    %308 = vmatpush.msra.mxu0 0.0
    %309 = vmatpush.msra.mxu0 0.0
    %310 = vmatpush.msra.mxu0 0.0
    %311 = vmatpush.msra.mxu0 0.0
    %312 = vmatpush.msra.mxu0 0.0
    %313 = vmatpush.msra.mxu0 0.0
    %314 = vmatpush.msra.mxu0 0.0
    %315 = vmatpush.msra.mxu0 0.0
    %316 = vmatpush.msra.mxu0 0.0
    %317 = vmatpush.msra.mxu0 0.0
    %318 = vmatpush.msra.mxu0 0.0
    %319 = vmatpush.msra.mxu0 %v282
    %320 = vmatpush.msra.mxu0 %v281
    %321 = vmatpush.msra.mxu0 %v280
    %322 = vmatpush.msra.mxu0 %v279
    %323 = vmatmul.f32.gmra.mxu0 %v159
    %v324 = vpop.f32.mrf.mxu0
    %v325 = vadd.f32 %v305, %v324
    %326 = vdwg.mxu0
    %v327 = vld [vmem:[%s13] sm:$0x1]
    %v329 = vperm.slane %v327, 0
    %v331 = vadd.f32 %v325, %v329
    %v332 = vmax.f32 %v331, 0.0
    %v333 = vld [vmem:[%s14] sm:$0x1]
    %v335 = vperm.slane %v333, 0
    %v337 = vmul.f32 %v332, %v335
    %v338 = vsel %vm213, %v337, 0.0
    %339 = vadd.xlane.f32.xlu0 %v338
    %v340 = vpop.xlane.xlu0 %339
    %v341 = vld [vmem:[#allocation2] sm:$0x1]
    %v343 = vperm.slane %v341, 0
    %v345 = vadd.f32 %v340, %v343
    %vm346 = vcmask 1024
    %347 = vst.msk [vmem:[%s16] sm:$0x3] %vm346, %v345
    // Predicated region
    $region66: #{vilt_forward.21} parent=1 // pred_check
      _
    $region67: #{vilt_forward.21} parent=1 // pred_check_branch
      %349 = sbr.rel (0) target = $region69
    $region68: #{vilt_forward.21} parent=1 // pred_region
      _
    $region69: #{vilt_forward.21} parent=1 // pred_fallthru
      _
    // Predicated region
    $region70: #{vilt_forward.21} parent=1 // pred_check
      _
    $region71: #{vilt_forward.21} parent=1 // pred_check_branch
      %351 = sbr.rel (0) target = $region73
    $region72: #{vilt_forward.21} parent=1 // pred_region
      %353 = vsyncadd [#allocation4], 0
      %s355 = sshll.u32 [#allocation3], 4
      %s356 = int_to_ptr.vmem [resolvable:$true] %s355
      %s357 = sshll.u32 %s17, 4
      %s358 = int_to_ptr.hbm [resolvable:$true] %s357
      %360 = dma.vmem_to_hbm [thread:$0]  %s356, 32, %s358, [#allocation4]
    $region73: #{vilt_forward.21} parent=1 // pred_fallthru
      _
    // Predicated region
    $region74: #{vilt_forward.21} parent=1 // pred_check
      _
    $region75: #{vilt_forward.21} parent=1 // pred_check_branch
      %362 = sbr.rel (0) target = $region77
    $region76: #{vilt_forward.21} parent=1 // pred_region
      %364 = vsyncadd [#allocation6], 0
      %s366 = sshll.u32 [#allocation5], 4
      %s367 = int_to_ptr.vmem [resolvable:$true] %s366
      %s368 = sshll.u32 %s18, 4
      %s369 = int_to_ptr.hbm [resolvable:$true] %s368
      %371 = dma.vmem_to_hbm [thread:$0]  %s367, 32, %s369, [#allocation6]
    $region77: #{vilt_forward.21} parent=1 // pred_fallthru
      _
    // Predicated region
    $region78: #{vilt_forward.21} parent=1 // pred_check
      _
    $region79: #{vilt_forward.21} parent=1 // pred_check_branch
      %373 = sbr.rel (0) target = $region81
    $region80: #{vilt_forward.21} parent=1 // pred_region
      _
    $region81: #{vilt_forward.21} parent=1 // pred_fallthru
      _
    // Predicated region
    $region82: #{vilt_forward.21} parent=1 // pred_check
      _
    $region83: #{vilt_forward.21} parent=1 // pred_check_branch
      %375 = sbr.rel (0) target = $region85
    $region84: #{vilt_forward.21} parent=1 // pred_region
      %377 = dma.done [#allocation4], 32
    $region85: #{vilt_forward.21} parent=1 // pred_fallthru
      _
    // Predicated region
    $region86: #{vilt_forward.21} parent=1 // pred_check
      _
    $region87: #{vilt_forward.21} parent=1 // pred_check_branch
      %379 = sbr.rel (0) target = $region89
    $region88: #{vilt_forward.21} parent=1 // pred_region
      %381 = dma.done [#allocation6], 32
    $region89: #{vilt_forward.21} parent=1 // pred_fallthru
      _
    %382 = vsyncpa [#allocation4], 1
    %383 = vsyncpa [#allocation6], 1

</llo_original>
